<compile_context>
chip_gen: v5e
topology: v5e:2x2
jax: 0.10.0
libtpu: 0.0.40
codegen_flags: <defaults>
</compile_context>

<pallas_src>
import functools

import jax
import jax.numpy as jnp
from jax.experimental import pallas as pl
from jax.experimental.pallas import tpu as pltpu

F_IN = 32 * 32 * 3     # 3072
HID = 100              # logical hidden width (as in the PyTorch module)
HID_PAD = 128          # lane-aligned padded hidden width
N_LAYERS = 8
COS_EPS = 1e-8         # torch.cosine_similarity default eps


def _tensorcores_per_chip():
    """2 for v7x (two TensorCores per chip), 1 otherwise (v5e / v6e)."""
    try:
        kind = jax.devices()[0].device_kind.lower()
    except Exception:
        return 1
    if ("v7" in kind) or ("7x" in kind) or ("tpu7" in kind):
        return 2
    return 1


# ----------------------------------------------------------------------------
# Fused training kernel (one grid step = one MLP + its cosine loss).
#   program 0: fusher  -> loss1 = 1 - cos(x, fushed , dim=0)
#   program 1: cleaner -> loss2 = 1 - cos(cleaned, x, dim=0)
# Parameter refs arrive stacked over the leading (squeezed) grid axis, so the
# BlockSpec index_map selects which network's weights this program sees.
# ----------------------------------------------------------------------------
def _fused_train_kernel(x_ref, *refs):
    loss_ref = refs[-1]                  # [1, F_IN] f32
    params = refs[:-1]                   # w1, b1, ..., w8, b8 (this program's set)

    x = x_ref[...]                       # [B, F_IN] f32
    h = x
    for i in range(N_LAYERS):
        w = params[2 * i][...]           # bf16 [in, out]  (pre-transposed vs torch)
        b = params[2 * i + 1][...]       # f32  [1, out]
        acc = jnp.dot(h.astype(jnp.bfloat16), w,
                      preferred_element_type=jnp.float32)
        h = acc + b
        if i < N_LAYERS - 1:
            h = jnp.maximum(h, 0.0)      # ReLU (VPU)
        else:
            h = jax.nn.sigmoid(h)        # final Sigmoid (EUP)

    # cosine similarity over the batch axis (dim=0); symmetric in (x, h).
    w12 = jnp.sum(x * h, axis=0, keepdims=True)
    w11 = jnp.sum(x * x, axis=0, keepdims=True)
    w22 = jnp.sum(h * h, axis=0, keepdims=True)
    inv_norm = jax.lax.rsqrt(jnp.maximum(w11 * w22, COS_EPS * COS_EPS))
    loss_ref[...] = 1.0 - w12 * inv_norm


def _fused_train_losses(x, stacked_params, core_parallel):
    """Returns (loss1, loss2), each shape [F_IN], from one fused pallas_call."""
    B = x.shape[0]
    flat = []
    in_specs = [pl.BlockSpec((B, F_IN), lambda i: (0, 0))]   # x: same block both programs
    for w, b in stacked_params:          # w: [2, in, out] bf16, b: [2, 1, out] f32
        flat += [w, b]
        in_specs.append(pl.BlockSpec((None,) + tuple(w.shape[1:]),
                                     lambda i: (i, 0, 0)))
        in_specs.append(pl.BlockSpec((None,) + tuple(b.shape[1:]),
                                     lambda i: (i, 0, 0)))

    # CORE_PARALLEL actually lands one MLP per TensorCore on v7x; on 1-TC chips
    # the grid is just a 2-step sequential loop, so "arbitrary" is used there.
    semantics = (pltpu.CORE_PARALLEL,) if core_parallel else ("arbitrary",)

    out = pl.pallas_call(
        _fused_train_kernel,
        out_shape=jax.ShapeDtypeStruct((2, 1, F_IN), jnp.float32),
        grid=(2,),
        in_specs=in_specs,
        out_specs=pl.BlockSpec((None, 1, F_IN), lambda i: (i, 0, 0)),
        compiler_params=pltpu.CompilerParams(dimension_semantics=semantics),
    )(x, *flat)
    return out[0, 0], out[1, 0]


# ----------------------------------------------------------------------------
# Single-MLP kernel for the predict=True path (cleaner only, writes cleaned).
# Batch is streamed in row-blocks; weights stay resident in VMEM (block (0,0)).
# ----------------------------------------------------------------------------
def _mlp_kernel(x_ref, *refs):
    out_ref = refs[-1]
    params = refs[:-1]
    h = x_ref[...]
    for i in range(N_LAYERS):
        w = params[2 * i][...]
        b = params[2 * i + 1][...]
        h = jnp.dot(h.astype(jnp.bfloat16), w,
                    preferred_element_type=jnp.float32) + b
        if i < N_LAYERS - 1:
            h = jnp.maximum(h, 0.0)
        else:
            h = jax.nn.sigmoid(h)
    out_ref[...] = h.astype(out_ref.dtype)


def _mlp_forward(x, params):
    B = x.shape[0]
    # Row-block the batch for large B; weights are pinned (index 0) so they are
    # fetched once and stay in VMEM while activations stream.
    bt = 256 if (B > 256 and B % 256 == 0) else B
    flat = []
    in_specs = [pl.BlockSpec((bt, F_IN), lambda r: (r, 0))]
    for w, b in params:
        flat += [w, b]
        in_specs.append(pl.BlockSpec(w.shape, lambda r: (0, 0)))
        in_specs.append(pl.BlockSpec(b.shape, lambda r: (0, 0)))
    return pl.pallas_call(
        _mlp_kernel,
        out_shape=jax.ShapeDtypeStruct((B, F_IN), jnp.float32),
        grid=(B // bt,),
        in_specs=in_specs,
        out_specs=pl.BlockSpec((bt, F_IN), lambda r: (r, 0)),
        compiler_params=pltpu.CompilerParams(dimension_semantics=("arbitrary",)),
    )(x, *flat)


# ----------------------------------------------------------------------------
# Parameter construction (deterministic, PyTorch-Linear-style uniform init).
#  * Weights stored transposed vs torch ([in, out]) so kernels compute x@W+b.
#  * Hidden dim zero-padded 100 -> 128 (exact w.r.t. the padding).
#  * Weights cast to bf16; biases stay f32.
# ----------------------------------------------------------------------------
def init_mlp_params(key):
    dims_true = [F_IN] + [HID] * 7 + [F_IN]
    dims_pad = [F_IN] + [HID_PAD] * 7 + [F_IN]
    params = []
    for i in range(N_LAYERS):
        fan_in, fan_out = dims_true[i], dims_true[i + 1]
        pin, pout = dims_pad[i], dims_pad[i + 1]
        key, kw, kb = jax.random.split(key, 3)
        bound = 1.0 / jnp.sqrt(jnp.float32(fan_in))
        w = jax.random.uniform(kw, (fan_in, fan_out), jnp.float32, -bound, bound)
        b = jax.random.uniform(kb, (fan_out,), jnp.float32, -bound, bound)
        wp = jnp.zeros((pin, pout), jnp.float32).at[:fan_in, :fan_out].set(w)
        bp = jnp.zeros((1, pout), jnp.float32).at[0, :fan_out].set(b)
        params.append((wp.astype(jnp.bfloat16), bp))
    return params, key


def init_net_params(key):
    fusher, key = init_mlp_params(key)
    cleaner, key = init_mlp_params(key)
    # Pre-stack once for the fused training kernel (leading axis = network id).
    stacked = [
        (jnp.stack([wf, wc], axis=0), jnp.stack([bf, bc], axis=0))
        for (wf, bf), (wc, bc) in zip(fusher, cleaner)
    ]
    return {"fusher": fusher, "cleaner": cleaner, "stacked": stacked}, key


# ----------------------------------------------------------------------------
# Jitted entry points (no blocking host sync inside the hot path).
# ----------------------------------------------------------------------------
@functools.partial(jax.jit, static_argnames=("core_parallel", "log_losses"))
def _train_step(x, stacked_params, *, core_parallel, log_losses):
    loss1, loss2 = _fused_train_losses(x, stacked_params, core_parallel)
    if log_losses:
        # Async, non-blocking equivalent of the module's per-step print.
        jax.debug.print("Loss1: {}\tLoss2: {}", loss1, loss2)
    return loss1 + loss2


@jax.jit
def _predict_step(x, cleaner_params):
    return _mlp_forward(x, cleaner_params)


# Resolved once on the first training call: True -> CORE_PARALLEL placement.
_TRAIN_CORE_PARALLEL = [None]


def _run_train(x, stacked_params, log_losses=True):
    if _TRAIN_CORE_PARALLEL[0] is None:
        if _tensorcores_per_chip() >= 2:
            try:
                out = _train_step(x, stacked_params,
                                  core_parallel=True, log_losses=log_losses)
                jax.block_until_ready(out)          # first call only: surface errors
                _TRAIN_CORE_PARALLEL[0] = True
                return out
            except Exception:
                pass                                # fall back to single-core layout
        _TRAIN_CORE_PARALLEL[0] = False
    return _train_step(x, stacked_params,
                       core_parallel=_TRAIN_CORE_PARALLEL[0], log_losses=log_losses)


# ----------------------------------------------------------------------------
# Net.forward
# ----------------------------------------------------------------------------
def net_forward(x, params, predict):
    if predict is False:
        return _run_train(x, params["stacked"])
    else:
        return _predict_step(x, params["cleaner"])


if __name__ == "__main__":
    key = jax.random.PRNGKey(0)
    key, kx = jax.random.split(key)

    B = 8  # small demo batch; feature dim 3072 is fixed by the module definition
    x = jax.random.uniform(kx, (B, F_IN), jnp.float32)

    params, key = init_net_params(key)

    # Training branch (predict=False): returns loss vector of shape [3072]
    loss = net_forward(x, params, predict=False)
    loss = jax.block_until_ready(loss)
    assert loss.shape == (F_IN,)
    assert bool(jnp.all(jnp.isfinite(loss)))

    # Inference branch (predict=True): returns cleaned images [B, 3072]
    cleaned = net_forward(x, params, predict=True)
    cleaned = jax.block_until_ready(cleaned)
    assert cleaned.shape == (B, F_IN)
    assert bool(jnp.all((cleaned >= 0.0) & (cleaned <= 1.0)))

    try:
        jax.effects_barrier()   # flush async debug prints before the final marker
    except Exception:
        pass
    print("KERNEL_OK")
</pallas_src>

<mosaic_0001>
module attributes {stable_mosaic.version = 11 : i64} {
  func.func @_fused_train_kernel(%arg0: i32, %arg1: memref<8x3072xf32, #tpu.memory_space<vmem>>, %arg2: memref<1x3072x128xbf16, #tpu.memory_space<vmem>>, %arg3: memref<1x1x128xf32, #tpu.memory_space<vmem>>, %arg4: memref<1x128x128xbf16, #tpu.memory_space<vmem>>, %arg5: memref<1x1x128xf32, #tpu.memory_space<vmem>>, %arg6: memref<1x128x128xbf16, #tpu.memory_space<vmem>>, %arg7: memref<1x1x128xf32, #tpu.memory_space<vmem>>, %arg8: memref<1x128x128xbf16, #tpu.memory_space<vmem>>, %arg9: memref<1x1x128xf32, #tpu.memory_space<vmem>>, %arg10: memref<1x128x128xbf16, #tpu.memory_space<vmem>>, %arg11: memref<1x1x128xf32, #tpu.memory_space<vmem>>, %arg12: memref<1x128x128xbf16, #tpu.memory_space<vmem>>, %arg13: memref<1x1x128xf32, #tpu.memory_space<vmem>>, %arg14: memref<1x128x128xbf16, #tpu.memory_space<vmem>>, %arg15: memref<1x1x128xf32, #tpu.memory_space<vmem>>, %arg16: memref<1x128x3072xbf16, #tpu.memory_space<vmem>>, %arg17: memref<1x1x3072xf32, #tpu.memory_space<vmem>>, %arg18: memref<1x1x3072xf32, #tpu.memory_space<vmem>>) attributes {dimension_semantics = [#tpu.dimension_semantics<arbitrary>], iteration_bounds = array<i64: 2>, scalar_prefetch = 0 : i64, scratch_operands = 0 : i64, tpu.core_type = #tpu.core_type<tc>, window_params = [{pipeline_mode = #tpu.pipeline_mode<synchronous>, transform_indices = @transform_0, window_bounds = array<i64: 8, 3072>}, {transform_indices = @transform_1, window_bounds = array<i64: 1, 3072, 128>}, {transform_indices = @transform_2, window_bounds = array<i64: 1, 1, 128>}, {transform_indices = @transform_3, window_bounds = array<i64: 1, 128, 128>}, {transform_indices = @transform_4, window_bounds = array<i64: 1, 1, 128>}, {transform_indices = @transform_5, window_bounds = array<i64: 1, 128, 128>}, {transform_indices = @transform_6, window_bounds = array<i64: 1, 1, 128>}, {transform_indices = @transform_7, window_bounds = array<i64: 1, 128, 128>}, {transform_indices = @transform_8, window_bounds = array<i64: 1, 1, 128>}, {transform_indices = @transform_9, window_bounds = array<i64: 1, 128, 128>}, {transform_indices = @transform_10, window_bounds = array<i64: 1, 1, 128>}, {transform_indices = @transform_11, window_bounds = array<i64: 1, 128, 128>}, {transform_indices = @transform_12, window_bounds = array<i64: 1, 1, 128>}, {transform_indices = @transform_13, window_bounds = array<i64: 1, 128, 128>}, {transform_indices = @transform_14, window_bounds = array<i64: 1, 1, 128>}, {transform_indices = @transform_15, window_bounds = array<i64: 1, 128, 3072>}, {transform_indices = @transform_16, window_bounds = array<i64: 1, 1, 3072>}, {transform_indices = @transform_17, window_bounds = array<i64: 1, 1, 3072>}]} {
    %c0 = arith.constant 0 : index
    %c0_0 = arith.constant 0 : index
    %0 = vector.load %arg1[%c0, %c0_0] : memref<8x3072xf32, #tpu.memory_space<vmem>>, vector<8x3072xf32>
    %c0_1 = arith.constant 0 : index
    %c0_2 = arith.constant 0 : index
    %c0_3 = arith.constant 0 : index
    %1 = vector.load %arg2[%c0_1, %c0_2, %c0_3] : memref<1x3072x128xbf16, #tpu.memory_space<vmem>>, vector<1x3072x128xbf16>
    %2 = vector.shape_cast %1 : vector<1x3072x128xbf16> to vector<3072x128xbf16>
    %c0_4 = arith.constant 0 : index
    %c0_5 = arith.constant 0 : index
    %c0_6 = arith.constant 0 : index
    %3 = vector.load %arg3[%c0_4, %c0_5, %c0_6] : memref<1x1x128xf32, #tpu.memory_space<vmem>>, vector<1x1x128xf32>
    %4 = vector.shape_cast %3 : vector<1x1x128xf32> to vector<1x128xf32>
    %5 = arith.truncf %0 : vector<8x3072xf32> to vector<8x3072xbf16>
    %cst = arith.constant dense<0.000000e+00> : vector<8x128xf32>
    %6 = tpu.matmul %5, %2, %cst {dimension_numbers = #tpu.dot_dimension_numbers<[1], [0], [0], [1], [0, 0, 1, 1], [], []>} : vector<8x3072xbf16>, vector<3072x128xbf16>, vector<8x128xf32> -> vector<8x128xf32>
    %7 = vector.broadcast %4 : vector<1x128xf32> to vector<8x128xf32>
    %8 = arith.addf %6, %7 : vector<8x128xf32>
    %cst_7 = arith.constant 0.000000e+00 : f32
    %9 = vector.broadcast %cst_7 : f32 to vector<8x128xf32>
    %10 = arith.maximumf %8, %9 : vector<8x128xf32>
    %c0_8 = arith.constant 0 : index
    %c0_9 = arith.constant 0 : index
    %c0_10 = arith.constant 0 : index
    %11 = vector.load %arg4[%c0_8, %c0_9, %c0_10] : memref<1x128x128xbf16, #tpu.memory_space<vmem>>, vector<1x128x128xbf16>
    %12 = vector.shape_cast %11 : vector<1x128x128xbf16> to vector<128x128xbf16>
    %c0_11 = arith.constant 0 : index
    %c0_12 = arith.constant 0 : index
    %c0_13 = arith.constant 0 : index
    %13 = vector.load %arg5[%c0_11, %c0_12, %c0_13] : memref<1x1x128xf32, #tpu.memory_space<vmem>>, vector<1x1x128xf32>
    %14 = vector.shape_cast %13 : vector<1x1x128xf32> to vector<1x128xf32>
    %15 = arith.truncf %10 : vector<8x128xf32> to vector<8x128xbf16>
    %cst_14 = arith.constant dense<0.000000e+00> : vector<8x128xf32>
    %16 = tpu.matmul %15, %12, %cst_14 {dimension_numbers = #tpu.dot_dimension_numbers<[1], [0], [0], [1], [0, 0, 1, 1], [], []>} : vector<8x128xbf16>, vector<128x128xbf16>, vector<8x128xf32> -> vector<8x128xf32>
    %17 = vector.broadcast %14 : vector<1x128xf32> to vector<8x128xf32>
    %18 = arith.addf %16, %17 : vector<8x128xf32>
    %cst_15 = arith.constant 0.000000e+00 : f32
    %19 = vector.broadcast %cst_15 : f32 to vector<8x128xf32>
    %20 = arith.maximumf %18, %19 : vector<8x128xf32>
    %c0_16 = arith.constant 0 : index
    %c0_17 = arith.constant 0 : index
    %c0_18 = arith.constant 0 : index
    %21 = vector.load %arg6[%c0_16, %c0_17, %c0_18] : memref<1x128x128xbf16, #tpu.memory_space<vmem>>, vector<1x128x128xbf16>
    %22 = vector.shape_cast %21 : vector<1x128x128xbf16> to vector<128x128xbf16>
    %c0_19 = arith.constant 0 : index
    %c0_20 = arith.constant 0 : index
    %c0_21 = arith.constant 0 : index
    %23 = vector.load %arg7[%c0_19, %c0_20, %c0_21] : memref<1x1x128xf32, #tpu.memory_space<vmem>>, vector<1x1x128xf32>
    %24 = vector.shape_cast %23 : vector<1x1x128xf32> to vector<1x128xf32>
    %25 = arith.truncf %20 : vector<8x128xf32> to vector<8x128xbf16>
    %cst_22 = arith.constant dense<0.000000e+00> : vector<8x128xf32>
    %26 = tpu.matmul %25, %22, %cst_22 {dimension_numbers = #tpu.dot_dimension_numbers<[1], [0], [0], [1], [0, 0, 1, 1], [], []>} : vector<8x128xbf16>, vector<128x128xbf16>, vector<8x128xf32> -> vector<8x128xf32>
    %27 = vector.broadcast %24 : vector<1x128xf32> to vector<8x128xf32>
    %28 = arith.addf %26, %27 : vector<8x128xf32>
    %cst_23 = arith.constant 0.000000e+00 : f32
    %29 = vector.broadcast %cst_23 : f32 to vector<8x128xf32>
    %30 = arith.maximumf %28, %29 : vector<8x128xf32>
    %c0_24 = arith.constant 0 : index
    %c0_25 = arith.constant 0 : index
    %c0_26 = arith.constant 0 : index
    %31 = vector.load %arg8[%c0_24, %c0_25, %c0_26] : memref<1x128x128xbf16, #tpu.memory_space<vmem>>, vector<1x128x128xbf16>
    %32 = vector.shape_cast %31 : vector<1x128x128xbf16> to vector<128x128xbf16>
    %c0_27 = arith.constant 0 : index
    %c0_28 = arith.constant 0 : index
    %c0_29 = arith.constant 0 : index
    %33 = vector.load %arg9[%c0_27, %c0_28, %c0_29] : memref<1x1x128xf32, #tpu.memory_space<vmem>>, vector<1x1x128xf32>
    %34 = vector.shape_cast %33 : vector<1x1x128xf32> to vector<1x128xf32>
    %35 = arith.truncf %30 : vector<8x128xf32> to vector<8x128xbf16>
    %cst_30 = arith.constant dense<0.000000e+00> : vector<8x128xf32>
    %36 = tpu.matmul %35, %32, %cst_30 {dimension_numbers = #tpu.dot_dimension_numbers<[1], [0], [0], [1], [0, 0, 1, 1], [], []>} : vector<8x128xbf16>, vector<128x128xbf16>, vector<8x128xf32> -> vector<8x128xf32>
    %37 = vector.broadcast %34 : vector<1x128xf32> to vector<8x128xf32>
    %38 = arith.addf %36, %37 : vector<8x128xf32>
    %cst_31 = arith.constant 0.000000e+00 : f32
    %39 = vector.broadcast %cst_31 : f32 to vector<8x128xf32>
    %40 = arith.maximumf %38, %39 : vector<8x128xf32>
    %c0_32 = arith.constant 0 : index
    %c0_33 = arith.constant 0 : index
    %c0_34 = arith.constant 0 : index
    %41 = vector.load %arg10[%c0_32, %c0_33, %c0_34] : memref<1x128x128xbf16, #tpu.memory_space<vmem>>, vector<1x128x128xbf16>
    %42 = vector.shape_cast %41 : vector<1x128x128xbf16> to vector<128x128xbf16>
    %c0_35 = arith.constant 0 : index
    %c0_36 = arith.constant 0 : index
    %c0_37 = arith.constant 0 : index
    %43 = vector.load %arg11[%c0_35, %c0_36, %c0_37] : memref<1x1x128xf32, #tpu.memory_space<vmem>>, vector<1x1x128xf32>
    %44 = vector.shape_cast %43 : vector<1x1x128xf32> to vector<1x128xf32>
    %45 = arith.truncf %40 : vector<8x128xf32> to vector<8x128xbf16>
    %cst_38 = arith.constant dense<0.000000e+00> : vector<8x128xf32>
    %46 = tpu.matmul %45, %42, %cst_38 {dimension_numbers = #tpu.dot_dimension_numbers<[1], [0], [0], [1], [0, 0, 1, 1], [], []>} : vector<8x128xbf16>, vector<128x128xbf16>, vector<8x128xf32> -> vector<8x128xf32>
    %47 = vector.broadcast %44 : vector<1x128xf32> to vector<8x128xf32>
    %48 = arith.addf %46, %47 : vector<8x128xf32>
    %cst_39 = arith.constant 0.000000e+00 : f32
    %49 = vector.broadcast %cst_39 : f32 to vector<8x128xf32>
    %50 = arith.maximumf %48, %49 : vector<8x128xf32>
    %c0_40 = arith.constant 0 : index
    %c0_41 = arith.constant 0 : index
    %c0_42 = arith.constant 0 : index
    %51 = vector.load %arg12[%c0_40, %c0_41, %c0_42] : memref<1x128x128xbf16, #tpu.memory_space<vmem>>, vector<1x128x128xbf16>
    %52 = vector.shape_cast %51 : vector<1x128x128xbf16> to vector<128x128xbf16>
    %c0_43 = arith.constant 0 : index
    %c0_44 = arith.constant 0 : index
    %c0_45 = arith.constant 0 : index
    %53 = vector.load %arg13[%c0_43, %c0_44, %c0_45] : memref<1x1x128xf32, #tpu.memory_space<vmem>>, vector<1x1x128xf32>
    %54 = vector.shape_cast %53 : vector<1x1x128xf32> to vector<1x128xf32>
    %55 = arith.truncf %50 : vector<8x128xf32> to vector<8x128xbf16>
    %cst_46 = arith.constant dense<0.000000e+00> : vector<8x128xf32>
    %56 = tpu.matmul %55, %52, %cst_46 {dimension_numbers = #tpu.dot_dimension_numbers<[1], [0], [0], [1], [0, 0, 1, 1], [], []>} : vector<8x128xbf16>, vector<128x128xbf16>, vector<8x128xf32> -> vector<8x128xf32>
    %57 = vector.broadcast %54 : vector<1x128xf32> to vector<8x128xf32>
    %58 = arith.addf %56, %57 : vector<8x128xf32>
    %cst_47 = arith.constant 0.000000e+00 : f32
    %59 = vector.broadcast %cst_47 : f32 to vector<8x128xf32>
    %60 = arith.maximumf %58, %59 : vector<8x128xf32>
    %c0_48 = arith.constant 0 : index
    %c0_49 = arith.constant 0 : index
    %c0_50 = arith.constant 0 : index
    %61 = vector.load %arg14[%c0_48, %c0_49, %c0_50] : memref<1x128x128xbf16, #tpu.memory_space<vmem>>, vector<1x128x128xbf16>
    %62 = vector.shape_cast %61 : vector<1x128x128xbf16> to vector<128x128xbf16>
    %c0_51 = arith.constant 0 : index
    %c0_52 = arith.constant 0 : index
    %c0_53 = arith.constant 0 : index
    %63 = vector.load %arg15[%c0_51, %c0_52, %c0_53] : memref<1x1x128xf32, #tpu.memory_space<vmem>>, vector<1x1x128xf32>
    %64 = vector.shape_cast %63 : vector<1x1x128xf32> to vector<1x128xf32>
    %65 = arith.truncf %60 : vector<8x128xf32> to vector<8x128xbf16>
    %cst_54 = arith.constant dense<0.000000e+00> : vector<8x128xf32>
    %66 = tpu.matmul %65, %62, %cst_54 {dimension_numbers = #tpu.dot_dimension_numbers<[1], [0], [0], [1], [0, 0, 1, 1], [], []>} : vector<8x128xbf16>, vector<128x128xbf16>, vector<8x128xf32> -> vector<8x128xf32>
    %67 = vector.broadcast %64 : vector<1x128xf32> to vector<8x128xf32>
    %68 = arith.addf %66, %67 : vector<8x128xf32>
    %cst_55 = arith.constant 0.000000e+00 : f32
    %69 = vector.broadcast %cst_55 : f32 to vector<8x128xf32>
    %70 = arith.maximumf %68, %69 : vector<8x128xf32>
    %c0_56 = arith.constant 0 : index
    %c0_57 = arith.constant 0 : index
    %c0_58 = arith.constant 0 : index
    %71 = vector.load %arg16[%c0_56, %c0_57, %c0_58] : memref<1x128x3072xbf16, #tpu.memory_space<vmem>>, vector<1x128x3072xbf16>
    %72 = vector.shape_cast %71 : vector<1x128x3072xbf16> to vector<128x3072xbf16>
    %c0_59 = arith.constant 0 : index
    %c0_60 = arith.constant 0 : index
    %c0_61 = arith.constant 0 : index
    %73 = vector.load %arg17[%c0_59, %c0_60, %c0_61] : memref<1x1x3072xf32, #tpu.memory_space<vmem>>, vector<1x1x3072xf32>
    %74 = vector.shape_cast %73 : vector<1x1x3072xf32> to vector<1x3072xf32>
    %75 = arith.truncf %70 : vector<8x128xf32> to vector<8x128xbf16>
    %cst_62 = arith.constant dense<0.000000e+00> : vector<8x3072xf32>
    %76 = tpu.matmul %75, %72, %cst_62 {dimension_numbers = #tpu.dot_dimension_numbers<[1], [0], [0], [1], [0, 0, 1, 1], [], []>} : vector<8x128xbf16>, vector<128x3072xbf16>, vector<8x3072xf32> -> vector<8x3072xf32>
    %77 = vector.broadcast %74 : vector<1x3072xf32> to vector<8x3072xf32>
    %78 = arith.addf %76, %77 : vector<8x3072xf32>
    %79 = arith.negf %78 : vector<8x3072xf32>
    %80 = math.exp %79 : vector<8x3072xf32>
    %cst_63 = arith.constant 1.000000e+00 : f32
    %81 = vector.broadcast %cst_63 : f32 to vector<8x3072xf32>
    %82 = arith.addf %81, %80 : vector<8x3072xf32>
    %83 = arith.divf %81, %82 : vector<8x3072xf32>
    %84 = arith.mulf %0, %83 : vector<8x3072xf32>
    %cst_64 = arith.constant dense<0.000000e+00> : vector<3072xf32>
    %85 = vector.multi_reduction <add>, %84, %cst_64 [0] : vector<8x3072xf32> to vector<3072xf32>
    %86 = vector.shape_cast %85 : vector<3072xf32> to vector<1x3072xf32>
    %87 = arith.mulf %0, %0 : vector<8x3072xf32>
    %cst_65 = arith.constant dense<0.000000e+00> : vector<3072xf32>
    %88 = vector.multi_reduction <add>, %87, %cst_65 [0] : vector<8x3072xf32> to vector<3072xf32>
    %89 = vector.shape_cast %88 : vector<3072xf32> to vector<1x3072xf32>
    %90 = arith.mulf %83, %83 : vector<8x3072xf32>
    %cst_66 = arith.constant dense<0.000000e+00> : vector<3072xf32>
    %91 = vector.multi_reduction <add>, %90, %cst_66 [0] : vector<8x3072xf32> to vector<3072xf32>
    %92 = vector.shape_cast %91 : vector<3072xf32> to vector<1x3072xf32>
    %93 = arith.mulf %89, %92 : vector<1x3072xf32>
    %cst_67 = arith.constant 1.000000e-16 : f32
    %94 = vector.broadcast %cst_67 : f32 to vector<1x3072xf32>
    %95 = arith.maximumf %93, %94 : vector<1x3072xf32>
    %96 = math.rsqrt %95 : vector<1x3072xf32>
    %97 = arith.mulf %86, %96 : vector<1x3072xf32>
    %cst_68 = arith.constant 1.000000e+00 : f32
    %98 = vector.broadcast %cst_68 : f32 to vector<1x3072xf32>
    %99 = arith.subf %98, %97 : vector<1x3072xf32>
    %c0_69 = arith.constant 0 : index
    %c0_70 = arith.constant 0 : index
    %c0_71 = arith.constant 0 : index
    %100 = vector.load %arg18[%c0_69, %c0_70, %c0_71] : memref<1x1x3072xf32, #tpu.memory_space<vmem>>, vector<1x1x3072xf32>
    %101 = vector.shape_cast %100 : vector<1x1x3072xf32> to vector<1x3072xf32>
    %102 = vector.shape_cast %99 : vector<1x3072xf32> to vector<1x1x3072xf32>
    tpu.vector_store %arg18[%c0_69, %c0_70, %c0_71], %102 {strides = array<i32>} : memref<1x1x3072xf32, #tpu.memory_space<vmem>>, vector<1x1x3072xf32>,
    return
  }
  func.func @transform_0(%arg0: i32) -> (i32, i32) {
    %c0_i32 = arith.constant 0 : i32
    %c0_i32_0 = arith.constant 0 : i32
    %c0_i32_1 = arith.constant 0 : i32
    return %c0_i32, %c0_i32_0 : i32, i32
  }
  func.func @transform_1(%arg0: i32) -> (i32, i32, i32) {
    %c0_i32 = arith.constant 0 : i32
    %c0_i32_0 = arith.constant 0 : i32
    %c0_i32_1 = arith.constant 0 : i32
    return %arg0, %c0_i32, %c0_i32_0 : i32, i32, i32
  }
  func.func @transform_2(%arg0: i32) -> (i32, i32, i32) {
    %c0_i32 = arith.constant 0 : i32
    %c0_i32_0 = arith.constant 0 : i32
    %c0_i32_1 = arith.constant 0 : i32
    return %arg0, %c0_i32, %c0_i32_0 : i32, i32, i32
  }
  func.func @transform_3(%arg0: i32) -> (i32, i32, i32) {
    %c0_i32 = arith.constant 0 : i32
    %c0_i32_0 = arith.constant 0 : i32
    %c0_i32_1 = arith.constant 0 : i32
    return %arg0, %c0_i32, %c0_i32_0 : i32, i32, i32
  }
  func.func @transform_4(%arg0: i32) -> (i32, i32, i32) {
    %c0_i32 = arith.constant 0 : i32
    %c0_i32_0 = arith.constant 0 : i32
    %c0_i32_1 = arith.constant 0 : i32
    return %arg0, %c0_i32, %c0_i32_0 : i32, i32, i32
  }
  func.func @transform_5(%arg0: i32) -> (i32, i32, i32) {
    %c0_i32 = arith.constant 0 : i32
    %c0_i32_0 = arith.constant 0 : i32
    %c0_i32_1 = arith.constant 0 : i32
    return %arg0, %c0_i32, %c0_i32_0 : i32, i32, i32
  }
  func.func @transform_6(%arg0: i32) -> (i32, i32, i32) {
    %c0_i32 = arith.constant 0 : i32
    %c0_i32_0 = arith.constant 0 : i32
    %c0_i32_1 = arith.constant 0 : i32
    return %arg0, %c0_i32, %c0_i32_0 : i32, i32, i32
  }
  func.func @transform_7(%arg0: i32) -> (i32, i32, i32) {
    %c0_i32 = arith.constant 0 : i32
    %c0_i32_0 = arith.constant 0 : i32
    %c0_i32_1 = arith.constant 0 : i32
    return %arg0, %c0_i32, %c0_i32_0 : i32, i32, i32
  }
  func.func @transform_8(%arg0: i32) -> (i32, i32, i32) {
    %c0_i32 = arith.constant 0 : i32
    %c0_i32_0 = arith.constant 0 : i32
    %c0_i32_1 = arith.constant 0 : i32
    return %arg0, %c0_i32, %c0_i32_0 : i32, i32, i32
  }
  func.func @transform_9(%arg0: i32) -> (i32, i32, i32) {
    %c0_i32 = arith.constant 0 : i32
    %c0_i32_0 = arith.constant 0 : i32
    %c0_i32_1 = arith.constant 0 : i32
    return %arg0, %c0_i32, %c0_i32_0 : i32, i32, i32
  }
  func.func @transform_10(%arg0: i32) -> (i32, i32, i32) {
    %c0_i32 = arith.constant 0 : i32
    %c0_i32_0 = arith.constant 0 : i32
    %c0_i32_1 = arith.constant 0 : i32
    return %arg0, %c0_i32, %c0_i32_0 : i32, i32, i32
  }
  func.func @transform_11(%arg0: i32) -> (i32, i32, i32) {
    %c0_i32 = arith.constant 0 : i32
    %c0_i32_0 = arith.constant 0 : i32
    %c0_i32_1 = arith.constant 0 : i32
    return %arg0, %c0_i32, %c0_i32_0 : i32, i32, i32
  }
  func.func @transform_12(%arg0: i32) -> (i32, i32, i32) {
    %c0_i32 = arith.constant 0 : i32
    %c0_i32_0 = arith.constant 0 : i32
    %c0_i32_1 = arith.constant 0 : i32
    return %arg0, %c0_i32, %c0_i32_0 : i32, i32, i32
  }
  func.func @transform_13(%arg0: i32) -> (i32, i32, i32) {
    %c0_i32 = arith.constant 0 : i32
    %c0_i32_0 = arith.constant 0 : i32
    %c0_i32_1 = arith.constant 0 : i32
    return %arg0, %c0_i32, %c0_i32_0 : i32, i32, i32
  }
  func.func @transform_14(%arg0: i32) -> (i32, i32, i32) {
    %c0_i32 = arith.constant 0 : i32
    %c0_i32_0 = arith.constant 0 : i32
    %c0_i32_1 = arith.constant 0 : i32
    return %arg0, %c0_i32, %c0_i32_0 : i32, i32, i32
  }
  func.func @transform_15(%arg0: i32) -> (i32, i32, i32) {
    %c0_i32 = arith.constant 0 : i32
    %c0_i32_0 = arith.constant 0 : i32
    %c0_i32_1 = arith.constant 0 : i32
    return %arg0, %c0_i32, %c0_i32_0 : i32, i32, i32
  }
  func.func @transform_16(%arg0: i32) -> (i32, i32, i32) {
    %c0_i32 = arith.constant 0 : i32
    %c0_i32_0 = arith.constant 0 : i32
    %c0_i32_1 = arith.constant 0 : i32
    return %arg0, %c0_i32, %c0_i32_0 : i32, i32, i32
  }
  func.func @transform_17(%arg0: i32) -> (i32, i32, i32) {
    %c0_i32 = arith.constant 0 : i32
    %c0_i32_0 = arith.constant 0 : i32
    %c0_i32_1 = arith.constant 0 : i32
    return %arg0, %c0_i32, %c0_i32_0 : i32, i32, i32
  }
}

</mosaic_0001>

<llo_original>
// kernel: _train_step.1
$region0: #{_train_step.1}
  #allocation0 [shape = 'u32[]', space=smem, size = 0x4, offset = 0x4, fixed_abs, tag = 'smem constant byte address 0x4 - core index']
  #allocation1 [shape = 'u32[72,128]{1,0:T(1,128)}', space=vmem, size = 0x9000, scoped, tag = 'internal scratch']
  %s0 = inlined_call_operand.hbm [shape: f32[8,3072], index: 0, kind: input, shape index: {}]
  %s1 = inlined_call_operand.hbm [shape: bf16[2,3072,128], index: 1, kind: input, shape index: {}]
  %s2 = inlined_call_operand.hbm [shape: f32[2,1,128], index: 2, kind: input, shape index: {}]
  %s3 = inlined_call_operand.hbm [shape: bf16[2,128,128], index: 3, kind: input, shape index: {}]
  %s4 = inlined_call_operand.hbm [shape: f32[2,1,128], index: 4, kind: input, shape index: {}]
  %s5 = inlined_call_operand.hbm [shape: bf16[2,128,128], index: 5, kind: input, shape index: {}]
  %s6 = inlined_call_operand.hbm [shape: f32[2,1,128], index: 6, kind: input, shape index: {}]
  %s7 = inlined_call_operand.hbm [shape: bf16[2,128,128], index: 7, kind: input, shape index: {}]
  %s8 = inlined_call_operand.hbm [shape: f32[2,1,128], index: 8, kind: input, shape index: {}]
  %s9 = inlined_call_operand.hbm [shape: bf16[2,128,128], index: 9, kind: input, shape index: {}]
  %s10 = inlined_call_operand.hbm [shape: f32[2,1,128], index: 10, kind: input, shape index: {}]
  %s11 = inlined_call_operand.hbm [shape: bf16[2,128,128], index: 11, kind: input, shape index: {}]
  %s12 = inlined_call_operand.hbm [shape: f32[2,1,128], index: 12, kind: input, shape index: {}]
  %s13 = inlined_call_operand.hbm [shape: bf16[2,128,128], index: 13, kind: input, shape index: {}]
  %s14 = inlined_call_operand.hbm [shape: f32[2,1,128], index: 14, kind: input, shape index: {}]
  %s15 = inlined_call_operand.hbm [shape: bf16[2,128,3072], index: 15, kind: input, shape index: {}]
  %s16 = inlined_call_operand.hbm [shape: f32[2,1,3072], index: 16, kind: input, shape index: {}]
  %s17 = inlined_call_operand.vmem [shape: f32[2,1,3072], index: 17, kind: output, shape index: {}]
  %s18 = sld [smem:[#allocation0]]
  $region169: #{_train_step.1} parent=0
    _
  %s20 = ssub.s32 1, %s18
  %s21 = scalar_select 0, %s20, %s18
  $region1: #{_train_step.1} parent=0
    #allocation2 [shape = 'u8[98304]{0}', space=vmem, size = 0x18000, scoped, tag = 'input window, operand 0, single buffered']
    #allocation3 [shape = 's32[2]{0}', space=sflag, size = 0x8, scoped, tag = 'scoped memory for _train_step.1']
    #allocation4 [shape = 'u8[1572864]{0}', space=vmem, size = 0x180000, scoped, tag = 'input window, operand 1']
    #allocation5 [shape = 's32[2]{0}', space=sflag, size = 0x8, scoped, tag = 'scoped memory for _train_step.1']
    #allocation6 [shape = 'u8[1024]{0}', space=vmem, size = 0x400, scoped, tag = 'input window, operand 2']
    #allocation7 [shape = 'u8[65536]{0}', space=vmem, size = 0x10000, scoped, tag = 'input window, operand 3']
    #allocation8 [shape = 's32[2]{0}', space=sflag, size = 0x8, scoped, tag = 'scoped memory for _train_step.1']
    #allocation9 [shape = 'u8[1024]{0}', space=vmem, size = 0x400, scoped, tag = 'input window, operand 4']
    #allocation10 [shape = 'u8[65536]{0}', space=vmem, size = 0x10000, scoped, tag = 'input window, operand 5']
    #allocation11 [shape = 's32[2]{0}', space=sflag, size = 0x8, scoped, tag = 'scoped memory for _train_step.1']
    #allocation12 [shape = 'u8[1024]{0}', space=vmem, size = 0x400, scoped, tag = 'input window, operand 6']
    #allocation13 [shape = 'u8[65536]{0}', space=vmem, size = 0x10000, scoped, tag = 'input window, operand 7']
    #allocation14 [shape = 's32[2]{0}', space=sflag, size = 0x8, scoped, tag = 'scoped memory for _train_step.1']
    #allocation15 [shape = 'u8[1024]{0}', space=vmem, size = 0x400, scoped, tag = 'input window, operand 8']
    #allocation16 [shape = 'u8[65536]{0}', space=vmem, size = 0x10000, scoped, tag = 'input window, operand 9']
    #allocation17 [shape = 's32[2]{0}', space=sflag, size = 0x8, scoped, tag = 'scoped memory for _train_step.1']
    #allocation18 [shape = 'u8[1024]{0}', space=vmem, size = 0x400, scoped, tag = 'input window, operand 10']
    #allocation19 [shape = 'u8[65536]{0}', space=vmem, size = 0x10000, scoped, tag = 'input window, operand 11']
    #allocation20 [shape = 's32[2]{0}', space=sflag, size = 0x8, scoped, tag = 'scoped memory for _train_step.1']
    #allocation21 [shape = 'u8[1024]{0}', space=vmem, size = 0x400, scoped, tag = 'input window, operand 12']
    #allocation22 [shape = 'u8[65536]{0}', space=vmem, size = 0x10000, scoped, tag = 'input window, operand 13']
    #allocation23 [shape = 's32[2]{0}', space=sflag, size = 0x8, scoped, tag = 'scoped memory for _train_step.1']
    #allocation24 [shape = 'u8[1024]{0}', space=vmem, size = 0x400, scoped, tag = 'input window, operand 14']
    #allocation25 [shape = 'u8[1572864]{0}', space=vmem, size = 0x180000, scoped, tag = 'input window, operand 15']
    #allocation26 [shape = 's32[2]{0}', space=sflag, size = 0x8, scoped, tag = 'scoped memory for _train_step.1']
    #allocation27 [shape = 'u8[24576]{0}', space=vmem, size = 0x6000, scoped, tag = 'input window, operand 16']
    %22 = vsyncpa [#allocation3], 0
    %23 = vsyncpa [#allocation5], 0
    %s24 = scalar_lea.sflag [#allocation5], 1
    %25 = vsyncpa %s24, 0
    %26 = vsyncpa [#allocation8], 0
    %s27 = scalar_lea.sflag [#allocation8], 1
    %28 = vsyncpa %s27, 0
    %29 = vsyncpa [#allocation11], 0
    %s30 = scalar_lea.sflag [#allocation11], 1
    %31 = vsyncpa %s30, 0
    %32 = vsyncpa [#allocation14], 0
    %s33 = scalar_lea.sflag [#allocation14], 1
    %34 = vsyncpa %s33, 0
    %35 = vsyncpa [#allocation17], 0
    %s36 = scalar_lea.sflag [#allocation17], 1
    %37 = vsyncpa %s36, 0
    %38 = vsyncpa [#allocation20], 0
    %s39 = scalar_lea.sflag [#allocation20], 1
    %40 = vsyncpa %s39, 0
    %41 = vsyncpa [#allocation23], 0
    %s42 = scalar_lea.sflag [#allocation23], 1
    %43 = vsyncpa %s42, 0
    %44 = vsyncpa [#allocation26], 0
    %s45 = scalar_lea.sflag [#allocation26], 1
    %46 = vsyncpa %s45, 0
    loop: start=0, step=1, limit=4
    $region2: #{_train_step.1} parent=1 // loop_pre_header
      _
    $region3: #{_train_step.1} parent=1 // loop_header
      %s48 = sphi 0, %s52
      %p49 = scmp.ge.s32.totalorder %s48, 4
      %s56 = sphi 0, %s56
      %s58 = sphi 0, %s56
      %s59 = sphi 0, %s58
      %s73 = sphi 0, %s59
      %s79 = sphi 0, %s81
      %s82 = sphi 0, %s79
      %s83 = sphi 0, %s82
      %s99 = sphi 0, %s83
      %s105 = sphi 0, %s107
      %s108 = sphi 0, %s105
      %s109 = sphi 0, %s108
      %s125 = sphi 0, %s109
      %s131 = sphi 0, %s133
      %s134 = sphi 0, %s131
      %s135 = sphi 0, %s134
      %s151 = sphi 0, %s135
      %s157 = sphi 0, %s159
      %s160 = sphi 0, %s157
      %s161 = sphi 0, %s160
      %s177 = sphi 0, %s161
      %s183 = sphi 0, %s185
      %s186 = sphi 0, %s183
      %s187 = sphi 0, %s186
      %s203 = sphi 0, %s187
      %s209 = sphi 0, %s211
      %s212 = sphi 0, %s209
      %s213 = sphi 0, %s212
      %s229 = sphi 0, %s213
      %s235 = sphi 0, %s237
      %s238 = sphi 0, %s235
      %s239 = sphi 0, %s238
      %s255 = sphi 0, %s239
      %s261 = sphi 0, %s263
      %s264 = sphi 0, %s261
      %s265 = sphi 0, %s264
      %s281 = sphi 0, %s265
      %s287 = sphi 0, %s289
      %s290 = sphi 0, %s287
      %s291 = sphi 0, %s290
      %s307 = sphi 0, %s291
      %s313 = sphi 0, %s315
      %s316 = sphi 0, %s313
      %s317 = sphi 0, %s316
      %s333 = sphi 0, %s317
      %s339 = sphi 0, %s341
      %s342 = sphi 0, %s339
      %s343 = sphi 0, %s342
      %s359 = sphi 0, %s343
      %s365 = sphi 0, %s367
      %s368 = sphi 0, %s365
      %s369 = sphi 0, %s368
      %s385 = sphi 0, %s369
      %s391 = sphi 0, %s393
      %s394 = sphi 0, %s391
      %s395 = sphi 0, %s394
      %s411 = sphi 0, %s395
      %s417 = sphi 0, %s419
      %s420 = sphi 0, %s417
      %s421 = sphi 0, %s420
      %s437 = sphi 0, %s421
      %s443 = sphi 0, %s445
      %s446 = sphi 0, %s443
      %s447 = sphi 0, %s446
      %s463 = sphi 0, %s447
      %s469 = sphi 0, %s471
      %s472 = sphi 0, %s469
      %s473 = sphi 0, %s472
      %s489 = sphi 0, %s473
      %s495 = sphi 0, %s497
      %s498 = sphi 0, %s495
      %s499 = sphi 0, %s498
      %s515 = sphi 0, %s499
    $region4: #{_train_step.1} parent=1 // loop_header_branch
      %51 = sbr.rel (%p49) target = $region8
    $region5: #{_train_step.1} parent=1 // loop_body
      %s53 = ssub.s32 %s48, 1
      %s54 = ssub.s32 %s48, 2
      %s55 = sadd.s32 %s48, 1
      %s57 = sadd.s32 %s56, 1
      %p60 = scmp.eq.s32.totalorder %s48, 1
      %p61 = scmp.ne.s32.totalorder %s56, %s58
      %p62 = scmp.eq.s32.totalorder %s48, 0
      %p63 = por %p61, %p62
      %p64 = scmp.ne.s32.totalorder %s56, %s58
      %p65 = scmp.eq.s32.totalorder %s53, 1
      %p66 = por %p64, %p65
      %p67 = scmp.ne.s32.totalorder %s58, %s59
      %p68 = scmp.eq.s32.totalorder %s53, 0
      %p69 = por %p67, %p68
      %p70 = scmp.ne.s32.totalorder %s58, %s59
      %p71 = scmp.eq.s32.totalorder %s54, 1
      %p72 = por %p70, %p71
      %p74 = scmp.ne.s32.totalorder %s59, %s73
      %p75 = scmp.eq.s32.totalorder %s54, 0
      %p76 = por %p74, %p75
      %s77 = ssub.s32 %s48, %s55
      %p78 = scmp.eq.s32.totalorder %s77, 0
      %s80 = sadd.s32 %s79, 1
      %s81 = scalar_select %p78, %s79, %s80
      %p84 = pneg %p78
      %p85 = scmp.eq.s32.totalorder %s48, 1
      %p86 = por %p84, %p85
      %p87 = scmp.ne.s32.totalorder %s79, %s82
      %p88 = scmp.eq.s32.totalorder %s48, 0
      %p89 = por %p87, %p88
      %p90 = scmp.ne.s32.totalorder %s79, %s82
      %p91 = scmp.eq.s32.totalorder %s53, 1
      %p92 = por %p90, %p91
      %p93 = scmp.ne.s32.totalorder %s82, %s83
      %p94 = scmp.eq.s32.totalorder %s53, 0
      %p95 = por %p93, %p94
      %p96 = scmp.ne.s32.totalorder %s82, %s83
      %p97 = scmp.eq.s32.totalorder %s54, 1
      %p98 = por %p96, %p97
      %p100 = scmp.ne.s32.totalorder %s83, %s99
      %p101 = scmp.eq.s32.totalorder %s54, 0
      %p102 = por %p100, %p101
      %s103 = ssub.s32 %s48, %s55
      %p104 = scmp.eq.s32.totalorder %s103, 0
      %s106 = sadd.s32 %s105, 1
      %s107 = scalar_select %p104, %s105, %s106
      %p110 = pneg %p104
      %p111 = scmp.eq.s32.totalorder %s48, 1
      %p112 = por %p110, %p111
      %p113 = scmp.ne.s32.totalorder %s105, %s108
      %p114 = scmp.eq.s32.totalorder %s48, 0
      %p115 = por %p113, %p114
      %p116 = scmp.ne.s32.totalorder %s105, %s108
      %p117 = scmp.eq.s32.totalorder %s53, 1
      %p118 = por %p116, %p117
      %p119 = scmp.ne.s32.totalorder %s108, %s109
      %p120 = scmp.eq.s32.totalorder %s53, 0
      %p121 = por %p119, %p120
      %p122 = scmp.ne.s32.totalorder %s108, %s109
      %p123 = scmp.eq.s32.totalorder %s54, 1
      %p124 = por %p122, %p123
      %p126 = scmp.ne.s32.totalorder %s109, %s125
      %p127 = scmp.eq.s32.totalorder %s54, 0
      %p128 = por %p126, %p127
      %s129 = ssub.s32 %s48, %s55
      %p130 = scmp.eq.s32.totalorder %s129, 0
      %s132 = sadd.s32 %s131, 1
      %s133 = scalar_select %p130, %s131, %s132
      %p136 = pneg %p130
      %p137 = scmp.eq.s32.totalorder %s48, 1
      %p138 = por %p136, %p137
      %p139 = scmp.ne.s32.totalorder %s131, %s134
      %p140 = scmp.eq.s32.totalorder %s48, 0
      %p141 = por %p139, %p140
      %p142 = scmp.ne.s32.totalorder %s131, %s134
      %p143 = scmp.eq.s32.totalorder %s53, 1
      %p144 = por %p142, %p143
      %p145 = scmp.ne.s32.totalorder %s134, %s135
      %p146 = scmp.eq.s32.totalorder %s53, 0
      %p147 = por %p145, %p146
      %p148 = scmp.ne.s32.totalorder %s134, %s135
      %p149 = scmp.eq.s32.totalorder %s54, 1
      %p150 = por %p148, %p149
      %p152 = scmp.ne.s32.totalorder %s135, %s151
      %p153 = scmp.eq.s32.totalorder %s54, 0
      %p154 = por %p152, %p153
      %s155 = ssub.s32 %s48, %s55
      %p156 = scmp.eq.s32.totalorder %s155, 0
      %s158 = sadd.s32 %s157, 1
      %s159 = scalar_select %p156, %s157, %s158
      %p162 = pneg %p156
      %p163 = scmp.eq.s32.totalorder %s48, 1
      %p164 = por %p162, %p163
      %p165 = scmp.ne.s32.totalorder %s157, %s160
      %p166 = scmp.eq.s32.totalorder %s48, 0
      %p167 = por %p165, %p166
      %p168 = scmp.ne.s32.totalorder %s157, %s160
      %p169 = scmp.eq.s32.totalorder %s53, 1
      %p170 = por %p168, %p169
      %p171 = scmp.ne.s32.totalorder %s160, %s161
      %p172 = scmp.eq.s32.totalorder %s53, 0
      %p173 = por %p171, %p172
      %p174 = scmp.ne.s32.totalorder %s160, %s161
      %p175 = scmp.eq.s32.totalorder %s54, 1
      %p176 = por %p174, %p175
      %p178 = scmp.ne.s32.totalorder %s161, %s177
      %p179 = scmp.eq.s32.totalorder %s54, 0
      %p180 = por %p178, %p179
      %s181 = ssub.s32 %s48, %s55
      %p182 = scmp.eq.s32.totalorder %s181, 0
      %s184 = sadd.s32 %s183, 1
      %s185 = scalar_select %p182, %s183, %s184
      %p188 = pneg %p182
      %p189 = scmp.eq.s32.totalorder %s48, 1
      %p190 = por %p188, %p189
      %p191 = scmp.ne.s32.totalorder %s183, %s186
      %p192 = scmp.eq.s32.totalorder %s48, 0
      %p193 = por %p191, %p192
      %p194 = scmp.ne.s32.totalorder %s183, %s186
      %p195 = scmp.eq.s32.totalorder %s53, 1
      %p196 = por %p194, %p195
      %p197 = scmp.ne.s32.totalorder %s186, %s187
      %p198 = scmp.eq.s32.totalorder %s53, 0
      %p199 = por %p197, %p198
      %p200 = scmp.ne.s32.totalorder %s186, %s187
      %p201 = scmp.eq.s32.totalorder %s54, 1
      %p202 = por %p200, %p201
      %p204 = scmp.ne.s32.totalorder %s187, %s203
      %p205 = scmp.eq.s32.totalorder %s54, 0
      %p206 = por %p204, %p205
      %s207 = ssub.s32 %s48, %s55
      %p208 = scmp.eq.s32.totalorder %s207, 0
      %s210 = sadd.s32 %s209, 1
      %s211 = scalar_select %p208, %s209, %s210
      %p214 = pneg %p208
      %p215 = scmp.eq.s32.totalorder %s48, 1
      %p216 = por %p214, %p215
      %p217 = scmp.ne.s32.totalorder %s209, %s212
      %p218 = scmp.eq.s32.totalorder %s48, 0
      %p219 = por %p217, %p218
      %p220 = scmp.ne.s32.totalorder %s209, %s212
      %p221 = scmp.eq.s32.totalorder %s53, 1
      %p222 = por %p220, %p221
      %p223 = scmp.ne.s32.totalorder %s212, %s213
      %p224 = scmp.eq.s32.totalorder %s53, 0
      %p225 = por %p223, %p224
      %p226 = scmp.ne.s32.totalorder %s212, %s213
      %p227 = scmp.eq.s32.totalorder %s54, 1
      %p228 = por %p226, %p227
      %p230 = scmp.ne.s32.totalorder %s213, %s229
      %p231 = scmp.eq.s32.totalorder %s54, 0
      %p232 = por %p230, %p231
      %s233 = ssub.s32 %s48, %s55
      %p234 = scmp.eq.s32.totalorder %s233, 0
      %s236 = sadd.s32 %s235, 1
      %s237 = scalar_select %p234, %s235, %s236
      %p240 = pneg %p234
      %p241 = scmp.eq.s32.totalorder %s48, 1
      %p242 = por %p240, %p241
      %p243 = scmp.ne.s32.totalorder %s235, %s238
      %p244 = scmp.eq.s32.totalorder %s48, 0
      %p245 = por %p243, %p244
      %p246 = scmp.ne.s32.totalorder %s235, %s238
      %p247 = scmp.eq.s32.totalorder %s53, 1
      %p248 = por %p246, %p247
      %p249 = scmp.ne.s32.totalorder %s238, %s239
      %p250 = scmp.eq.s32.totalorder %s53, 0
      %p251 = por %p249, %p250
      %p252 = scmp.ne.s32.totalorder %s238, %s239
      %p253 = scmp.eq.s32.totalorder %s54, 1
      %p254 = por %p252, %p253
      %p256 = scmp.ne.s32.totalorder %s239, %s255
      %p257 = scmp.eq.s32.totalorder %s54, 0
      %p258 = por %p256, %p257
      %s259 = ssub.s32 %s48, %s55
      %p260 = scmp.eq.s32.totalorder %s259, 0
      %s262 = sadd.s32 %s261, 1
      %s263 = scalar_select %p260, %s261, %s262
      %p266 = pneg %p260
      %p267 = scmp.eq.s32.totalorder %s48, 1
      %p268 = por %p266, %p267
      %p269 = scmp.ne.s32.totalorder %s261, %s264
      %p270 = scmp.eq.s32.totalorder %s48, 0
      %p271 = por %p269, %p270
      %p272 = scmp.ne.s32.totalorder %s261, %s264
      %p273 = scmp.eq.s32.totalorder %s53, 1
      %p274 = por %p272, %p273
      %p275 = scmp.ne.s32.totalorder %s264, %s265
      %p276 = scmp.eq.s32.totalorder %s53, 0
      %p277 = por %p275, %p276
      %p278 = scmp.ne.s32.totalorder %s264, %s265
      %p279 = scmp.eq.s32.totalorder %s54, 1
      %p280 = por %p278, %p279
      %p282 = scmp.ne.s32.totalorder %s265, %s281
      %p283 = scmp.eq.s32.totalorder %s54, 0
      %p284 = por %p282, %p283
      %s285 = ssub.s32 %s48, %s55
      %p286 = scmp.eq.s32.totalorder %s285, 0
      %s288 = sadd.s32 %s287, 1
      %s289 = scalar_select %p286, %s287, %s288
      %p292 = pneg %p286
      %p293 = scmp.eq.s32.totalorder %s48, 1
      %p294 = por %p292, %p293
      %p295 = scmp.ne.s32.totalorder %s287, %s290
      %p296 = scmp.eq.s32.totalorder %s48, 0
      %p297 = por %p295, %p296
      %p298 = scmp.ne.s32.totalorder %s287, %s290
      %p299 = scmp.eq.s32.totalorder %s53, 1
      %p300 = por %p298, %p299
      %p301 = scmp.ne.s32.totalorder %s290, %s291
      %p302 = scmp.eq.s32.totalorder %s53, 0
      %p303 = por %p301, %p302
      %p304 = scmp.ne.s32.totalorder %s290, %s291
      %p305 = scmp.eq.s32.totalorder %s54, 1
      %p306 = por %p304, %p305
      %p308 = scmp.ne.s32.totalorder %s291, %s307
      %p309 = scmp.eq.s32.totalorder %s54, 0
      %p310 = por %p308, %p309
      %s311 = ssub.s32 %s48, %s55
      %p312 = scmp.eq.s32.totalorder %s311, 0
      %s314 = sadd.s32 %s313, 1
      %s315 = scalar_select %p312, %s313, %s314
      %p318 = pneg %p312
      %p319 = scmp.eq.s32.totalorder %s48, 1
      %p320 = por %p318, %p319
      %p321 = scmp.ne.s32.totalorder %s313, %s316
      %p322 = scmp.eq.s32.totalorder %s48, 0
      %p323 = por %p321, %p322
      %p324 = scmp.ne.s32.totalorder %s313, %s316
      %p325 = scmp.eq.s32.totalorder %s53, 1
      %p326 = por %p324, %p325
      %p327 = scmp.ne.s32.totalorder %s316, %s317
      %p328 = scmp.eq.s32.totalorder %s53, 0
      %p329 = por %p327, %p328
      %p330 = scmp.ne.s32.totalorder %s316, %s317
      %p331 = scmp.eq.s32.totalorder %s54, 1
      %p332 = por %p330, %p331
      %p334 = scmp.ne.s32.totalorder %s317, %s333
      %p335 = scmp.eq.s32.totalorder %s54, 0
      %p336 = por %p334, %p335
      %s337 = ssub.s32 %s48, %s55
      %p338 = scmp.eq.s32.totalorder %s337, 0
      %s340 = sadd.s32 %s339, 1
      %s341 = scalar_select %p338, %s339, %s340
      %p344 = pneg %p338
      %p345 = scmp.eq.s32.totalorder %s48, 1
      %p346 = por %p344, %p345
      %p347 = scmp.ne.s32.totalorder %s339, %s342
      %p348 = scmp.eq.s32.totalorder %s48, 0
      %p349 = por %p347, %p348
      %p350 = scmp.ne.s32.totalorder %s339, %s342
      %p351 = scmp.eq.s32.totalorder %s53, 1
      %p352 = por %p350, %p351
      %p353 = scmp.ne.s32.totalorder %s342, %s343
      %p354 = scmp.eq.s32.totalorder %s53, 0
      %p355 = por %p353, %p354
      %p356 = scmp.ne.s32.totalorder %s342, %s343
      %p357 = scmp.eq.s32.totalorder %s54, 1
      %p358 = por %p356, %p357
      %p360 = scmp.ne.s32.totalorder %s343, %s359
      %p361 = scmp.eq.s32.totalorder %s54, 0
      %p362 = por %p360, %p361
      %s363 = ssub.s32 %s48, %s55
      %p364 = scmp.eq.s32.totalorder %s363, 0
      %s366 = sadd.s32 %s365, 1
      %s367 = scalar_select %p364, %s365, %s366
      %p370 = pneg %p364
      %p371 = scmp.eq.s32.totalorder %s48, 1
      %p372 = por %p370, %p371
      %p373 = scmp.ne.s32.totalorder %s365, %s368
      %p374 = scmp.eq.s32.totalorder %s48, 0
      %p375 = por %p373, %p374
      %p376 = scmp.ne.s32.totalorder %s365, %s368
      %p377 = scmp.eq.s32.totalorder %s53, 1
      %p378 = por %p376, %p377
      %p379 = scmp.ne.s32.totalorder %s368, %s369
      %p380 = scmp.eq.s32.totalorder %s53, 0
      %p381 = por %p379, %p380
      %p382 = scmp.ne.s32.totalorder %s368, %s369
      %p383 = scmp.eq.s32.totalorder %s54, 1
      %p384 = por %p382, %p383
      %p386 = scmp.ne.s32.totalorder %s369, %s385
      %p387 = scmp.eq.s32.totalorder %s54, 0
      %p388 = por %p386, %p387
      %s389 = ssub.s32 %s48, %s55
      %p390 = scmp.eq.s32.totalorder %s389, 0
      %s392 = sadd.s32 %s391, 1
      %s393 = scalar_select %p390, %s391, %s392
      %p396 = pneg %p390
      %p397 = scmp.eq.s32.totalorder %s48, 1
      %p398 = por %p396, %p397
      %p399 = scmp.ne.s32.totalorder %s391, %s394
      %p400 = scmp.eq.s32.totalorder %s48, 0
      %p401 = por %p399, %p400
      %p402 = scmp.ne.s32.totalorder %s391, %s394
      %p403 = scmp.eq.s32.totalorder %s53, 1
      %p404 = por %p402, %p403
      %p405 = scmp.ne.s32.totalorder %s394, %s395
      %p406 = scmp.eq.s32.totalorder %s53, 0
      %p407 = por %p405, %p406
      %p408 = scmp.ne.s32.totalorder %s394, %s395
      %p409 = scmp.eq.s32.totalorder %s54, 1
      %p410 = por %p408, %p409
      %p412 = scmp.ne.s32.totalorder %s395, %s411
      %p413 = scmp.eq.s32.totalorder %s54, 0
      %p414 = por %p412, %p413
      %s415 = ssub.s32 %s48, %s55
      %p416 = scmp.eq.s32.totalorder %s415, 0
      %s418 = sadd.s32 %s417, 1
      %s419 = scalar_select %p416, %s417, %s418
      %p422 = pneg %p416
      %p423 = scmp.eq.s32.totalorder %s48, 1
      %p424 = por %p422, %p423
      %p425 = scmp.ne.s32.totalorder %s417, %s420
      %p426 = scmp.eq.s32.totalorder %s48, 0
      %p427 = por %p425, %p426
      %p428 = scmp.ne.s32.totalorder %s417, %s420
      %p429 = scmp.eq.s32.totalorder %s53, 1
      %p430 = por %p428, %p429
      %p431 = scmp.ne.s32.totalorder %s420, %s421
      %p432 = scmp.eq.s32.totalorder %s53, 0
      %p433 = por %p431, %p432
      %p434 = scmp.ne.s32.totalorder %s420, %s421
      %p435 = scmp.eq.s32.totalorder %s54, 1
      %p436 = por %p434, %p435
      %p438 = scmp.ne.s32.totalorder %s421, %s437
      %p439 = scmp.eq.s32.totalorder %s54, 0
      %p440 = por %p438, %p439
      %s441 = ssub.s32 %s48, %s55
      %p442 = scmp.eq.s32.totalorder %s441, 0
      %s444 = sadd.s32 %s443, 1
      %s445 = scalar_select %p442, %s443, %s444
      %p448 = pneg %p442
      %p449 = scmp.eq.s32.totalorder %s48, 1
      %p450 = por %p448, %p449
      %p451 = scmp.ne.s32.totalorder %s443, %s446
      %p452 = scmp.eq.s32.totalorder %s48, 0
      %p453 = por %p451, %p452
      %p454 = scmp.ne.s32.totalorder %s443, %s446
      %p455 = scmp.eq.s32.totalorder %s53, 1
      %p456 = por %p454, %p455
      %p457 = scmp.ne.s32.totalorder %s446, %s447
      %p458 = scmp.eq.s32.totalorder %s53, 0
      %p459 = por %p457, %p458
      %p460 = scmp.ne.s32.totalorder %s446, %s447
      %p461 = scmp.eq.s32.totalorder %s54, 1
      %p462 = por %p460, %p461
      %p464 = scmp.ne.s32.totalorder %s447, %s463
      %p465 = scmp.eq.s32.totalorder %s54, 0
      %p466 = por %p464, %p465
      %s467 = ssub.s32 %s48, %s55
      %p468 = scmp.eq.s32.totalorder %s467, 0
      %s470 = sadd.s32 %s469, 1
      %s471 = scalar_select %p468, %s469, %s470
      %p474 = pneg %p468
      %p475 = scmp.eq.s32.totalorder %s48, 1
      %p476 = por %p474, %p475
      %p477 = scmp.ne.s32.totalorder %s469, %s472
      %p478 = scmp.eq.s32.totalorder %s48, 0
      %p479 = por %p477, %p478
      %p480 = scmp.ne.s32.totalorder %s469, %s472
      %p481 = scmp.eq.s32.totalorder %s53, 1
      %p482 = por %p480, %p481
      %p483 = scmp.ne.s32.totalorder %s472, %s473
      %p484 = scmp.eq.s32.totalorder %s53, 0
      %p485 = por %p483, %p484
      %p486 = scmp.ne.s32.totalorder %s472, %s473
      %p487 = scmp.eq.s32.totalorder %s54, 1
      %p488 = por %p486, %p487
      %p490 = scmp.ne.s32.totalorder %s473, %s489
      %p491 = scmp.eq.s32.totalorder %s54, 0
      %p492 = por %p490, %p491
      %s493 = ssub.s32 %s48, %s55
      %p494 = scmp.eq.s32.totalorder %s493, 0
      %s496 = sadd.s32 %s495, 1
      %s497 = scalar_select %p494, %s495, %s496
      %p500 = pneg %p494
      %p501 = scmp.eq.s32.totalorder %s48, 1
      %p502 = por %p500, %p501
      %p503 = scmp.ne.s32.totalorder %s495, %s498
      %p504 = scmp.eq.s32.totalorder %s48, 0
      %p505 = por %p503, %p504
      %p506 = scmp.ne.s32.totalorder %s495, %s498
      %p507 = scmp.eq.s32.totalorder %s53, 1
      %p508 = por %p506, %p507
      %p509 = scmp.ne.s32.totalorder %s498, %s499
      %p510 = scmp.eq.s32.totalorder %s53, 0
      %p511 = por %p509, %p510
      %p512 = scmp.ne.s32.totalorder %s498, %s499
      %p513 = scmp.eq.s32.totalorder %s54, 1
      %p514 = por %p512, %p513
      %p516 = scmp.ne.s32.totalorder %s499, %s515
      %p517 = scmp.eq.s32.totalorder %s54, 0
      %p518 = por %p516, %p517
      %p519 = scmp.le.s32.totalorder 1, %s48
      %p520 = scmp.lt.s32.totalorder %s48, 3
      %p521 = pnand %p519, %p520
      %p522 = pneg %p521
      // Predicated region
      $region9: #{_train_step.1} parent=5 // pred_check
        _
      $region10: #{_train_step.1} parent=5 // pred_check_branch
        %524 = sbr.rel (%p521) target = $region12
      $region11: #{_train_step.1} parent=5 // pred_region
        %s525 = ssub.s32 %s48, 1
        // Predicated region
        $region13: #{_train_step.1} parent=11 // pred_check
          %p526 = pneg %p69
        $region14: #{_train_step.1} parent=11 // pred_check_branch
          %528 = sbr.rel (%p526) target = $region16
        $region15: #{_train_step.1} parent=11 // pred_region
          %530 = vsyncadd [#allocation3], 0
          %s532 = sshll.u32 %s0, 4
          %s533 = int_to_ptr.hbm [resolvable:$true] %s532
          %s534 = sshll.u32 [#allocation2], 4
          %s535 = int_to_ptr.vmem [resolvable:$true] %s534
          %537 = dma.hbm_to_vmem [thread:$0]  %s533, 3072, %s535, [#allocation3]
        $region16: #{_train_step.1} parent=11 // pred_fallthru
          _
      $region12: #{_train_step.1} parent=5 // pred_fallthru
        _
      %p538 = scmp.lt.s32.totalorder %s48, 2
      // Predicated region
      $region17: #{_train_step.1} parent=5 // pred_check
        %p539 = pneg %p538
      $region18: #{_train_step.1} parent=5 // pred_check_branch
        %541 = sbr.rel (%p539) target = $region20
      $region19: #{_train_step.1} parent=5 // pred_region
        // Predicated region
        $region21: #{_train_step.1} parent=19 // pred_check
          %p542 = pneg %p89
        $region22: #{_train_step.1} parent=19 // pred_check_branch
          %544 = sbr.rel (%p542) target = $region24
        $region23: #{_train_step.1} parent=19 // pred_region
          %s545 = sand.u32 %s48, 1
          %s546 = scalar_lea.sflag [#allocation5], %s545
          %s547 = sand.u32 %s79, 1
          %s548 = smul.addr %s547, 1536
          %s549 = scalar_lea.vmem [#allocation4], %s548
          %551 = vsyncadd %s546, 0
          %s552 = smul.addr %s48, 384
          %s553 = smul.addr %s552, 4
          %s554 = scalar_lea.hbm %s1, %s553
          %s555 = sshll.u32 %s554, 4
          %s556 = int_to_ptr.hbm [resolvable:$true] %s555
          %s557 = sshll.u32 %s549, 4
          %s558 = int_to_ptr.vmem [resolvable:$true] %s557
          %563 = dma.hbm_to_vmem [thread:$0]  %s556, 24576, %s558, %s546, 64, 64, 4
        $region24: #{_train_step.1} parent=19 // pred_fallthru
          _
        // Predicated region
        $region25: #{_train_step.1} parent=19 // pred_check
          %p564 = pneg %p115
        $region26: #{_train_step.1} parent=19 // pred_check_branch
          %566 = sbr.rel (%p564) target = $region28
        $region27: #{_train_step.1} parent=19 // pred_region
          %s567 = sand.u32 %s48, 1
          %s568 = scalar_lea.sflag [#allocation5], %s567
          %s569 = sand.u32 %s105, 1
          %s570 = scalar_lea.vmem [#allocation6], %s569
          %572 = vsyncadd %s568, 0
          %s573 = scalar_lea.hbm %s2, %s48
          %s575 = sshll.u32 %s573, 4
          %s576 = int_to_ptr.hbm [resolvable:$true] %s575
          %s577 = sshll.u32 %s570, 4
          %s578 = int_to_ptr.vmem [resolvable:$true] %s577
          %580 = dma.hbm_to_vmem [thread:$0]  %s576, 16, %s578, %s568
        $region28: #{_train_step.1} parent=19 // pred_fallthru
          _
        // Predicated region
        $region29: #{_train_step.1} parent=19 // pred_check
          %p581 = pneg %p141
        $region30: #{_train_step.1} parent=19 // pred_check_branch
          %583 = sbr.rel (%p581) target = $region32
        $region31: #{_train_step.1} parent=19 // pred_region
          %s584 = sand.u32 %s48, 1
          %s585 = scalar_lea.sflag [#allocation8], %s584
          %s586 = sand.u32 %s131, 1
          %s587 = smul.addr %s586, 64
          %s588 = scalar_lea.vmem [#allocation7], %s587
          %590 = vsyncadd %s585, 0
          %s591 = smul.addr %s48, 16
          %s592 = smul.addr %s591, 4
          %s593 = scalar_lea.hbm %s3, %s592
          %s594 = sshll.u32 %s593, 4
          %s595 = int_to_ptr.hbm [resolvable:$true] %s594
          %s596 = sshll.u32 %s588, 4
          %s597 = int_to_ptr.vmem [resolvable:$true] %s596
          %602 = dma.hbm_to_vmem [thread:$0]  %s595, 1024, %s597, %s585, 64, 64, 4
        $region32: #{_train_step.1} parent=19 // pred_fallthru
          _
        // Predicated region
        $region33: #{_train_step.1} parent=19 // pred_check
          %p603 = pneg %p167
        $region34: #{_train_step.1} parent=19 // pred_check_branch
          %605 = sbr.rel (%p603) target = $region36
        $region35: #{_train_step.1} parent=19 // pred_region
          %s606 = sand.u32 %s48, 1
          %s607 = scalar_lea.sflag [#allocation8], %s606
          %s608 = sand.u32 %s157, 1
          %s609 = scalar_lea.vmem [#allocation9], %s608
          %611 = vsyncadd %s607, 0
          %s612 = scalar_lea.hbm %s4, %s48
          %s614 = sshll.u32 %s612, 4
          %s615 = int_to_ptr.hbm [resolvable:$true] %s614
          %s616 = sshll.u32 %s609, 4
          %s617 = int_to_ptr.vmem [resolvable:$true] %s616
          %619 = dma.hbm_to_vmem [thread:$0]  %s615, 16, %s617, %s607
        $region36: #{_train_step.1} parent=19 // pred_fallthru
          _
        // Predicated region
        $region37: #{_train_step.1} parent=19 // pred_check
          %p620 = pneg %p193
        $region38: #{_train_step.1} parent=19 // pred_check_branch
          %622 = sbr.rel (%p620) target = $region40
        $region39: #{_train_step.1} parent=19 // pred_region
          %s623 = sand.u32 %s48, 1
          %s624 = scalar_lea.sflag [#allocation11], %s623
          %s625 = sand.u32 %s183, 1
          %s626 = smul.addr %s625, 64
          %s627 = scalar_lea.vmem [#allocation10], %s626
          %629 = vsyncadd %s624, 0
          %s630 = smul.addr %s48, 16
          %s631 = smul.addr %s630, 4
          %s632 = scalar_lea.hbm %s5, %s631
          %s633 = sshll.u32 %s632, 4
          %s634 = int_to_ptr.hbm [resolvable:$true] %s633
          %s635 = sshll.u32 %s627, 4
          %s636 = int_to_ptr.vmem [resolvable:$true] %s635
          %641 = dma.hbm_to_vmem [thread:$0]  %s634, 1024, %s636, %s624, 64, 64, 4
        $region40: #{_train_step.1} parent=19 // pred_fallthru
          _
        // Predicated region
        $region41: #{_train_step.1} parent=19 // pred_check
          %p642 = pneg %p219
        $region42: #{_train_step.1} parent=19 // pred_check_branch
          %644 = sbr.rel (%p642) target = $region44
        $region43: #{_train_step.1} parent=19 // pred_region
          %s645 = sand.u32 %s48, 1
          %s646 = scalar_lea.sflag [#allocation11], %s645
          %s647 = sand.u32 %s209, 1
          %s648 = scalar_lea.vmem [#allocation12], %s647
          %650 = vsyncadd %s646, 0
          %s651 = scalar_lea.hbm %s6, %s48
          %s653 = sshll.u32 %s651, 4
          %s654 = int_to_ptr.hbm [resolvable:$true] %s653
          %s655 = sshll.u32 %s648, 4
          %s656 = int_to_ptr.vmem [resolvable:$true] %s655
          %658 = dma.hbm_to_vmem [thread:$0]  %s654, 16, %s656, %s646
        $region44: #{_train_step.1} parent=19 // pred_fallthru
          _
        // Predicated region
        $region45: #{_train_step.1} parent=19 // pred_check
          %p659 = pneg %p245
        $region46: #{_train_step.1} parent=19 // pred_check_branch
          %661 = sbr.rel (%p659) target = $region48
        $region47: #{_train_step.1} parent=19 // pred_region
          %s662 = sand.u32 %s48, 1
          %s663 = scalar_lea.sflag [#allocation14], %s662
          %s664 = sand.u32 %s235, 1
          %s665 = smul.addr %s664, 64
          %s666 = scalar_lea.vmem [#allocation13], %s665
          %668 = vsyncadd %s663, 0
          %s669 = smul.addr %s48, 16
          %s670 = smul.addr %s669, 4
          %s671 = scalar_lea.hbm %s7, %s670
          %s672 = sshll.u32 %s671, 4
          %s673 = int_to_ptr.hbm [resolvable:$true] %s672
          %s674 = sshll.u32 %s666, 4
          %s675 = int_to_ptr.vmem [resolvable:$true] %s674
          %680 = dma.hbm_to_vmem [thread:$0]  %s673, 1024, %s675, %s663, 64, 64, 4
        $region48: #{_train_step.1} parent=19 // pred_fallthru
          _
        // Predicated region
        $region49: #{_train_step.1} parent=19 // pred_check
          %p681 = pneg %p271
        $region50: #{_train_step.1} parent=19 // pred_check_branch
          %683 = sbr.rel (%p681) target = $region52
        $region51: #{_train_step.1} parent=19 // pred_region
          %s684 = sand.u32 %s48, 1
          %s685 = scalar_lea.sflag [#allocation14], %s684
          %s686 = sand.u32 %s261, 1
          %s687 = scalar_lea.vmem [#allocation15], %s686
          %689 = vsyncadd %s685, 0
          %s690 = scalar_lea.hbm %s8, %s48
          %s692 = sshll.u32 %s690, 4
          %s693 = int_to_ptr.hbm [resolvable:$true] %s692
          %s694 = sshll.u32 %s687, 4
          %s695 = int_to_ptr.vmem [resolvable:$true] %s694
          %697 = dma.hbm_to_vmem [thread:$0]  %s693, 16, %s695, %s685
        $region52: #{_train_step.1} parent=19 // pred_fallthru
          _
        // Predicated region
        $region53: #{_train_step.1} parent=19 // pred_check
          %p698 = pneg %p297
        $region54: #{_train_step.1} parent=19 // pred_check_branch
          %700 = sbr.rel (%p698) target = $region56
        $region55: #{_train_step.1} parent=19 // pred_region
          %s701 = sand.u32 %s48, 1
          %s702 = scalar_lea.sflag [#allocation17], %s701
          %s703 = sand.u32 %s287, 1
          %s704 = smul.addr %s703, 64
          %s705 = scalar_lea.vmem [#allocation16], %s704
          %707 = vsyncadd %s702, 0
          %s708 = smul.addr %s48, 16
          %s709 = smul.addr %s708, 4
          %s710 = scalar_lea.hbm %s9, %s709
          %s711 = sshll.u32 %s710, 4
          %s712 = int_to_ptr.hbm [resolvable:$true] %s711
          %s713 = sshll.u32 %s705, 4
          %s714 = int_to_ptr.vmem [resolvable:$true] %s713
          %719 = dma.hbm_to_vmem [thread:$0]  %s712, 1024, %s714, %s702, 64, 64, 4
        $region56: #{_train_step.1} parent=19 // pred_fallthru
          _
        // Predicated region
        $region57: #{_train_step.1} parent=19 // pred_check
          %p720 = pneg %p323
        $region58: #{_train_step.1} parent=19 // pred_check_branch
          %722 = sbr.rel (%p720) target = $region60
        $region59: #{_train_step.1} parent=19 // pred_region
          %s723 = sand.u32 %s48, 1
          %s724 = scalar_lea.sflag [#allocation17], %s723
          %s725 = sand.u32 %s313, 1
          %s726 = scalar_lea.vmem [#allocation18], %s725
          %728 = vsyncadd %s724, 0
          %s729 = scalar_lea.hbm %s10, %s48
          %s731 = sshll.u32 %s729, 4
          %s732 = int_to_ptr.hbm [resolvable:$true] %s731
          %s733 = sshll.u32 %s726, 4
          %s734 = int_to_ptr.vmem [resolvable:$true] %s733
          %736 = dma.hbm_to_vmem [thread:$0]  %s732, 16, %s734, %s724
        $region60: #{_train_step.1} parent=19 // pred_fallthru
          _
        // Predicated region
        $region61: #{_train_step.1} parent=19 // pred_check
          %p737 = pneg %p349
        $region62: #{_train_step.1} parent=19 // pred_check_branch
          %739 = sbr.rel (%p737) target = $region64
        $region63: #{_train_step.1} parent=19 // pred_region
          %s740 = sand.u32 %s48, 1
          %s741 = scalar_lea.sflag [#allocation20], %s740
          %s742 = sand.u32 %s339, 1
          %s743 = smul.addr %s742, 64
          %s744 = scalar_lea.vmem [#allocation19], %s743
          %746 = vsyncadd %s741, 0
          %s747 = smul.addr %s48, 16
          %s748 = smul.addr %s747, 4
          %s749 = scalar_lea.hbm %s11, %s748
          %s750 = sshll.u32 %s749, 4
          %s751 = int_to_ptr.hbm [resolvable:$true] %s750
          %s752 = sshll.u32 %s744, 4
          %s753 = int_to_ptr.vmem [resolvable:$true] %s752
          %758 = dma.hbm_to_vmem [thread:$0]  %s751, 1024, %s753, %s741, 64, 64, 4
        $region64: #{_train_step.1} parent=19 // pred_fallthru
          _
        // Predicated region
        $region65: #{_train_step.1} parent=19 // pred_check
          %p759 = pneg %p375
        $region66: #{_train_step.1} parent=19 // pred_check_branch
          %761 = sbr.rel (%p759) target = $region68
        $region67: #{_train_step.1} parent=19 // pred_region
          %s762 = sand.u32 %s48, 1
          %s763 = scalar_lea.sflag [#allocation20], %s762
          %s764 = sand.u32 %s365, 1
          %s765 = scalar_lea.vmem [#allocation21], %s764
          %767 = vsyncadd %s763, 0
          %s768 = scalar_lea.hbm %s12, %s48
          %s770 = sshll.u32 %s768, 4
          %s771 = int_to_ptr.hbm [resolvable:$true] %s770
          %s772 = sshll.u32 %s765, 4
          %s773 = int_to_ptr.vmem [resolvable:$true] %s772
          %775 = dma.hbm_to_vmem [thread:$0]  %s771, 16, %s773, %s763
        $region68: #{_train_step.1} parent=19 // pred_fallthru
          _
        // Predicated region
        $region69: #{_train_step.1} parent=19 // pred_check
          %p776 = pneg %p401
        $region70: #{_train_step.1} parent=19 // pred_check_branch
          %778 = sbr.rel (%p776) target = $region72
        $region71: #{_train_step.1} parent=19 // pred_region
          %s779 = sand.u32 %s48, 1
          %s780 = scalar_lea.sflag [#allocation23], %s779
          %s781 = sand.u32 %s391, 1
          %s782 = smul.addr %s781, 64
          %s783 = scalar_lea.vmem [#allocation22], %s782
          %785 = vsyncadd %s780, 0
          %s786 = smul.addr %s48, 16
          %s787 = smul.addr %s786, 4
          %s788 = scalar_lea.hbm %s13, %s787
          %s789 = sshll.u32 %s788, 4
          %s790 = int_to_ptr.hbm [resolvable:$true] %s789
          %s791 = sshll.u32 %s783, 4
          %s792 = int_to_ptr.vmem [resolvable:$true] %s791
          %797 = dma.hbm_to_vmem [thread:$0]  %s790, 1024, %s792, %s780, 64, 64, 4
        $region72: #{_train_step.1} parent=19 // pred_fallthru
          _
        // Predicated region
        $region73: #{_train_step.1} parent=19 // pred_check
          %p798 = pneg %p427
        $region74: #{_train_step.1} parent=19 // pred_check_branch
          %800 = sbr.rel (%p798) target = $region76
        $region75: #{_train_step.1} parent=19 // pred_region
          %s801 = sand.u32 %s48, 1
          %s802 = scalar_lea.sflag [#allocation23], %s801
          %s803 = sand.u32 %s417, 1
          %s804 = scalar_lea.vmem [#allocation24], %s803
          %806 = vsyncadd %s802, 0
          %s807 = scalar_lea.hbm %s14, %s48
          %s809 = sshll.u32 %s807, 4
          %s810 = int_to_ptr.hbm [resolvable:$true] %s809
          %s811 = sshll.u32 %s804, 4
          %s812 = int_to_ptr.vmem [resolvable:$true] %s811
          %814 = dma.hbm_to_vmem [thread:$0]  %s810, 16, %s812, %s802
        $region76: #{_train_step.1} parent=19 // pred_fallthru
          _
        // Predicated region
        $region77: #{_train_step.1} parent=19 // pred_check
          %p815 = pneg %p453
        $region78: #{_train_step.1} parent=19 // pred_check_branch
          %817 = sbr.rel (%p815) target = $region80
        $region79: #{_train_step.1} parent=19 // pred_region
          %s818 = sand.u32 %s48, 1
          %s819 = scalar_lea.sflag [#allocation26], %s818
          %s820 = sand.u32 %s443, 1
          %s821 = smul.addr %s820, 1536
          %s822 = scalar_lea.vmem [#allocation25], %s821
          %824 = vsyncadd %s819, 0
          %s825 = smul.addr %s48, 384
          %s826 = smul.addr %s825, 4
          %s827 = scalar_lea.hbm %s15, %s826
          %s828 = sshll.u32 %s827, 4
          %s829 = int_to_ptr.hbm [resolvable:$true] %s828
          %s830 = sshll.u32 %s822, 4
          %s831 = int_to_ptr.vmem [resolvable:$true] %s830
          %836 = dma.hbm_to_vmem [thread:$0]  %s829, 24576, %s831, %s819, 1536, 1536, 96
        $region80: #{_train_step.1} parent=19 // pred_fallthru
          _
        // Predicated region
        $region81: #{_train_step.1} parent=19 // pred_check
          %p837 = pneg %p479
        $region82: #{_train_step.1} parent=19 // pred_check_branch
          %839 = sbr.rel (%p837) target = $region84
        $region83: #{_train_step.1} parent=19 // pred_region
          %s840 = sand.u32 %s48, 1
          %s841 = scalar_lea.sflag [#allocation26], %s840
          %s842 = sand.u32 %s469, 1
          %s843 = smul.addr %s842, 24
          %s844 = scalar_lea.vmem [#allocation27], %s843
          %846 = vsyncadd %s841, 0
          %s847 = smul.addr %s48, 24
          %s848 = scalar_lea.hbm %s16, %s847
          %s850 = sshll.u32 %s848, 4
          %s851 = int_to_ptr.hbm [resolvable:$true] %s850
          %s852 = sshll.u32 %s844, 4
          %s853 = int_to_ptr.vmem [resolvable:$true] %s852
          %855 = dma.hbm_to_vmem [thread:$0]  %s851, 384, %s853, %s841
        $region84: #{_train_step.1} parent=19 // pred_fallthru
          _
      $region20: #{_train_step.1} parent=5 // pred_fallthru
        _
      %p856 = scmp.le.s32.totalorder 1, %s48
      %p857 = scmp.lt.s32.totalorder %s48, 3
      %p858 = pnand %p856, %p857
      %p859 = pneg %p858
      // Predicated region
      $region85: #{_train_step.1} parent=5 // pred_check
        _
      $region86: #{_train_step.1} parent=5 // pred_check_branch
        %861 = sbr.rel (%p858) target = $region88
      $region87: #{_train_step.1} parent=5 // pred_region
        %s862 = ssub.s32 %s48, 1
        // Predicated region
        $region89: #{_train_step.1} parent=87 // pred_check
          %p863 = pneg %p69
        $region90: #{_train_step.1} parent=87 // pred_check_branch
          %865 = sbr.rel (%p863) target = $region92
        $region91: #{_train_step.1} parent=87 // pred_region
          %867 = dma.done [#allocation3], 3072
        $region92: #{_train_step.1} parent=87 // pred_fallthru
          _
        %s868 = sand.u32 %s53, 1
        %s869 = scalar_lea.sflag [#allocation5], %s868
        %s870 = sand.u32 %s82, 1
        %s871 = smul.addr %s870, 1536
        %s872 = scalar_lea.vmem [#allocation4], %s871
        // Predicated region
        $region93: #{_train_step.1} parent=87 // pred_check
          %p873 = pneg %p95
        $region94: #{_train_step.1} parent=87 // pred_check_branch
          %875 = sbr.rel (%p873) target = $region96
        $region95: #{_train_step.1} parent=87 // pred_region
          %877 = dma.done %s869, 24576
        $region96: #{_train_step.1} parent=87 // pred_fallthru
          _
        %s878 = sand.u32 %s53, 1
        %s879 = scalar_lea.sflag [#allocation5], %s878
        %s880 = sand.u32 %s108, 1
        %s881 = scalar_lea.vmem [#allocation6], %s880
        // Predicated region
        $region97: #{_train_step.1} parent=87 // pred_check
          %p882 = pneg %p121
        $region98: #{_train_step.1} parent=87 // pred_check_branch
          %884 = sbr.rel (%p882) target = $region100
        $region99: #{_train_step.1} parent=87 // pred_region
          %886 = dma.done %s879, 16
        $region100: #{_train_step.1} parent=87 // pred_fallthru
          _
        %s887 = sand.u32 %s53, 1
        %s888 = scalar_lea.sflag [#allocation8], %s887
        %s889 = sand.u32 %s134, 1
        %s890 = smul.addr %s889, 64
        %s891 = scalar_lea.vmem [#allocation7], %s890
        // Predicated region
        $region101: #{_train_step.1} parent=87 // pred_check
          %p892 = pneg %p147
        $region102: #{_train_step.1} parent=87 // pred_check_branch
          %894 = sbr.rel (%p892) target = $region104
        $region103: #{_train_step.1} parent=87 // pred_region
          %896 = dma.done %s888, 1024
        $region104: #{_train_step.1} parent=87 // pred_fallthru
          _
        %s897 = sand.u32 %s53, 1
        %s898 = scalar_lea.sflag [#allocation8], %s897
        %s899 = sand.u32 %s160, 1
        %s900 = scalar_lea.vmem [#allocation9], %s899
        // Predicated region
        $region105: #{_train_step.1} parent=87 // pred_check
          %p901 = pneg %p173
        $region106: #{_train_step.1} parent=87 // pred_check_branch
          %903 = sbr.rel (%p901) target = $region108
        $region107: #{_train_step.1} parent=87 // pred_region
          %905 = dma.done %s898, 16
        $region108: #{_train_step.1} parent=87 // pred_fallthru
          _
        %s906 = sand.u32 %s53, 1
        %s907 = scalar_lea.sflag [#allocation11], %s906
        %s908 = sand.u32 %s186, 1
        %s909 = smul.addr %s908, 64
        %s910 = scalar_lea.vmem [#allocation10], %s909
        // Predicated region
        $region109: #{_train_step.1} parent=87 // pred_check
          %p911 = pneg %p199
        $region110: #{_train_step.1} parent=87 // pred_check_branch
          %913 = sbr.rel (%p911) target = $region112
        $region111: #{_train_step.1} parent=87 // pred_region
          %915 = dma.done %s907, 1024
        $region112: #{_train_step.1} parent=87 // pred_fallthru
          _
        %s916 = sand.u32 %s53, 1
        %s917 = scalar_lea.sflag [#allocation11], %s916
        %s918 = sand.u32 %s212, 1
        %s919 = scalar_lea.vmem [#allocation12], %s918
        // Predicated region
        $region113: #{_train_step.1} parent=87 // pred_check
          %p920 = pneg %p225
        $region114: #{_train_step.1} parent=87 // pred_check_branch
          %922 = sbr.rel (%p920) target = $region116
        $region115: #{_train_step.1} parent=87 // pred_region
          %924 = dma.done %s917, 16
        $region116: #{_train_step.1} parent=87 // pred_fallthru
          _
        %s925 = sand.u32 %s53, 1
        %s926 = scalar_lea.sflag [#allocation14], %s925
        %s927 = sand.u32 %s238, 1
        %s928 = smul.addr %s927, 64
        %s929 = scalar_lea.vmem [#allocation13], %s928
        // Predicated region
        $region117: #{_train_step.1} parent=87 // pred_check
          %p930 = pneg %p251
        $region118: #{_train_step.1} parent=87 // pred_check_branch
          %932 = sbr.rel (%p930) target = $region120
        $region119: #{_train_step.1} parent=87 // pred_region
          %934 = dma.done %s926, 1024
        $region120: #{_train_step.1} parent=87 // pred_fallthru
          _
        %s935 = sand.u32 %s53, 1
        %s936 = scalar_lea.sflag [#allocation14], %s935
        %s937 = sand.u32 %s264, 1
        %s938 = scalar_lea.vmem [#allocation15], %s937
        // Predicated region
        $region121: #{_train_step.1} parent=87 // pred_check
          %p939 = pneg %p277
        $region122: #{_train_step.1} parent=87 // pred_check_branch
          %941 = sbr.rel (%p939) target = $region124
        $region123: #{_train_step.1} parent=87 // pred_region
          %943 = dma.done %s936, 16
        $region124: #{_train_step.1} parent=87 // pred_fallthru
          _
        %s944 = sand.u32 %s53, 1
        %s945 = scalar_lea.sflag [#allocation17], %s944
        %s946 = sand.u32 %s290, 1
        %s947 = smul.addr %s946, 64
        %s948 = scalar_lea.vmem [#allocation16], %s947
        // Predicated region
        $region125: #{_train_step.1} parent=87 // pred_check
          %p949 = pneg %p303
        $region126: #{_train_step.1} parent=87 // pred_check_branch
          %951 = sbr.rel (%p949) target = $region128
        $region127: #{_train_step.1} parent=87 // pred_region
          %953 = dma.done %s945, 1024
        $region128: #{_train_step.1} parent=87 // pred_fallthru
          _
        %s954 = sand.u32 %s53, 1
        %s955 = scalar_lea.sflag [#allocation17], %s954
        %s956 = sand.u32 %s316, 1
        %s957 = scalar_lea.vmem [#allocation18], %s956
        // Predicated region
        $region129: #{_train_step.1} parent=87 // pred_check
          %p958 = pneg %p329
        $region130: #{_train_step.1} parent=87 // pred_check_branch
          %960 = sbr.rel (%p958) target = $region132
        $region131: #{_train_step.1} parent=87 // pred_region
          %962 = dma.done %s955, 16
        $region132: #{_train_step.1} parent=87 // pred_fallthru
          _
        %s963 = sand.u32 %s53, 1
        %s964 = scalar_lea.sflag [#allocation20], %s963
        %s965 = sand.u32 %s342, 1
        %s966 = smul.addr %s965, 64
        %s967 = scalar_lea.vmem [#allocation19], %s966
        // Predicated region
        $region133: #{_train_step.1} parent=87 // pred_check
          %p968 = pneg %p355
        $region134: #{_train_step.1} parent=87 // pred_check_branch
          %970 = sbr.rel (%p968) target = $region136
        $region135: #{_train_step.1} parent=87 // pred_region
          %972 = dma.done %s964, 1024
        $region136: #{_train_step.1} parent=87 // pred_fallthru
          _
        %s973 = sand.u32 %s53, 1
        %s974 = scalar_lea.sflag [#allocation20], %s973
        %s975 = sand.u32 %s368, 1
        %s976 = scalar_lea.vmem [#allocation21], %s975
        // Predicated region
        $region137: #{_train_step.1} parent=87 // pred_check
          %p977 = pneg %p381
        $region138: #{_train_step.1} parent=87 // pred_check_branch
          %979 = sbr.rel (%p977) target = $region140
        $region139: #{_train_step.1} parent=87 // pred_region
          %981 = dma.done %s974, 16
        $region140: #{_train_step.1} parent=87 // pred_fallthru
          _
        %s982 = sand.u32 %s53, 1
        %s983 = scalar_lea.sflag [#allocation23], %s982
        %s984 = sand.u32 %s394, 1
        %s985 = smul.addr %s984, 64
        %s986 = scalar_lea.vmem [#allocation22], %s985
        // Predicated region
        $region141: #{_train_step.1} parent=87 // pred_check
          %p987 = pneg %p407
        $region142: #{_train_step.1} parent=87 // pred_check_branch
          %989 = sbr.rel (%p987) target = $region144
        $region143: #{_train_step.1} parent=87 // pred_region
          %991 = dma.done %s983, 1024
        $region144: #{_train_step.1} parent=87 // pred_fallthru
          _
        %s992 = sand.u32 %s53, 1
        %s993 = scalar_lea.sflag [#allocation23], %s992
        %s994 = sand.u32 %s420, 1
        %s995 = scalar_lea.vmem [#allocation24], %s994
        // Predicated region
        $region145: #{_train_step.1} parent=87 // pred_check
          %p996 = pneg %p433
        $region146: #{_train_step.1} parent=87 // pred_check_branch
          %998 = sbr.rel (%p996) target = $region148
        $region147: #{_train_step.1} parent=87 // pred_region
          %1000 = dma.done %s993, 16
        $region148: #{_train_step.1} parent=87 // pred_fallthru
          _
        %s1001 = sand.u32 %s53, 1
        %s1002 = scalar_lea.sflag [#allocation26], %s1001
        %s1003 = sand.u32 %s446, 1
        %s1004 = smul.addr %s1003, 1536
        %s1005 = scalar_lea.vmem [#allocation25], %s1004
        // Predicated region
        $region149: #{_train_step.1} parent=87 // pred_check
          %p1006 = pneg %p459
        $region150: #{_train_step.1} parent=87 // pred_check_branch
          %1008 = sbr.rel (%p1006) target = $region152
        $region151: #{_train_step.1} parent=87 // pred_region
          %1010 = dma.done %s1002, 24576
        $region152: #{_train_step.1} parent=87 // pred_fallthru
          _
        %s1011 = sand.u32 %s53, 1
        %s1012 = scalar_lea.sflag [#allocation26], %s1011
        %s1013 = sand.u32 %s472, 1
        %s1014 = smul.addr %s1013, 24
        %s1015 = scalar_lea.vmem [#allocation27], %s1014
        // Predicated region
        $region153: #{_train_step.1} parent=87 // pred_check
          %p1016 = pneg %p485
        $region154: #{_train_step.1} parent=87 // pred_check_branch
          %1018 = sbr.rel (%p1016) target = $region156
        $region155: #{_train_step.1} parent=87 // pred_region
          %1020 = dma.done %s1012, 384
        $region156: #{_train_step.1} parent=87 // pred_fallthru
          _
        %p1021 = pneg %p69
        %p1022 = pneg %p66
        %s1023 = sand.u32 %s53, 1
        %s1024 = scalar_lea.sflag [#allocation5], %s1023
        %s1025 = sand.u32 %s82, 1
        %s1026 = smul.addr %s1025, 1536
        %s1027 = scalar_lea.vmem [#allocation4], %s1026
        %p1028 = pneg %p95
        %p1029 = pneg %p92
        %s1030 = sand.u32 %s53, 1
        %s1031 = scalar_lea.sflag [#allocation5], %s1030
        %s1032 = sand.u32 %s108, 1
        %s1033 = scalar_lea.vmem [#allocation6], %s1032
        %p1034 = pneg %p121
        %p1035 = pneg %p118
        %s1036 = sand.u32 %s53, 1
        %s1037 = scalar_lea.sflag [#allocation8], %s1036
        %s1038 = sand.u32 %s134, 1
        %s1039 = smul.addr %s1038, 64
        %s1040 = scalar_lea.vmem [#allocation7], %s1039
        %p1041 = pneg %p147
        %p1042 = pneg %p144
        %s1043 = sand.u32 %s53, 1
        %s1044 = scalar_lea.sflag [#allocation8], %s1043
        %s1045 = sand.u32 %s160, 1
        %s1046 = scalar_lea.vmem [#allocation9], %s1045
        %p1047 = pneg %p173
        %p1048 = pneg %p170
        %s1049 = sand.u32 %s53, 1
        %s1050 = scalar_lea.sflag [#allocation11], %s1049
        %s1051 = sand.u32 %s186, 1
        %s1052 = smul.addr %s1051, 64
        %s1053 = scalar_lea.vmem [#allocation10], %s1052
        %p1054 = pneg %p199
        %p1055 = pneg %p196
        %s1056 = sand.u32 %s53, 1
        %s1057 = scalar_lea.sflag [#allocation11], %s1056
        %s1058 = sand.u32 %s212, 1
        %s1059 = scalar_lea.vmem [#allocation12], %s1058
        %p1060 = pneg %p225
        %p1061 = pneg %p222
        %s1062 = sand.u32 %s53, 1
        %s1063 = scalar_lea.sflag [#allocation14], %s1062
        %s1064 = sand.u32 %s238, 1
        %s1065 = smul.addr %s1064, 64
        %s1066 = scalar_lea.vmem [#allocation13], %s1065
        %p1067 = pneg %p251
        %p1068 = pneg %p248
        %s1069 = sand.u32 %s53, 1
        %s1070 = scalar_lea.sflag [#allocation14], %s1069
        %s1071 = sand.u32 %s264, 1
        %s1072 = scalar_lea.vmem [#allocation15], %s1071
        %p1073 = pneg %p277
        %p1074 = pneg %p274
        %s1075 = sand.u32 %s53, 1
        %s1076 = scalar_lea.sflag [#allocation17], %s1075
        %s1077 = sand.u32 %s290, 1
        %s1078 = smul.addr %s1077, 64
        %s1079 = scalar_lea.vmem [#allocation16], %s1078
        %p1080 = pneg %p303
        %p1081 = pneg %p300
        %s1082 = sand.u32 %s53, 1
        %s1083 = scalar_lea.sflag [#allocation17], %s1082
        %s1084 = sand.u32 %s316, 1
        %s1085 = scalar_lea.vmem [#allocation18], %s1084
        %p1086 = pneg %p329
        %p1087 = pneg %p326
        %s1088 = sand.u32 %s53, 1
        %s1089 = scalar_lea.sflag [#allocation20], %s1088
        %s1090 = sand.u32 %s342, 1
        %s1091 = smul.addr %s1090, 64
        %s1092 = scalar_lea.vmem [#allocation19], %s1091
        %p1093 = pneg %p355
        %p1094 = pneg %p352
        %s1095 = sand.u32 %s53, 1
        %s1096 = scalar_lea.sflag [#allocation20], %s1095
        %s1097 = sand.u32 %s368, 1
        %s1098 = scalar_lea.vmem [#allocation21], %s1097
        %p1099 = pneg %p381
        %p1100 = pneg %p378
        %s1101 = sand.u32 %s53, 1
        %s1102 = scalar_lea.sflag [#allocation23], %s1101
        %s1103 = sand.u32 %s394, 1
        %s1104 = smul.addr %s1103, 64
        %s1105 = scalar_lea.vmem [#allocation22], %s1104
        %p1106 = pneg %p407
        %p1107 = pneg %p404
        %s1108 = sand.u32 %s53, 1
        %s1109 = scalar_lea.sflag [#allocation23], %s1108
        %s1110 = sand.u32 %s420, 1
        %s1111 = scalar_lea.vmem [#allocation24], %s1110
        %p1112 = pneg %p433
        %p1113 = pneg %p430
        %s1114 = sand.u32 %s53, 1
        %s1115 = scalar_lea.sflag [#allocation26], %s1114
        %s1116 = sand.u32 %s446, 1
        %s1117 = smul.addr %s1116, 1536
        %s1118 = scalar_lea.vmem [#allocation25], %s1117
        %p1119 = pneg %p459
        %p1120 = pneg %p456
        %s1121 = sand.u32 %s53, 1
        %s1122 = scalar_lea.sflag [#allocation26], %s1121
        %s1123 = sand.u32 %s472, 1
        %s1124 = smul.addr %s1123, 24
        %s1125 = scalar_lea.vmem [#allocation27], %s1124
        %p1126 = pneg %p485
        %p1127 = pneg %p482
        %p1128 = pneg %p511
        %p1129 = pneg %p508
        %p1130 = scmp.lt.s32.totalorder %s53, 1
        %s1131 = scalar_select %p1130, %s53, 1
        %s1132 = smul.addr %s1131, 24
        %s1133 = scalar_lea.vmem %s17, %s1132
        %p1134 = scmp.lt.s32.totalorder %s53, 1
        %s1135 = scalar_select %p1134, %s53, 1
        %s1136 = smul.addr %s1135, 24
        %s1137 = scalar_lea.vmem %s17, %s1136
        %v1138 = vld [vmem:[#allocation2] sm:$0xff]
        %v1139 = vld [vmem:[#allocation2 + $0x8] sm:$0xff]
        %v1140 = vld [vmem:[#allocation2 + $0x10] sm:$0xff]
        %v1141 = vld [vmem:[#allocation2 + $0x18] sm:$0xff]
        %v1142 = vld [vmem:[#allocation2 + $0x20] sm:$0xff]
        %v1143 = vld [vmem:[#allocation2 + $0x28] sm:$0xff]
        %v1144 = vld [vmem:[#allocation2 + $0x30] sm:$0xff]
        %v1145 = vld [vmem:[#allocation2 + $0x38] sm:$0xff]
        %v1146 = vld [vmem:[#allocation2 + $0x40] sm:$0xff]
        %v1147 = vld [vmem:[#allocation2 + $0x48] sm:$0xff]
        %v1148 = vld [vmem:[#allocation2 + $0x50] sm:$0xff]
        %v1149 = vld [vmem:[#allocation2 + $0x58] sm:$0xff]
        %v1150 = vld [vmem:[#allocation2 + $0x60] sm:$0xff]
        %v1151 = vld [vmem:[#allocation2 + $0x68] sm:$0xff]
        %v1152 = vld [vmem:[#allocation2 + $0x70] sm:$0xff]
        %v1153 = vld [vmem:[#allocation2 + $0x78] sm:$0xff]
        %v1154 = vld [vmem:[#allocation2 + $0x80] sm:$0xff]
        %v1155 = vld [vmem:[#allocation2 + $0x88] sm:$0xff]
        %v1156 = vld [vmem:[#allocation2 + $0x90] sm:$0xff]
        %v1157 = vld [vmem:[#allocation2 + $0x98] sm:$0xff]
        %v1158 = vld [vmem:[#allocation2 + $0xa0] sm:$0xff]
        %v1159 = vld [vmem:[#allocation2 + $0xa8] sm:$0xff]
        %v1160 = vld [vmem:[#allocation2 + $0xb0] sm:$0xff]
        %v1161 = vld [vmem:[#allocation2 + $0xb8] sm:$0xff]
        %v1162 = vld [vmem:[%s872] sm:$0xf]
        %v1163 = vld [vmem:[%s872 + $0x4] sm:$0xf]
        %v1164 = vld [vmem:[%s872 + $0x8] sm:$0xf]
        %v1165 = vld [vmem:[%s872 + $0xc] sm:$0xf]
        %v1166 = vld [vmem:[%s872 + $0x10] sm:$0xf]
        %v1167 = vld [vmem:[%s872 + $0x14] sm:$0xf]
        %v1168 = vld [vmem:[%s872 + $0x18] sm:$0xf]
        %v1169 = vld [vmem:[%s872 + $0x1c] sm:$0xf]
        %v1170 = vld [vmem:[%s872 + $0x20] sm:$0xf]
        %v1171 = vld [vmem:[%s872 + $0x24] sm:$0xf]
        %v1172 = vld [vmem:[%s872 + $0x28] sm:$0xf]
        %v1173 = vld [vmem:[%s872 + $0x2c] sm:$0xf]
        %v1174 = vld [vmem:[%s872 + $0x30] sm:$0xf]
        %v1175 = vld [vmem:[%s872 + $0x34] sm:$0xf]
        %v1176 = vld [vmem:[%s872 + $0x38] sm:$0xf]
        %v1177 = vld [vmem:[%s872 + $0x3c] sm:$0xf]
        %v1178 = vld [vmem:[%s872 + $0x40] sm:$0xf]
        %v1179 = vld [vmem:[%s872 + $0x44] sm:$0xf]
        %v1180 = vld [vmem:[%s872 + $0x48] sm:$0xf]
        %v1181 = vld [vmem:[%s872 + $0x4c] sm:$0xf]
        %v1182 = vld [vmem:[%s872 + $0x50] sm:$0xf]
        %v1183 = vld [vmem:[%s872 + $0x54] sm:$0xf]
        %v1184 = vld [vmem:[%s872 + $0x58] sm:$0xf]
        %v1185 = vld [vmem:[%s872 + $0x5c] sm:$0xf]
        %v1186 = vld [vmem:[%s872 + $0x60] sm:$0xf]
        %v1187 = vld [vmem:[%s872 + $0x64] sm:$0xf]
        %v1188 = vld [vmem:[%s872 + $0x68] sm:$0xf]
        %v1189 = vld [vmem:[%s872 + $0x6c] sm:$0xf]
        %v1190 = vld [vmem:[%s872 + $0x70] sm:$0xf]
        %v1191 = vld [vmem:[%s872 + $0x74] sm:$0xf]
        %v1192 = vld [vmem:[%s872 + $0x78] sm:$0xf]
        %v1193 = vld [vmem:[%s872 + $0x7c] sm:$0xf]
        %v1194 = vld [vmem:[%s872 + $0x80] sm:$0xf]
        %v1195 = vld [vmem:[%s872 + $0x84] sm:$0xf]
        %v1196 = vld [vmem:[%s872 + $0x88] sm:$0xf]
        %v1197 = vld [vmem:[%s872 + $0x8c] sm:$0xf]
        %v1198 = vld [vmem:[%s872 + $0x90] sm:$0xf]
        %v1199 = vld [vmem:[%s872 + $0x94] sm:$0xf]
        %v1200 = vld [vmem:[%s872 + $0x98] sm:$0xf]
        %v1201 = vld [vmem:[%s872 + $0x9c] sm:$0xf]
        %v1202 = vld [vmem:[%s872 + $0xa0] sm:$0xf]
        %v1203 = vld [vmem:[%s872 + $0xa4] sm:$0xf]
        %v1204 = vld [vmem:[%s872 + $0xa8] sm:$0xf]
        %v1205 = vld [vmem:[%s872 + $0xac] sm:$0xf]
        %v1206 = vld [vmem:[%s872 + $0xb0] sm:$0xf]
        %v1207 = vld [vmem:[%s872 + $0xb4] sm:$0xf]
        %v1208 = vld [vmem:[%s872 + $0xb8] sm:$0xf]
        %v1209 = vld [vmem:[%s872 + $0xbc] sm:$0xf]
        %v1210 = vld [vmem:[%s872 + $0xc0] sm:$0xf]
        %v1211 = vld [vmem:[%s872 + $0xc4] sm:$0xf]
        %v1212 = vld [vmem:[%s872 + $0xc8] sm:$0xf]
        %v1213 = vld [vmem:[%s872 + $0xcc] sm:$0xf]
        %v1214 = vld [vmem:[%s872 + $0xd0] sm:$0xf]
        %v1215 = vld [vmem:[%s872 + $0xd4] sm:$0xf]
        %v1216 = vld [vmem:[%s872 + $0xd8] sm:$0xf]
        %v1217 = vld [vmem:[%s872 + $0xdc] sm:$0xf]
        %v1218 = vld [vmem:[%s872 + $0xe0] sm:$0xf]
        %v1219 = vld [vmem:[%s872 + $0xe4] sm:$0xf]
        %v1220 = vld [vmem:[%s872 + $0xe8] sm:$0xf]
        %v1221 = vld [vmem:[%s872 + $0xec] sm:$0xf]
        %v1222 = vld [vmem:[%s872 + $0xf0] sm:$0xf]
        %v1223 = vld [vmem:[%s872 + $0xf4] sm:$0xf]
        %v1224 = vld [vmem:[%s872 + $0xf8] sm:$0xf]
        %v1225 = vld [vmem:[%s872 + $0xfc] sm:$0xf]
        %v1226 = vld [vmem:[%s872 + $0x100] sm:$0xf]
        %v1227 = vld [vmem:[%s872 + $0x104] sm:$0xf]
        %v1228 = vld [vmem:[%s872 + $0x108] sm:$0xf]
        %v1229 = vld [vmem:[%s872 + $0x10c] sm:$0xf]
        %v1230 = vld [vmem:[%s872 + $0x110] sm:$0xf]
        %v1231 = vld [vmem:[%s872 + $0x114] sm:$0xf]
        %v1232 = vld [vmem:[%s872 + $0x118] sm:$0xf]
        %v1233 = vld [vmem:[%s872 + $0x11c] sm:$0xf]
        %v1234 = vld [vmem:[%s872 + $0x120] sm:$0xf]
        %v1235 = vld [vmem:[%s872 + $0x124] sm:$0xf]
        %v1236 = vld [vmem:[%s872 + $0x128] sm:$0xf]
        %v1237 = vld [vmem:[%s872 + $0x12c] sm:$0xf]
        %v1238 = vld [vmem:[%s872 + $0x130] sm:$0xf]
        %v1239 = vld [vmem:[%s872 + $0x134] sm:$0xf]
        %v1240 = vld [vmem:[%s872 + $0x138] sm:$0xf]
        %v1241 = vld [vmem:[%s872 + $0x13c] sm:$0xf]
        %v1242 = vld [vmem:[%s872 + $0x140] sm:$0xf]
        %v1243 = vld [vmem:[%s872 + $0x144] sm:$0xf]
        %v1244 = vld [vmem:[%s872 + $0x148] sm:$0xf]
        %v1245 = vld [vmem:[%s872 + $0x14c] sm:$0xf]
        %v1246 = vld [vmem:[%s872 + $0x150] sm:$0xf]
        %v1247 = vld [vmem:[%s872 + $0x154] sm:$0xf]
        %v1248 = vld [vmem:[%s872 + $0x158] sm:$0xf]
        %v1249 = vld [vmem:[%s872 + $0x15c] sm:$0xf]
        %v1250 = vld [vmem:[%s872 + $0x160] sm:$0xf]
        %v1251 = vld [vmem:[%s872 + $0x164] sm:$0xf]
        %v1252 = vld [vmem:[%s872 + $0x168] sm:$0xf]
        %v1253 = vld [vmem:[%s872 + $0x16c] sm:$0xf]
        %v1254 = vld [vmem:[%s872 + $0x170] sm:$0xf]
        %v1255 = vld [vmem:[%s872 + $0x174] sm:$0xf]
        %v1256 = vld [vmem:[%s872 + $0x178] sm:$0xf]
        %v1257 = vld [vmem:[%s872 + $0x17c] sm:$0xf]
        %v1258 = vld [vmem:[%s872 + $0x180] sm:$0xf]
        %v1259 = vld [vmem:[%s872 + $0x184] sm:$0xf]
        %v1260 = vld [vmem:[%s872 + $0x188] sm:$0xf]
        %v1261 = vld [vmem:[%s872 + $0x18c] sm:$0xf]
        %v1262 = vld [vmem:[%s872 + $0x190] sm:$0xf]
        %v1263 = vld [vmem:[%s872 + $0x194] sm:$0xf]
        %v1264 = vld [vmem:[%s872 + $0x198] sm:$0xf]
        %v1265 = vld [vmem:[%s872 + $0x19c] sm:$0xf]
        %v1266 = vld [vmem:[%s872 + $0x1a0] sm:$0xf]
        %v1267 = vld [vmem:[%s872 + $0x1a4] sm:$0xf]
        %v1268 = vld [vmem:[%s872 + $0x1a8] sm:$0xf]
        %v1269 = vld [vmem:[%s872 + $0x1ac] sm:$0xf]
        %v1270 = vld [vmem:[%s872 + $0x1b0] sm:$0xf]
        %v1271 = vld [vmem:[%s872 + $0x1b4] sm:$0xf]
        %v1272 = vld [vmem:[%s872 + $0x1b8] sm:$0xf]
        %v1273 = vld [vmem:[%s872 + $0x1bc] sm:$0xf]
        %v1274 = vld [vmem:[%s872 + $0x1c0] sm:$0xf]
        %v1275 = vld [vmem:[%s872 + $0x1c4] sm:$0xf]
        %v1276 = vld [vmem:[%s872 + $0x1c8] sm:$0xf]
        %v1277 = vld [vmem:[%s872 + $0x1cc] sm:$0xf]
        %v1278 = vld [vmem:[%s872 + $0x1d0] sm:$0xf]
        %v1279 = vld [vmem:[%s872 + $0x1d4] sm:$0xf]
        %v1280 = vld [vmem:[%s872 + $0x1d8] sm:$0xf]
        %v1281 = vld [vmem:[%s872 + $0x1dc] sm:$0xf]
        %v1282 = vld [vmem:[%s872 + $0x1e0] sm:$0xf]
        %v1283 = vld [vmem:[%s872 + $0x1e4] sm:$0xf]
        %v1284 = vld [vmem:[%s872 + $0x1e8] sm:$0xf]
        %v1285 = vld [vmem:[%s872 + $0x1ec] sm:$0xf]
        %v1286 = vld [vmem:[%s872 + $0x1f0] sm:$0xf]
        %v1287 = vld [vmem:[%s872 + $0x1f4] sm:$0xf]
        %v1288 = vld [vmem:[%s872 + $0x1f8] sm:$0xf]
        %v1289 = vld [vmem:[%s872 + $0x1fc] sm:$0xf]
        %v1290 = vld [vmem:[%s872 + $0x200] sm:$0xf]
        %v1291 = vld [vmem:[%s872 + $0x204] sm:$0xf]
        %v1292 = vld [vmem:[%s872 + $0x208] sm:$0xf]
        %v1293 = vld [vmem:[%s872 + $0x20c] sm:$0xf]
        %v1294 = vld [vmem:[%s872 + $0x210] sm:$0xf]
        %v1295 = vld [vmem:[%s872 + $0x214] sm:$0xf]
        %v1296 = vld [vmem:[%s872 + $0x218] sm:$0xf]
        %v1297 = vld [vmem:[%s872 + $0x21c] sm:$0xf]
        %v1298 = vld [vmem:[%s872 + $0x220] sm:$0xf]
        %v1299 = vld [vmem:[%s872 + $0x224] sm:$0xf]
        %v1300 = vld [vmem:[%s872 + $0x228] sm:$0xf]
        %v1301 = vld [vmem:[%s872 + $0x22c] sm:$0xf]
        %v1302 = vld [vmem:[%s872 + $0x230] sm:$0xf]
        %v1303 = vld [vmem:[%s872 + $0x234] sm:$0xf]
        %v1304 = vld [vmem:[%s872 + $0x238] sm:$0xf]
        %v1305 = vld [vmem:[%s872 + $0x23c] sm:$0xf]
        %v1306 = vld [vmem:[%s872 + $0x240] sm:$0xf]
        %v1307 = vld [vmem:[%s872 + $0x244] sm:$0xf]
        %v1308 = vld [vmem:[%s872 + $0x248] sm:$0xf]
        %v1309 = vld [vmem:[%s872 + $0x24c] sm:$0xf]
        %v1310 = vld [vmem:[%s872 + $0x250] sm:$0xf]
        %v1311 = vld [vmem:[%s872 + $0x254] sm:$0xf]
        %v1312 = vld [vmem:[%s872 + $0x258] sm:$0xf]
        %v1313 = vld [vmem:[%s872 + $0x25c] sm:$0xf]
        %v1314 = vld [vmem:[%s872 + $0x260] sm:$0xf]
        %v1315 = vld [vmem:[%s872 + $0x264] sm:$0xf]
        %v1316 = vld [vmem:[%s872 + $0x268] sm:$0xf]
        %v1317 = vld [vmem:[%s872 + $0x26c] sm:$0xf]
        %v1318 = vld [vmem:[%s872 + $0x270] sm:$0xf]
        %v1319 = vld [vmem:[%s872 + $0x274] sm:$0xf]
        %v1320 = vld [vmem:[%s872 + $0x278] sm:$0xf]
        %v1321 = vld [vmem:[%s872 + $0x27c] sm:$0xf]
        %v1322 = vld [vmem:[%s872 + $0x280] sm:$0xf]
        %v1323 = vld [vmem:[%s872 + $0x284] sm:$0xf]
        %v1324 = vld [vmem:[%s872 + $0x288] sm:$0xf]
        %v1325 = vld [vmem:[%s872 + $0x28c] sm:$0xf]
        %v1326 = vld [vmem:[%s872 + $0x290] sm:$0xf]
        %v1327 = vld [vmem:[%s872 + $0x294] sm:$0xf]
        %v1328 = vld [vmem:[%s872 + $0x298] sm:$0xf]
        %v1329 = vld [vmem:[%s872 + $0x29c] sm:$0xf]
        %v1330 = vld [vmem:[%s872 + $0x2a0] sm:$0xf]
        %v1331 = vld [vmem:[%s872 + $0x2a4] sm:$0xf]
        %v1332 = vld [vmem:[%s872 + $0x2a8] sm:$0xf]
        %v1333 = vld [vmem:[%s872 + $0x2ac] sm:$0xf]
        %v1334 = vld [vmem:[%s872 + $0x2b0] sm:$0xf]
        %v1335 = vld [vmem:[%s872 + $0x2b4] sm:$0xf]
        %v1336 = vld [vmem:[%s872 + $0x2b8] sm:$0xf]
        %v1337 = vld [vmem:[%s872 + $0x2bc] sm:$0xf]
        %v1338 = vld [vmem:[%s872 + $0x2c0] sm:$0xf]
        %v1339 = vld [vmem:[%s872 + $0x2c4] sm:$0xf]
        %v1340 = vld [vmem:[%s872 + $0x2c8] sm:$0xf]
        %v1341 = vld [vmem:[%s872 + $0x2cc] sm:$0xf]
        %v1342 = vld [vmem:[%s872 + $0x2d0] sm:$0xf]
        %v1343 = vld [vmem:[%s872 + $0x2d4] sm:$0xf]
        %v1344 = vld [vmem:[%s872 + $0x2d8] sm:$0xf]
        %v1345 = vld [vmem:[%s872 + $0x2dc] sm:$0xf]
        %v1346 = vld [vmem:[%s872 + $0x2e0] sm:$0xf]
        %v1347 = vld [vmem:[%s872 + $0x2e4] sm:$0xf]
        %v1348 = vld [vmem:[%s872 + $0x2e8] sm:$0xf]
        %v1349 = vld [vmem:[%s872 + $0x2ec] sm:$0xf]
        %v1350 = vld [vmem:[%s872 + $0x2f0] sm:$0xf]
        %v1351 = vld [vmem:[%s872 + $0x2f4] sm:$0xf]
        %v1352 = vld [vmem:[%s872 + $0x2f8] sm:$0xf]
        %v1353 = vld [vmem:[%s872 + $0x2fc] sm:$0xf]
        %v1354 = vld [vmem:[%s872 + $0x300] sm:$0xf]
        %v1355 = vld [vmem:[%s872 + $0x304] sm:$0xf]
        %v1356 = vld [vmem:[%s872 + $0x308] sm:$0xf]
        %v1357 = vld [vmem:[%s872 + $0x30c] sm:$0xf]
        %v1358 = vld [vmem:[%s872 + $0x310] sm:$0xf]
        %v1359 = vld [vmem:[%s872 + $0x314] sm:$0xf]
        %v1360 = vld [vmem:[%s872 + $0x318] sm:$0xf]
        %v1361 = vld [vmem:[%s872 + $0x31c] sm:$0xf]
        %v1362 = vld [vmem:[%s872 + $0x320] sm:$0xf]
        %v1363 = vld [vmem:[%s872 + $0x324] sm:$0xf]
        %v1364 = vld [vmem:[%s872 + $0x328] sm:$0xf]
        %v1365 = vld [vmem:[%s872 + $0x32c] sm:$0xf]
        %v1366 = vld [vmem:[%s872 + $0x330] sm:$0xf]
        %v1367 = vld [vmem:[%s872 + $0x334] sm:$0xf]
        %v1368 = vld [vmem:[%s872 + $0x338] sm:$0xf]
        %v1369 = vld [vmem:[%s872 + $0x33c] sm:$0xf]
        %v1370 = vld [vmem:[%s872 + $0x340] sm:$0xf]
        %v1371 = vld [vmem:[%s872 + $0x344] sm:$0xf]
        %v1372 = vld [vmem:[%s872 + $0x348] sm:$0xf]
        %v1373 = vld [vmem:[%s872 + $0x34c] sm:$0xf]
        %v1374 = vld [vmem:[%s872 + $0x350] sm:$0xf]
        %v1375 = vld [vmem:[%s872 + $0x354] sm:$0xf]
        %v1376 = vld [vmem:[%s872 + $0x358] sm:$0xf]
        %v1377 = vld [vmem:[%s872 + $0x35c] sm:$0xf]
        %v1378 = vld [vmem:[%s872 + $0x360] sm:$0xf]
        %v1379 = vld [vmem:[%s872 + $0x364] sm:$0xf]
        %v1380 = vld [vmem:[%s872 + $0x368] sm:$0xf]
        %v1381 = vld [vmem:[%s872 + $0x36c] sm:$0xf]
        %v1382 = vld [vmem:[%s872 + $0x370] sm:$0xf]
        %v1383 = vld [vmem:[%s872 + $0x374] sm:$0xf]
        %v1384 = vld [vmem:[%s872 + $0x378] sm:$0xf]
        %v1385 = vld [vmem:[%s872 + $0x37c] sm:$0xf]
        %v1386 = vld [vmem:[%s872 + $0x380] sm:$0xf]
        %v1387 = vld [vmem:[%s872 + $0x384] sm:$0xf]
        %v1388 = vld [vmem:[%s872 + $0x388] sm:$0xf]
        %v1389 = vld [vmem:[%s872 + $0x38c] sm:$0xf]
        %v1390 = vld [vmem:[%s872 + $0x390] sm:$0xf]
        %v1391 = vld [vmem:[%s872 + $0x394] sm:$0xf]
        %v1392 = vld [vmem:[%s872 + $0x398] sm:$0xf]
        %v1393 = vld [vmem:[%s872 + $0x39c] sm:$0xf]
        %v1394 = vld [vmem:[%s872 + $0x3a0] sm:$0xf]
        %v1395 = vld [vmem:[%s872 + $0x3a4] sm:$0xf]
        %v1396 = vld [vmem:[%s872 + $0x3a8] sm:$0xf]
        %v1397 = vld [vmem:[%s872 + $0x3ac] sm:$0xf]
        %v1398 = vld [vmem:[%s872 + $0x3b0] sm:$0xf]
        %v1399 = vld [vmem:[%s872 + $0x3b4] sm:$0xf]
        %v1400 = vld [vmem:[%s872 + $0x3b8] sm:$0xf]
        %v1401 = vld [vmem:[%s872 + $0x3bc] sm:$0xf]
        %v1402 = vld [vmem:[%s872 + $0x3c0] sm:$0xf]
        %v1403 = vld [vmem:[%s872 + $0x3c4] sm:$0xf]
        %v1404 = vld [vmem:[%s872 + $0x3c8] sm:$0xf]
        %v1405 = vld [vmem:[%s872 + $0x3cc] sm:$0xf]
        %v1406 = vld [vmem:[%s872 + $0x3d0] sm:$0xf]
        %v1407 = vld [vmem:[%s872 + $0x3d4] sm:$0xf]
        %v1408 = vld [vmem:[%s872 + $0x3d8] sm:$0xf]
        %v1409 = vld [vmem:[%s872 + $0x3dc] sm:$0xf]
        %v1410 = vld [vmem:[%s872 + $0x3e0] sm:$0xf]
        %v1411 = vld [vmem:[%s872 + $0x3e4] sm:$0xf]
        %v1412 = vld [vmem:[%s872 + $0x3e8] sm:$0xf]
        %v1413 = vld [vmem:[%s872 + $0x3ec] sm:$0xf]
        %v1414 = vld [vmem:[%s872 + $0x3f0] sm:$0xf]
        %v1415 = vld [vmem:[%s872 + $0x3f4] sm:$0xf]
        %v1416 = vld [vmem:[%s872 + $0x3f8] sm:$0xf]
        %v1417 = vld [vmem:[%s872 + $0x3fc] sm:$0xf]
        %v1418 = vld [vmem:[%s872 + $0x400] sm:$0xf]
        %v1419 = vld [vmem:[%s872 + $0x404] sm:$0xf]
        %v1420 = vld [vmem:[%s872 + $0x408] sm:$0xf]
        %v1421 = vld [vmem:[%s872 + $0x40c] sm:$0xf]
        %v1422 = vld [vmem:[%s872 + $0x410] sm:$0xf]
        %v1423 = vld [vmem:[%s872 + $0x414] sm:$0xf]
        %v1424 = vld [vmem:[%s872 + $0x418] sm:$0xf]
        %v1425 = vld [vmem:[%s872 + $0x41c] sm:$0xf]
        %v1426 = vld [vmem:[%s872 + $0x420] sm:$0xf]
        %v1427 = vld [vmem:[%s872 + $0x424] sm:$0xf]
        %v1428 = vld [vmem:[%s872 + $0x428] sm:$0xf]
        %v1429 = vld [vmem:[%s872 + $0x42c] sm:$0xf]
        %v1430 = vld [vmem:[%s872 + $0x430] sm:$0xf]
        %v1431 = vld [vmem:[%s872 + $0x434] sm:$0xf]
        %v1432 = vld [vmem:[%s872 + $0x438] sm:$0xf]
        %v1433 = vld [vmem:[%s872 + $0x43c] sm:$0xf]
        %v1434 = vld [vmem:[%s872 + $0x440] sm:$0xf]
        %v1435 = vld [vmem:[%s872 + $0x444] sm:$0xf]
        %v1436 = vld [vmem:[%s872 + $0x448] sm:$0xf]
        %v1437 = vld [vmem:[%s872 + $0x44c] sm:$0xf]
        %v1438 = vld [vmem:[%s872 + $0x450] sm:$0xf]
        %v1439 = vld [vmem:[%s872 + $0x454] sm:$0xf]
        %v1440 = vld [vmem:[%s872 + $0x458] sm:$0xf]
        %v1441 = vld [vmem:[%s872 + $0x45c] sm:$0xf]
        %v1442 = vld [vmem:[%s872 + $0x460] sm:$0xf]
        %v1443 = vld [vmem:[%s872 + $0x464] sm:$0xf]
        %v1444 = vld [vmem:[%s872 + $0x468] sm:$0xf]
        %v1445 = vld [vmem:[%s872 + $0x46c] sm:$0xf]
        %v1446 = vld [vmem:[%s872 + $0x470] sm:$0xf]
        %v1447 = vld [vmem:[%s872 + $0x474] sm:$0xf]
        %v1448 = vld [vmem:[%s872 + $0x478] sm:$0xf]
        %v1449 = vld [vmem:[%s872 + $0x47c] sm:$0xf]
        %v1450 = vld [vmem:[%s872 + $0x480] sm:$0xf]
        %v1451 = vld [vmem:[%s872 + $0x484] sm:$0xf]
        %v1452 = vld [vmem:[%s872 + $0x488] sm:$0xf]
        %v1453 = vld [vmem:[%s872 + $0x48c] sm:$0xf]
        %v1454 = vld [vmem:[%s872 + $0x490] sm:$0xf]
        %v1455 = vld [vmem:[%s872 + $0x494] sm:$0xf]
        %v1456 = vld [vmem:[%s872 + $0x498] sm:$0xf]
        %v1457 = vld [vmem:[%s872 + $0x49c] sm:$0xf]
        %v1458 = vld [vmem:[%s872 + $0x4a0] sm:$0xf]
        %v1459 = vld [vmem:[%s872 + $0x4a4] sm:$0xf]
        %v1460 = vld [vmem:[%s872 + $0x4a8] sm:$0xf]
        %v1461 = vld [vmem:[%s872 + $0x4ac] sm:$0xf]
        %v1462 = vld [vmem:[%s872 + $0x4b0] sm:$0xf]
        %v1463 = vld [vmem:[%s872 + $0x4b4] sm:$0xf]
        %v1464 = vld [vmem:[%s872 + $0x4b8] sm:$0xf]
        %v1465 = vld [vmem:[%s872 + $0x4bc] sm:$0xf]
        %v1466 = vld [vmem:[%s872 + $0x4c0] sm:$0xf]
        %v1467 = vld [vmem:[%s872 + $0x4c4] sm:$0xf]
        %v1468 = vld [vmem:[%s872 + $0x4c8] sm:$0xf]
        %v1469 = vld [vmem:[%s872 + $0x4cc] sm:$0xf]
        %v1470 = vld [vmem:[%s872 + $0x4d0] sm:$0xf]
        %v1471 = vld [vmem:[%s872 + $0x4d4] sm:$0xf]
        %v1472 = vld [vmem:[%s872 + $0x4d8] sm:$0xf]
        %v1473 = vld [vmem:[%s872 + $0x4dc] sm:$0xf]
        %v1474 = vld [vmem:[%s872 + $0x4e0] sm:$0xf]
        %v1475 = vld [vmem:[%s872 + $0x4e4] sm:$0xf]
        %v1476 = vld [vmem:[%s872 + $0x4e8] sm:$0xf]
        %v1477 = vld [vmem:[%s872 + $0x4ec] sm:$0xf]
        %v1478 = vld [vmem:[%s872 + $0x4f0] sm:$0xf]
        %v1479 = vld [vmem:[%s872 + $0x4f4] sm:$0xf]
        %v1480 = vld [vmem:[%s872 + $0x4f8] sm:$0xf]
        %v1481 = vld [vmem:[%s872 + $0x4fc] sm:$0xf]
        %v1482 = vld [vmem:[%s872 + $0x500] sm:$0xf]
        %v1483 = vld [vmem:[%s872 + $0x504] sm:$0xf]
        %v1484 = vld [vmem:[%s872 + $0x508] sm:$0xf]
        %v1485 = vld [vmem:[%s872 + $0x50c] sm:$0xf]
        %v1486 = vld [vmem:[%s872 + $0x510] sm:$0xf]
        %v1487 = vld [vmem:[%s872 + $0x514] sm:$0xf]
        %v1488 = vld [vmem:[%s872 + $0x518] sm:$0xf]
        %v1489 = vld [vmem:[%s872 + $0x51c] sm:$0xf]
        %v1490 = vld [vmem:[%s872 + $0x520] sm:$0xf]
        %v1491 = vld [vmem:[%s872 + $0x524] sm:$0xf]
        %v1492 = vld [vmem:[%s872 + $0x528] sm:$0xf]
        %v1493 = vld [vmem:[%s872 + $0x52c] sm:$0xf]
        %v1494 = vld [vmem:[%s872 + $0x530] sm:$0xf]
        %v1495 = vld [vmem:[%s872 + $0x534] sm:$0xf]
        %v1496 = vld [vmem:[%s872 + $0x538] sm:$0xf]
        %v1497 = vld [vmem:[%s872 + $0x53c] sm:$0xf]
        %v1498 = vld [vmem:[%s872 + $0x540] sm:$0xf]
        %v1499 = vld [vmem:[%s872 + $0x544] sm:$0xf]
        %v1500 = vld [vmem:[%s872 + $0x548] sm:$0xf]
        %v1501 = vld [vmem:[%s872 + $0x54c] sm:$0xf]
        %v1502 = vld [vmem:[%s872 + $0x550] sm:$0xf]
        %v1503 = vld [vmem:[%s872 + $0x554] sm:$0xf]
        %v1504 = vld [vmem:[%s872 + $0x558] sm:$0xf]
        %v1505 = vld [vmem:[%s872 + $0x55c] sm:$0xf]
        %v1506 = vld [vmem:[%s872 + $0x560] sm:$0xf]
        %v1507 = vld [vmem:[%s872 + $0x564] sm:$0xf]
        %v1508 = vld [vmem:[%s872 + $0x568] sm:$0xf]
        %v1509 = vld [vmem:[%s872 + $0x56c] sm:$0xf]
        %v1510 = vld [vmem:[%s872 + $0x570] sm:$0xf]
        %v1511 = vld [vmem:[%s872 + $0x574] sm:$0xf]
        %v1512 = vld [vmem:[%s872 + $0x578] sm:$0xf]
        %v1513 = vld [vmem:[%s872 + $0x57c] sm:$0xf]
        %v1514 = vld [vmem:[%s872 + $0x580] sm:$0xf]
        %v1515 = vld [vmem:[%s872 + $0x584] sm:$0xf]
        %v1516 = vld [vmem:[%s872 + $0x588] sm:$0xf]
        %v1517 = vld [vmem:[%s872 + $0x58c] sm:$0xf]
        %v1518 = vld [vmem:[%s872 + $0x590] sm:$0xf]
        %v1519 = vld [vmem:[%s872 + $0x594] sm:$0xf]
        %v1520 = vld [vmem:[%s872 + $0x598] sm:$0xf]
        %v1521 = vld [vmem:[%s872 + $0x59c] sm:$0xf]
        %v1522 = vld [vmem:[%s872 + $0x5a0] sm:$0xf]
        %v1523 = vld [vmem:[%s872 + $0x5a4] sm:$0xf]
        %v1524 = vld [vmem:[%s872 + $0x5a8] sm:$0xf]
        %v1525 = vld [vmem:[%s872 + $0x5ac] sm:$0xf]
        %v1526 = vld [vmem:[%s872 + $0x5b0] sm:$0xf]
        %v1527 = vld [vmem:[%s872 + $0x5b4] sm:$0xf]
        %v1528 = vld [vmem:[%s872 + $0x5b8] sm:$0xf]
        %v1529 = vld [vmem:[%s872 + $0x5bc] sm:$0xf]
        %v1530 = vld [vmem:[%s872 + $0x5c0] sm:$0xf]
        %v1531 = vld [vmem:[%s872 + $0x5c4] sm:$0xf]
        %v1532 = vld [vmem:[%s872 + $0x5c8] sm:$0xf]
        %v1533 = vld [vmem:[%s872 + $0x5cc] sm:$0xf]
        %v1534 = vld [vmem:[%s872 + $0x5d0] sm:$0xf]
        %v1535 = vld [vmem:[%s872 + $0x5d4] sm:$0xf]
        %v1536 = vld [vmem:[%s872 + $0x5d8] sm:$0xf]
        %v1537 = vld [vmem:[%s872 + $0x5dc] sm:$0xf]
        %v1538 = vld [vmem:[%s872 + $0x5e0] sm:$0xf]
        %v1539 = vld [vmem:[%s872 + $0x5e4] sm:$0xf]
        %v1540 = vld [vmem:[%s872 + $0x5e8] sm:$0xf]
        %v1541 = vld [vmem:[%s872 + $0x5ec] sm:$0xf]
        %v1542 = vld [vmem:[%s872 + $0x5f0] sm:$0xf]
        %v1543 = vld [vmem:[%s872 + $0x5f4] sm:$0xf]
        %v1544 = vld [vmem:[%s872 + $0x5f8] sm:$0xf]
        %v1545 = vld [vmem:[%s872 + $0x5fc] sm:$0xf]
        %v1546 = vld [vmem:[%s881] sm:$0x1]
        %v1547 = vpack.c.bf16 %v1138, %v1138
        %v1548 = vpack.c.bf16 %v1139, %v1139
        %v1549 = vpack.c.bf16 %v1140, %v1140
        %v1550 = vpack.c.bf16 %v1141, %v1141
        %v1551 = vpack.c.bf16 %v1142, %v1142
        %v1552 = vpack.c.bf16 %v1143, %v1143
        %v1553 = vpack.c.bf16 %v1144, %v1144
        %v1554 = vpack.c.bf16 %v1145, %v1145
        %v1555 = vpack.c.bf16 %v1146, %v1146
        %v1556 = vpack.c.bf16 %v1147, %v1147
        %v1557 = vpack.c.bf16 %v1148, %v1148
        %v1558 = vpack.c.bf16 %v1149, %v1149
        %v1559 = vpack.c.bf16 %v1150, %v1150
        %v1560 = vpack.c.bf16 %v1151, %v1151
        %v1561 = vpack.c.bf16 %v1152, %v1152
        %v1562 = vpack.c.bf16 %v1153, %v1153
        %v1563 = vpack.c.bf16 %v1154, %v1154
        %v1564 = vpack.c.bf16 %v1155, %v1155
        %v1565 = vpack.c.bf16 %v1156, %v1156
        %v1566 = vpack.c.bf16 %v1157, %v1157
        %v1567 = vpack.c.bf16 %v1158, %v1158
        %v1568 = vpack.c.bf16 %v1159, %v1159
        %v1569 = vpack.c.bf16 %v1160, %v1160
        %v1570 = vpack.c.bf16 %v1161, %v1161
        %v1572 = vperm.slane %v1546, 0
        %v1958 = vunpack.c.l.b16 %v1162
        %v1959 = vunpack.c.l.b16 %v1163
        %v1960 = vunpack.c.l.b16 %v1164
        %v1961 = vunpack.c.l.b16 %v1165
        %v1962 = vunpack.c.l.b16 %v1166
        %v1963 = vunpack.c.l.b16 %v1167
        %v1964 = vunpack.c.l.b16 %v1168
        %v1965 = vunpack.c.l.b16 %v1169
        %v1966 = vunpack.c.l.b16 %v1170
        %v1967 = vunpack.c.l.b16 %v1171
        %v1968 = vunpack.c.l.b16 %v1172
        %v1969 = vunpack.c.l.b16 %v1173
        %v1970 = vunpack.c.l.b16 %v1174
        %v1971 = vunpack.c.l.b16 %v1175
        %v1972 = vunpack.c.l.b16 %v1176
        %v1973 = vunpack.c.l.b16 %v1177
        %v1974 = vunpack.c.l.b16 %v1178
        %v1975 = vunpack.c.l.b16 %v1179
        %v1976 = vunpack.c.l.b16 %v1180
        %v1977 = vunpack.c.l.b16 %v1181
        %v1978 = vunpack.c.l.b16 %v1182
        %v1979 = vunpack.c.l.b16 %v1183
        %v1980 = vunpack.c.l.b16 %v1184
        %v1981 = vunpack.c.l.b16 %v1185
        %v1982 = vunpack.c.l.b16 %v1186
        %v1983 = vunpack.c.l.b16 %v1187
        %v1984 = vunpack.c.l.b16 %v1188
        %v1985 = vunpack.c.l.b16 %v1189
        %v1986 = vunpack.c.l.b16 %v1190
        %v1987 = vunpack.c.l.b16 %v1191
        %v1988 = vunpack.c.l.b16 %v1192
        %v1989 = vunpack.c.l.b16 %v1193
        %v1990 = vunpack.c.l.b16 %v1194
        %v1991 = vunpack.c.l.b16 %v1195
        %v1992 = vunpack.c.l.b16 %v1196
        %v1993 = vunpack.c.l.b16 %v1197
        %v1994 = vunpack.c.l.b16 %v1198
        %v1995 = vunpack.c.l.b16 %v1199
        %v1996 = vunpack.c.l.b16 %v1200
        %v1997 = vunpack.c.l.b16 %v1201
        %v1998 = vunpack.c.l.b16 %v1202
        %v1999 = vunpack.c.l.b16 %v1203
        %v2000 = vunpack.c.l.b16 %v1204
        %v2001 = vunpack.c.l.b16 %v1205
        %v2002 = vunpack.c.l.b16 %v1206
        %v2003 = vunpack.c.l.b16 %v1207
        %v2004 = vunpack.c.l.b16 %v1208
        %v2005 = vunpack.c.l.b16 %v1209
        %v2006 = vunpack.c.l.b16 %v1210
        %v2007 = vunpack.c.l.b16 %v1211
        %v2008 = vunpack.c.l.b16 %v1212
        %v2009 = vunpack.c.l.b16 %v1213
        %v2010 = vunpack.c.l.b16 %v1214
        %v2011 = vunpack.c.l.b16 %v1215
        %v2012 = vunpack.c.l.b16 %v1216
        %v2013 = vunpack.c.l.b16 %v1217
        %v2014 = vunpack.c.l.b16 %v1218
        %v2015 = vunpack.c.l.b16 %v1219
        %v2016 = vunpack.c.l.b16 %v1220
        %v2017 = vunpack.c.l.b16 %v1221
        %v2018 = vunpack.c.l.b16 %v1222
        %v2019 = vunpack.c.l.b16 %v1223
        %v2020 = vunpack.c.l.b16 %v1224
        %v2021 = vunpack.c.l.b16 %v1225
        %v2022 = vunpack.c.l.b16 %v1226
        %v2023 = vunpack.c.l.b16 %v1227
        %v2024 = vunpack.c.l.b16 %v1228
        %v2025 = vunpack.c.l.b16 %v1229
        %v2026 = vunpack.c.l.b16 %v1230
        %v2027 = vunpack.c.l.b16 %v1231
        %v2028 = vunpack.c.l.b16 %v1232
        %v2029 = vunpack.c.l.b16 %v1233
        %v2030 = vunpack.c.l.b16 %v1234
        %v2031 = vunpack.c.l.b16 %v1235
        %v2032 = vunpack.c.l.b16 %v1236
        %v2033 = vunpack.c.l.b16 %v1237
        %v2034 = vunpack.c.l.b16 %v1238
        %v2035 = vunpack.c.l.b16 %v1239
        %v2036 = vunpack.c.l.b16 %v1240
        %v2037 = vunpack.c.l.b16 %v1241
        %v2038 = vunpack.c.l.b16 %v1242
        %v2039 = vunpack.c.l.b16 %v1243
        %v2040 = vunpack.c.l.b16 %v1244
        %v2041 = vunpack.c.l.b16 %v1245
        %v2042 = vunpack.c.l.b16 %v1246
        %v2043 = vunpack.c.l.b16 %v1247
        %v2044 = vunpack.c.l.b16 %v1248
        %v2045 = vunpack.c.l.b16 %v1249
        %v2046 = vunpack.c.l.b16 %v1250
        %v2047 = vunpack.c.l.b16 %v1251
        %v2048 = vunpack.c.l.b16 %v1252
        %v2049 = vunpack.c.l.b16 %v1253
        %v2050 = vunpack.c.l.b16 %v1254
        %v2051 = vunpack.c.l.b16 %v1255
        %v2052 = vunpack.c.l.b16 %v1256
        %v2053 = vunpack.c.l.b16 %v1257
        %v2054 = vunpack.c.l.b16 %v1258
        %v2055 = vunpack.c.l.b16 %v1259
        %v2056 = vunpack.c.l.b16 %v1260
        %v2057 = vunpack.c.l.b16 %v1261
        %v2058 = vunpack.c.l.b16 %v1262
        %v2059 = vunpack.c.l.b16 %v1263
        %v2060 = vunpack.c.l.b16 %v1264
        %v2061 = vunpack.c.l.b16 %v1265
        %v2062 = vunpack.c.l.b16 %v1266
        %v2063 = vunpack.c.l.b16 %v1267
        %v2064 = vunpack.c.l.b16 %v1268
        %v2065 = vunpack.c.l.b16 %v1269
        %v2066 = vunpack.c.l.b16 %v1270
        %v2067 = vunpack.c.l.b16 %v1271
        %v2068 = vunpack.c.l.b16 %v1272
        %v2069 = vunpack.c.l.b16 %v1273
        %v2070 = vunpack.c.l.b16 %v1274
        %v2071 = vunpack.c.l.b16 %v1275
        %v2072 = vunpack.c.l.b16 %v1276
        %v2073 = vunpack.c.l.b16 %v1277
        %v2074 = vunpack.c.l.b16 %v1278
        %v2075 = vunpack.c.l.b16 %v1279
        %v2076 = vunpack.c.l.b16 %v1280
        %v2077 = vunpack.c.l.b16 %v1281
        %v2078 = vunpack.c.l.b16 %v1282
        %v2079 = vunpack.c.l.b16 %v1283
        %v2080 = vunpack.c.l.b16 %v1284
        %v2081 = vunpack.c.l.b16 %v1285
        %v2082 = vunpack.c.l.b16 %v1286
        %v2083 = vunpack.c.l.b16 %v1287
        %v2084 = vunpack.c.l.b16 %v1288
        %v2085 = vunpack.c.l.b16 %v1289
        %v2086 = vunpack.c.l.b16 %v1290
        %v2087 = vunpack.c.l.b16 %v1291
        %v2088 = vunpack.c.l.b16 %v1292
        %v2089 = vunpack.c.l.b16 %v1293
        %v2090 = vunpack.c.l.b16 %v1294
        %v2091 = vunpack.c.l.b16 %v1295
        %v2092 = vunpack.c.l.b16 %v1296
        %v2093 = vunpack.c.l.b16 %v1297
        %v2094 = vunpack.c.l.b16 %v1298
        %v2095 = vunpack.c.l.b16 %v1299
        %v2096 = vunpack.c.l.b16 %v1300
        %v2097 = vunpack.c.l.b16 %v1301
        %v2098 = vunpack.c.l.b16 %v1302
        %v2099 = vunpack.c.l.b16 %v1303
        %v2100 = vunpack.c.l.b16 %v1304
        %v2101 = vunpack.c.l.b16 %v1305
        %v2102 = vunpack.c.l.b16 %v1306
        %v2103 = vunpack.c.l.b16 %v1307
        %v2104 = vunpack.c.l.b16 %v1308
        %v2105 = vunpack.c.l.b16 %v1309
        %v2106 = vunpack.c.l.b16 %v1310
        %v2107 = vunpack.c.l.b16 %v1311
        %v2108 = vunpack.c.l.b16 %v1312
        %v2109 = vunpack.c.l.b16 %v1313
        %v2110 = vunpack.c.l.b16 %v1314
        %v2111 = vunpack.c.l.b16 %v1315
        %v2112 = vunpack.c.l.b16 %v1316
        %v2113 = vunpack.c.l.b16 %v1317
        %v2114 = vunpack.c.l.b16 %v1318
        %v2115 = vunpack.c.l.b16 %v1319
        %v2116 = vunpack.c.l.b16 %v1320
        %v2117 = vunpack.c.l.b16 %v1321
        %v2118 = vunpack.c.l.b16 %v1322
        %v2119 = vunpack.c.l.b16 %v1323
        %v2120 = vunpack.c.l.b16 %v1324
        %v2121 = vunpack.c.l.b16 %v1325
        %v2122 = vunpack.c.l.b16 %v1326
        %v2123 = vunpack.c.l.b16 %v1327
        %v2124 = vunpack.c.l.b16 %v1328
        %v2125 = vunpack.c.l.b16 %v1329
        %v2126 = vunpack.c.l.b16 %v1330
        %v2127 = vunpack.c.l.b16 %v1331
        %v2128 = vunpack.c.l.b16 %v1332
        %v2129 = vunpack.c.l.b16 %v1333
        %v2130 = vunpack.c.l.b16 %v1334
        %v2131 = vunpack.c.l.b16 %v1335
        %v2132 = vunpack.c.l.b16 %v1336
        %v2133 = vunpack.c.l.b16 %v1337
        %v2134 = vunpack.c.l.b16 %v1338
        %v2135 = vunpack.c.l.b16 %v1339
        %v2136 = vunpack.c.l.b16 %v1340
        %v2137 = vunpack.c.l.b16 %v1341
        %v2138 = vunpack.c.l.b16 %v1342
        %v2139 = vunpack.c.l.b16 %v1343
        %v2140 = vunpack.c.l.b16 %v1344
        %v2141 = vunpack.c.l.b16 %v1345
        %v2142 = vunpack.c.l.b16 %v1346
        %v2143 = vunpack.c.l.b16 %v1347
        %v2144 = vunpack.c.l.b16 %v1348
        %v2145 = vunpack.c.l.b16 %v1349
        %v2146 = vunpack.c.l.b16 %v1350
        %v2147 = vunpack.c.l.b16 %v1351
        %v2148 = vunpack.c.l.b16 %v1352
        %v2149 = vunpack.c.l.b16 %v1353
        %v2150 = vunpack.c.l.b16 %v1354
        %v2151 = vunpack.c.l.b16 %v1355
        %v2152 = vunpack.c.l.b16 %v1356
        %v2153 = vunpack.c.l.b16 %v1357
        %v2154 = vunpack.c.l.b16 %v1358
        %v2155 = vunpack.c.l.b16 %v1359
        %v2156 = vunpack.c.l.b16 %v1360
        %v2157 = vunpack.c.l.b16 %v1361
        %v2158 = vunpack.c.l.b16 %v1362
        %v2159 = vunpack.c.l.b16 %v1363
        %v2160 = vunpack.c.l.b16 %v1364
        %v2161 = vunpack.c.l.b16 %v1365
        %v2162 = vunpack.c.l.b16 %v1366
        %v2163 = vunpack.c.l.b16 %v1367
        %v2164 = vunpack.c.l.b16 %v1368
        %v2165 = vunpack.c.l.b16 %v1369
        %v2166 = vunpack.c.l.b16 %v1370
        %v2167 = vunpack.c.l.b16 %v1371
        %v2168 = vunpack.c.l.b16 %v1372
        %v2169 = vunpack.c.l.b16 %v1373
        %v2170 = vunpack.c.l.b16 %v1374
        %v2171 = vunpack.c.l.b16 %v1375
        %v2172 = vunpack.c.l.b16 %v1376
        %v2173 = vunpack.c.l.b16 %v1377
        %v2174 = vunpack.c.l.b16 %v1378
        %v2175 = vunpack.c.l.b16 %v1379
        %v2176 = vunpack.c.l.b16 %v1380
        %v2177 = vunpack.c.l.b16 %v1381
        %v2178 = vunpack.c.l.b16 %v1382
        %v2179 = vunpack.c.l.b16 %v1383
        %v2180 = vunpack.c.l.b16 %v1384
        %v2181 = vunpack.c.l.b16 %v1385
        %v2182 = vunpack.c.l.b16 %v1386
        %v2183 = vunpack.c.l.b16 %v1387
        %v2184 = vunpack.c.l.b16 %v1388
        %v2185 = vunpack.c.l.b16 %v1389
        %v2186 = vunpack.c.l.b16 %v1390
        %v2187 = vunpack.c.l.b16 %v1391
        %v2188 = vunpack.c.l.b16 %v1392
        %v2189 = vunpack.c.l.b16 %v1393
        %v2190 = vunpack.c.l.b16 %v1394
        %v2191 = vunpack.c.l.b16 %v1395
        %v2192 = vunpack.c.l.b16 %v1396
        %v2193 = vunpack.c.l.b16 %v1397
        %v2194 = vunpack.c.l.b16 %v1398
        %v2195 = vunpack.c.l.b16 %v1399
        %v2196 = vunpack.c.l.b16 %v1400
        %v2197 = vunpack.c.l.b16 %v1401
        %v2198 = vunpack.c.l.b16 %v1402
        %v2199 = vunpack.c.l.b16 %v1403
        %v2200 = vunpack.c.l.b16 %v1404
        %v2201 = vunpack.c.l.b16 %v1405
        %v2202 = vunpack.c.l.b16 %v1406
        %v2203 = vunpack.c.l.b16 %v1407
        %v2204 = vunpack.c.l.b16 %v1408
        %v2205 = vunpack.c.l.b16 %v1409
        %v2206 = vunpack.c.l.b16 %v1410
        %v2207 = vunpack.c.l.b16 %v1411
        %v2208 = vunpack.c.l.b16 %v1412
        %v2209 = vunpack.c.l.b16 %v1413
        %v2210 = vunpack.c.l.b16 %v1414
        %v2211 = vunpack.c.l.b16 %v1415
        %v2212 = vunpack.c.l.b16 %v1416
        %v2213 = vunpack.c.l.b16 %v1417
        %v2214 = vunpack.c.l.b16 %v1418
        %v2215 = vunpack.c.l.b16 %v1419
        %v2216 = vunpack.c.l.b16 %v1420
        %v2217 = vunpack.c.l.b16 %v1421
        %v2218 = vunpack.c.l.b16 %v1422
        %v2219 = vunpack.c.l.b16 %v1423
        %v2220 = vunpack.c.l.b16 %v1424
        %v2221 = vunpack.c.l.b16 %v1425
        %v2222 = vunpack.c.l.b16 %v1426
        %v2223 = vunpack.c.l.b16 %v1427
        %v2224 = vunpack.c.l.b16 %v1428
        %v2225 = vunpack.c.l.b16 %v1429
        %v2226 = vunpack.c.l.b16 %v1430
        %v2227 = vunpack.c.l.b16 %v1431
        %v2228 = vunpack.c.l.b16 %v1432
        %v2229 = vunpack.c.l.b16 %v1433
        %v2230 = vunpack.c.l.b16 %v1434
        %v2231 = vunpack.c.l.b16 %v1435
        %v2232 = vunpack.c.l.b16 %v1436
        %v2233 = vunpack.c.l.b16 %v1437
        %v2234 = vunpack.c.l.b16 %v1438
        %v2235 = vunpack.c.l.b16 %v1439
        %v2236 = vunpack.c.l.b16 %v1440
        %v2237 = vunpack.c.l.b16 %v1441
        %v2238 = vunpack.c.l.b16 %v1442
        %v2239 = vunpack.c.l.b16 %v1443
        %v2240 = vunpack.c.l.b16 %v1444
        %v2241 = vunpack.c.l.b16 %v1445
        %v2242 = vunpack.c.l.b16 %v1446
        %v2243 = vunpack.c.l.b16 %v1447
        %v2244 = vunpack.c.l.b16 %v1448
        %v2245 = vunpack.c.l.b16 %v1449
        %v2246 = vunpack.c.l.b16 %v1450
        %v2247 = vunpack.c.l.b16 %v1451
        %v2248 = vunpack.c.l.b16 %v1452
        %v2249 = vunpack.c.l.b16 %v1453
        %v2250 = vunpack.c.l.b16 %v1454
        %v2251 = vunpack.c.l.b16 %v1455
        %v2252 = vunpack.c.l.b16 %v1456
        %v2253 = vunpack.c.l.b16 %v1457
        %v2254 = vunpack.c.l.b16 %v1458
        %v2255 = vunpack.c.l.b16 %v1459
        %v2256 = vunpack.c.l.b16 %v1460
        %v2257 = vunpack.c.l.b16 %v1461
        %v2258 = vunpack.c.l.b16 %v1462
        %v2259 = vunpack.c.l.b16 %v1463
        %v2260 = vunpack.c.l.b16 %v1464
        %v2261 = vunpack.c.l.b16 %v1465
        %v2262 = vunpack.c.l.b16 %v1466
        %v2263 = vunpack.c.l.b16 %v1467
        %v2264 = vunpack.c.l.b16 %v1468
        %v2265 = vunpack.c.l.b16 %v1469
        %v2266 = vunpack.c.l.b16 %v1470
        %v2267 = vunpack.c.l.b16 %v1471
        %v2268 = vunpack.c.l.b16 %v1472
        %v2269 = vunpack.c.l.b16 %v1473
        %v2270 = vunpack.c.l.b16 %v1474
        %v2271 = vunpack.c.l.b16 %v1475
        %v2272 = vunpack.c.l.b16 %v1476
        %v2273 = vunpack.c.l.b16 %v1477
        %v2274 = vunpack.c.l.b16 %v1478
        %v2275 = vunpack.c.l.b16 %v1479
        %v2276 = vunpack.c.l.b16 %v1480
        %v2277 = vunpack.c.l.b16 %v1481
        %v2278 = vunpack.c.l.b16 %v1482
        %v2279 = vunpack.c.l.b16 %v1483
        %v2280 = vunpack.c.l.b16 %v1484
        %v2281 = vunpack.c.l.b16 %v1485
        %v2282 = vunpack.c.l.b16 %v1486
        %v2283 = vunpack.c.l.b16 %v1487
        %v2284 = vunpack.c.l.b16 %v1488
        %v2285 = vunpack.c.l.b16 %v1489
        %v2286 = vunpack.c.l.b16 %v1490
        %v2287 = vunpack.c.l.b16 %v1491
        %v2288 = vunpack.c.l.b16 %v1492
        %v2289 = vunpack.c.l.b16 %v1493
        %v2290 = vunpack.c.l.b16 %v1494
        %v2291 = vunpack.c.l.b16 %v1495
        %v2292 = vunpack.c.l.b16 %v1496
        %v2293 = vunpack.c.l.b16 %v1497
        %v2294 = vunpack.c.l.b16 %v1498
        %v2295 = vunpack.c.l.b16 %v1499
        %v2296 = vunpack.c.l.b16 %v1500
        %v2297 = vunpack.c.l.b16 %v1501
        %v2298 = vunpack.c.l.b16 %v1502
        %v2299 = vunpack.c.l.b16 %v1503
        %v2300 = vunpack.c.l.b16 %v1504
        %v2301 = vunpack.c.l.b16 %v1505
        %v2302 = vunpack.c.l.b16 %v1506
        %v2303 = vunpack.c.l.b16 %v1507
        %v2304 = vunpack.c.l.b16 %v1508
        %v2305 = vunpack.c.l.b16 %v1509
        %v2306 = vunpack.c.l.b16 %v1510
        %v2307 = vunpack.c.l.b16 %v1511
        %v2308 = vunpack.c.l.b16 %v1512
        %v2309 = vunpack.c.l.b16 %v1513
        %v2310 = vunpack.c.l.b16 %v1514
        %v2311 = vunpack.c.l.b16 %v1515
        %v2312 = vunpack.c.l.b16 %v1516
        %v2313 = vunpack.c.l.b16 %v1517
        %v2314 = vunpack.c.l.b16 %v1518
        %v2315 = vunpack.c.l.b16 %v1519
        %v2316 = vunpack.c.l.b16 %v1520
        %v2317 = vunpack.c.l.b16 %v1521
        %v2318 = vunpack.c.l.b16 %v1522
        %v2319 = vunpack.c.l.b16 %v1523
        %v2320 = vunpack.c.l.b16 %v1524
        %v2321 = vunpack.c.l.b16 %v1525
        %v2322 = vunpack.c.l.b16 %v1526
        %v2323 = vunpack.c.l.b16 %v1527
        %v2324 = vunpack.c.l.b16 %v1528
        %v2325 = vunpack.c.l.b16 %v1529
        %v2326 = vunpack.c.l.b16 %v1530
        %v2327 = vunpack.c.l.b16 %v1531
        %v2328 = vunpack.c.l.b16 %v1532
        %v2329 = vunpack.c.l.b16 %v1533
        %v2330 = vunpack.c.l.b16 %v1534
        %v2331 = vunpack.c.l.b16 %v1535
        %v2332 = vunpack.c.l.b16 %v1536
        %v2333 = vunpack.c.l.b16 %v1537
        %v2334 = vunpack.c.l.b16 %v1538
        %v2335 = vunpack.c.l.b16 %v1539
        %v2336 = vunpack.c.l.b16 %v1540
        %v2337 = vunpack.c.l.b16 %v1541
        %v2338 = vunpack.c.l.b16 %v1542
        %v2339 = vunpack.c.l.b16 %v1543
        %v2340 = vunpack.c.l.b16 %v1544
        %v2341 = vunpack.c.l.b16 %v1545
        %v2342 = vpack.c.b16 %v1959, %v1958
        %v2343 = vpack.c.b16 %v1961, %v1960
        %v2344 = vpack.c.b16 %v1963, %v1962
        %v2345 = vpack.c.b16 %v1965, %v1964
        %v2346 = vpack.c.b16 %v1967, %v1966
        %v2347 = vpack.c.b16 %v1969, %v1968
        %v2348 = vpack.c.b16 %v1971, %v1970
        %v2349 = vpack.c.b16 %v1973, %v1972
        %v2350 = vpack.c.b16 %v1975, %v1974
        %v2351 = vpack.c.b16 %v1977, %v1976
        %v2352 = vpack.c.b16 %v1979, %v1978
        %v2353 = vpack.c.b16 %v1981, %v1980
        %v2354 = vpack.c.b16 %v1983, %v1982
        %v2355 = vpack.c.b16 %v1985, %v1984
        %v2356 = vpack.c.b16 %v1987, %v1986
        %v2357 = vpack.c.b16 %v1989, %v1988
        %v2358 = vpack.c.b16 %v1991, %v1990
        %v2359 = vpack.c.b16 %v1993, %v1992
        %v2360 = vpack.c.b16 %v1995, %v1994
        %v2361 = vpack.c.b16 %v1997, %v1996
        %v2362 = vpack.c.b16 %v1999, %v1998
        %v2363 = vpack.c.b16 %v2001, %v2000
        %v2364 = vpack.c.b16 %v2003, %v2002
        %v2365 = vpack.c.b16 %v2005, %v2004
        %v2366 = vpack.c.b16 %v2007, %v2006
        %v2367 = vpack.c.b16 %v2009, %v2008
        %v2368 = vpack.c.b16 %v2011, %v2010
        %v2369 = vpack.c.b16 %v2013, %v2012
        %v2370 = vpack.c.b16 %v2015, %v2014
        %v2371 = vpack.c.b16 %v2017, %v2016
        %v2372 = vpack.c.b16 %v2019, %v2018
        %v2373 = vpack.c.b16 %v2021, %v2020
        %v2374 = vpack.c.b16 %v2023, %v2022
        %v2375 = vpack.c.b16 %v2025, %v2024
        %v2376 = vpack.c.b16 %v2027, %v2026
        %v2377 = vpack.c.b16 %v2029, %v2028
        %v2378 = vpack.c.b16 %v2031, %v2030
        %v2379 = vpack.c.b16 %v2033, %v2032
        %v2380 = vpack.c.b16 %v2035, %v2034
        %v2381 = vpack.c.b16 %v2037, %v2036
        %v2382 = vpack.c.b16 %v2039, %v2038
        %v2383 = vpack.c.b16 %v2041, %v2040
        %v2384 = vpack.c.b16 %v2043, %v2042
        %v2385 = vpack.c.b16 %v2045, %v2044
        %v2386 = vpack.c.b16 %v2047, %v2046
        %v2387 = vpack.c.b16 %v2049, %v2048
        %v2388 = vpack.c.b16 %v2051, %v2050
        %v2389 = vpack.c.b16 %v2053, %v2052
        %v2390 = vpack.c.b16 %v2055, %v2054
        %v2391 = vpack.c.b16 %v2057, %v2056
        %v2392 = vpack.c.b16 %v2059, %v2058
        %v2393 = vpack.c.b16 %v2061, %v2060
        %v2394 = vpack.c.b16 %v2063, %v2062
        %v2395 = vpack.c.b16 %v2065, %v2064
        %v2396 = vpack.c.b16 %v2067, %v2066
        %v2397 = vpack.c.b16 %v2069, %v2068
        %v2398 = vpack.c.b16 %v2071, %v2070
        %v2399 = vpack.c.b16 %v2073, %v2072
        %v2400 = vpack.c.b16 %v2075, %v2074
        %v2401 = vpack.c.b16 %v2077, %v2076
        %v2402 = vpack.c.b16 %v2079, %v2078
        %v2403 = vpack.c.b16 %v2081, %v2080
        %v2404 = vpack.c.b16 %v2083, %v2082
        %v2405 = vpack.c.b16 %v2085, %v2084
        %v2406 = vpack.c.b16 %v2087, %v2086
        %v2407 = vpack.c.b16 %v2089, %v2088
        %v2408 = vpack.c.b16 %v2091, %v2090
        %v2409 = vpack.c.b16 %v2093, %v2092
        %v2410 = vpack.c.b16 %v2095, %v2094
        %v2411 = vpack.c.b16 %v2097, %v2096
        %v2412 = vpack.c.b16 %v2099, %v2098
        %v2413 = vpack.c.b16 %v2101, %v2100
        %v2414 = vpack.c.b16 %v2103, %v2102
        %v2415 = vpack.c.b16 %v2105, %v2104
        %v2416 = vpack.c.b16 %v2107, %v2106
        %v2417 = vpack.c.b16 %v2109, %v2108
        %v2418 = vpack.c.b16 %v2111, %v2110
        %v2419 = vpack.c.b16 %v2113, %v2112
        %v2420 = vpack.c.b16 %v2115, %v2114
        %v2421 = vpack.c.b16 %v2117, %v2116
        %v2422 = vpack.c.b16 %v2119, %v2118
        %v2423 = vpack.c.b16 %v2121, %v2120
        %v2424 = vpack.c.b16 %v2123, %v2122
        %v2425 = vpack.c.b16 %v2125, %v2124
        %v2426 = vpack.c.b16 %v2127, %v2126
        %v2427 = vpack.c.b16 %v2129, %v2128
        %v2428 = vpack.c.b16 %v2131, %v2130
        %v2429 = vpack.c.b16 %v2133, %v2132
        %v2430 = vpack.c.b16 %v2135, %v2134
        %v2431 = vpack.c.b16 %v2137, %v2136
        %v2432 = vpack.c.b16 %v2139, %v2138
        %v2433 = vpack.c.b16 %v2141, %v2140
        %v2434 = vpack.c.b16 %v2143, %v2142
        %v2435 = vpack.c.b16 %v2145, %v2144
        %v2436 = vpack.c.b16 %v2147, %v2146
        %v2437 = vpack.c.b16 %v2149, %v2148
        %v2438 = vpack.c.b16 %v2151, %v2150
        %v2439 = vpack.c.b16 %v2153, %v2152
        %v2440 = vpack.c.b16 %v2155, %v2154
        %v2441 = vpack.c.b16 %v2157, %v2156
        %v2442 = vpack.c.b16 %v2159, %v2158
        %v2443 = vpack.c.b16 %v2161, %v2160
        %v2444 = vpack.c.b16 %v2163, %v2162
        %v2445 = vpack.c.b16 %v2165, %v2164
        %v2446 = vpack.c.b16 %v2167, %v2166
        %v2447 = vpack.c.b16 %v2169, %v2168
        %v2448 = vpack.c.b16 %v2171, %v2170
        %v2449 = vpack.c.b16 %v2173, %v2172
        %v2450 = vpack.c.b16 %v2175, %v2174
        %v2451 = vpack.c.b16 %v2177, %v2176
        %v2452 = vpack.c.b16 %v2179, %v2178
        %v2453 = vpack.c.b16 %v2181, %v2180
        %v2454 = vpack.c.b16 %v2183, %v2182
        %v2455 = vpack.c.b16 %v2185, %v2184
        %v2456 = vpack.c.b16 %v2187, %v2186
        %v2457 = vpack.c.b16 %v2189, %v2188
        %v2458 = vpack.c.b16 %v2191, %v2190
        %v2459 = vpack.c.b16 %v2193, %v2192
        %v2460 = vpack.c.b16 %v2195, %v2194
        %v2461 = vpack.c.b16 %v2197, %v2196
        %v2462 = vpack.c.b16 %v2199, %v2198
        %v2463 = vpack.c.b16 %v2201, %v2200
        %v2464 = vpack.c.b16 %v2203, %v2202
        %v2465 = vpack.c.b16 %v2205, %v2204
        %v2466 = vpack.c.b16 %v2207, %v2206
        %v2467 = vpack.c.b16 %v2209, %v2208
        %v2468 = vpack.c.b16 %v2211, %v2210
        %v2469 = vpack.c.b16 %v2213, %v2212
        %v2470 = vpack.c.b16 %v2215, %v2214
        %v2471 = vpack.c.b16 %v2217, %v2216
        %v2472 = vpack.c.b16 %v2219, %v2218
        %v2473 = vpack.c.b16 %v2221, %v2220
        %v2474 = vpack.c.b16 %v2223, %v2222
        %v2475 = vpack.c.b16 %v2225, %v2224
        %v2476 = vpack.c.b16 %v2227, %v2226
        %v2477 = vpack.c.b16 %v2229, %v2228
        %v2478 = vpack.c.b16 %v2231, %v2230
        %v2479 = vpack.c.b16 %v2233, %v2232
        %v2480 = vpack.c.b16 %v2235, %v2234
        %v2481 = vpack.c.b16 %v2237, %v2236
        %v2482 = vpack.c.b16 %v2239, %v2238
        %v2483 = vpack.c.b16 %v2241, %v2240
        %v2484 = vpack.c.b16 %v2243, %v2242
        %v2485 = vpack.c.b16 %v2245, %v2244
        %v2486 = vpack.c.b16 %v2247, %v2246
        %v2487 = vpack.c.b16 %v2249, %v2248
        %v2488 = vpack.c.b16 %v2251, %v2250
        %v2489 = vpack.c.b16 %v2253, %v2252
        %v2490 = vpack.c.b16 %v2255, %v2254
        %v2491 = vpack.c.b16 %v2257, %v2256
        %v2492 = vpack.c.b16 %v2259, %v2258
        %v2493 = vpack.c.b16 %v2261, %v2260
        %v2494 = vpack.c.b16 %v2263, %v2262
        %v2495 = vpack.c.b16 %v2265, %v2264
        %v2496 = vpack.c.b16 %v2267, %v2266
        %v2497 = vpack.c.b16 %v2269, %v2268
        %v2498 = vpack.c.b16 %v2271, %v2270
        %v2499 = vpack.c.b16 %v2273, %v2272
        %v2500 = vpack.c.b16 %v2275, %v2274
        %v2501 = vpack.c.b16 %v2277, %v2276
        %v2502 = vpack.c.b16 %v2279, %v2278
        %v2503 = vpack.c.b16 %v2281, %v2280
        %v2504 = vpack.c.b16 %v2283, %v2282
        %v2505 = vpack.c.b16 %v2285, %v2284
        %v2506 = vpack.c.b16 %v2287, %v2286
        %v2507 = vpack.c.b16 %v2289, %v2288
        %v2508 = vpack.c.b16 %v2291, %v2290
        %v2509 = vpack.c.b16 %v2293, %v2292
        %v2510 = vpack.c.b16 %v2295, %v2294
        %v2511 = vpack.c.b16 %v2297, %v2296
        %v2512 = vpack.c.b16 %v2299, %v2298
        %v2513 = vpack.c.b16 %v2301, %v2300
        %v2514 = vpack.c.b16 %v2303, %v2302
        %v2515 = vpack.c.b16 %v2305, %v2304
        %v2516 = vpack.c.b16 %v2307, %v2306
        %v2517 = vpack.c.b16 %v2309, %v2308
        %v2518 = vpack.c.b16 %v2311, %v2310
        %v2519 = vpack.c.b16 %v2313, %v2312
        %v2520 = vpack.c.b16 %v2315, %v2314
        %v2521 = vpack.c.b16 %v2317, %v2316
        %v2522 = vpack.c.b16 %v2319, %v2318
        %v2523 = vpack.c.b16 %v2321, %v2320
        %v2524 = vpack.c.b16 %v2323, %v2322
        %v2525 = vpack.c.b16 %v2325, %v2324
        %v2526 = vpack.c.b16 %v2327, %v2326
        %v2527 = vpack.c.b16 %v2329, %v2328
        %v2528 = vpack.c.b16 %v2331, %v2330
        %v2529 = vpack.c.b16 %v2333, %v2332
        %v2530 = vpack.c.b16 %v2335, %v2334
        %v2531 = vpack.c.b16 %v2337, %v2336
        %v2532 = vpack.c.b16 %v2339, %v2338
        %v2533 = vpack.c.b16 %v2341, %v2340
        %2726 = vmatpush.bf16.msra.mxu0 %v2349
        %2727 = vmatpush.bf16.msra.mxu0 %v2348
        %2728 = vmatpush.bf16.msra.mxu0 %v2347
        %2729 = vmatpush.bf16.msra.mxu0 %v2346
        %2730 = vmatpush.bf16.msra.mxu0 %v2345
        %2731 = vmatpush.bf16.msra.mxu0 %v2344
        %2732 = vmatpush.bf16.msra.mxu0 %v2343
        %2733 = vmatpush.bf16.msra.mxu0 %v2342
        %2734 = vmatmul.bf16.gmra.mxu0 %v1547
        %v2735 = vpop.f32.mrf.mxu0
        %v2736 = vadd.f32 %v1572, %v2735
        %v2737 = vpop.f32.mrf.mxu0
        %2738 = vdwg.mxu0
        %2739 = vmatpush.bf16.msra.mxu0 %v2357
        %2740 = vmatpush.bf16.msra.mxu0 %v2356
        %2741 = vmatpush.bf16.msra.mxu0 %v2355
        %2742 = vmatpush.bf16.msra.mxu0 %v2354
        %2743 = vmatpush.bf16.msra.mxu0 %v2353
        %2744 = vmatpush.bf16.msra.mxu0 %v2352
        %2745 = vmatpush.bf16.msra.mxu0 %v2351
        %2746 = vmatpush.bf16.msra.mxu0 %v2350
        %2747 = vmatmul.bf16.gmra.mxu0 %v1548
        %v2748 = vpop.f32.mrf.mxu0
        %v2749 = vadd.f32 %v2736, %v2748
        %v2750 = vpop.f32.mrf.mxu0
        %2751 = vdwg.mxu0
        %2752 = vmatpush.bf16.msra.mxu0 %v2365
        %2753 = vmatpush.bf16.msra.mxu0 %v2364
        %2754 = vmatpush.bf16.msra.mxu0 %v2363
        %2755 = vmatpush.bf16.msra.mxu0 %v2362
        %2756 = vmatpush.bf16.msra.mxu0 %v2361
        %2757 = vmatpush.bf16.msra.mxu0 %v2360
        %2758 = vmatpush.bf16.msra.mxu0 %v2359
        %2759 = vmatpush.bf16.msra.mxu0 %v2358
        %2760 = vmatmul.bf16.gmra.mxu0 %v1549
        %v2761 = vpop.f32.mrf.mxu0
        %v2762 = vadd.f32 %v2749, %v2761
        %v2763 = vpop.f32.mrf.mxu0
        %2764 = vdwg.mxu0
        %2765 = vmatpush.bf16.msra.mxu0 %v2373
        %2766 = vmatpush.bf16.msra.mxu0 %v2372
        %2767 = vmatpush.bf16.msra.mxu0 %v2371
        %2768 = vmatpush.bf16.msra.mxu0 %v2370
        %2769 = vmatpush.bf16.msra.mxu0 %v2369
        %2770 = vmatpush.bf16.msra.mxu0 %v2368
        %2771 = vmatpush.bf16.msra.mxu0 %v2367
        %2772 = vmatpush.bf16.msra.mxu0 %v2366
        %2773 = vmatmul.bf16.gmra.mxu0 %v1550
        %v2774 = vpop.f32.mrf.mxu0
        %v2775 = vadd.f32 %v2762, %v2774
        %v2776 = vpop.f32.mrf.mxu0
        %2777 = vdwg.mxu0
        %2778 = vmatpush.bf16.msra.mxu0 %v2381
        %2779 = vmatpush.bf16.msra.mxu0 %v2380
        %2780 = vmatpush.bf16.msra.mxu0 %v2379
        %2781 = vmatpush.bf16.msra.mxu0 %v2378
        %2782 = vmatpush.bf16.msra.mxu0 %v2377
        %2783 = vmatpush.bf16.msra.mxu0 %v2376
        %2784 = vmatpush.bf16.msra.mxu0 %v2375
        %2785 = vmatpush.bf16.msra.mxu0 %v2374
        %2786 = vmatmul.bf16.gmra.mxu0 %v1551
        %v2787 = vpop.f32.mrf.mxu0
        %v2788 = vadd.f32 %v2775, %v2787
        %v2789 = vpop.f32.mrf.mxu0
        %2790 = vdwg.mxu0
        %2791 = vmatpush.bf16.msra.mxu0 %v2389
        %2792 = vmatpush.bf16.msra.mxu0 %v2388
        %2793 = vmatpush.bf16.msra.mxu0 %v2387
        %2794 = vmatpush.bf16.msra.mxu0 %v2386
        %2795 = vmatpush.bf16.msra.mxu0 %v2385
        %2796 = vmatpush.bf16.msra.mxu0 %v2384
        %2797 = vmatpush.bf16.msra.mxu0 %v2383
        %2798 = vmatpush.bf16.msra.mxu0 %v2382
        %2799 = vmatmul.bf16.gmra.mxu0 %v1552
        %v2800 = vpop.f32.mrf.mxu0
        %v2801 = vadd.f32 %v2788, %v2800
        %v2802 = vpop.f32.mrf.mxu0
        %2803 = vdwg.mxu0
        %2804 = vmatpush.bf16.msra.mxu0 %v2397
        %2805 = vmatpush.bf16.msra.mxu0 %v2396
        %2806 = vmatpush.bf16.msra.mxu0 %v2395
        %2807 = vmatpush.bf16.msra.mxu0 %v2394
        %2808 = vmatpush.bf16.msra.mxu0 %v2393
        %2809 = vmatpush.bf16.msra.mxu0 %v2392
        %2810 = vmatpush.bf16.msra.mxu0 %v2391
        %2811 = vmatpush.bf16.msra.mxu0 %v2390
        %2812 = vmatmul.bf16.gmra.mxu0 %v1553
        %v2813 = vpop.f32.mrf.mxu0
        %v2814 = vadd.f32 %v2801, %v2813
        %v2815 = vpop.f32.mrf.mxu0
        %2816 = vdwg.mxu0
        %2817 = vmatpush.bf16.msra.mxu0 %v2405
        %2818 = vmatpush.bf16.msra.mxu0 %v2404
        %2819 = vmatpush.bf16.msra.mxu0 %v2403
        %2820 = vmatpush.bf16.msra.mxu0 %v2402
        %2821 = vmatpush.bf16.msra.mxu0 %v2401
        %2822 = vmatpush.bf16.msra.mxu0 %v2400
        %2823 = vmatpush.bf16.msra.mxu0 %v2399
        %2824 = vmatpush.bf16.msra.mxu0 %v2398
        %2825 = vmatmul.bf16.gmra.mxu0 %v1554
        %v2826 = vpop.f32.mrf.mxu0
        %v2827 = vadd.f32 %v2814, %v2826
        %v2828 = vpop.f32.mrf.mxu0
        %2829 = vdwg.mxu0
        %2830 = vmatpush.bf16.msra.mxu0 %v2413
        %2831 = vmatpush.bf16.msra.mxu0 %v2412
        %2832 = vmatpush.bf16.msra.mxu0 %v2411
        %2833 = vmatpush.bf16.msra.mxu0 %v2410
        %2834 = vmatpush.bf16.msra.mxu0 %v2409
        %2835 = vmatpush.bf16.msra.mxu0 %v2408
        %2836 = vmatpush.bf16.msra.mxu0 %v2407
        %2837 = vmatpush.bf16.msra.mxu0 %v2406
        %2838 = vmatmul.bf16.gmra.mxu0 %v1555
        %v2839 = vpop.f32.mrf.mxu0
        %v2840 = vadd.f32 %v2827, %v2839
        %v2841 = vpop.f32.mrf.mxu0
        %2842 = vdwg.mxu0
        %2843 = vmatpush.bf16.msra.mxu0 %v2421
        %2844 = vmatpush.bf16.msra.mxu0 %v2420
        %2845 = vmatpush.bf16.msra.mxu0 %v2419
        %2846 = vmatpush.bf16.msra.mxu0 %v2418
        %2847 = vmatpush.bf16.msra.mxu0 %v2417
        %2848 = vmatpush.bf16.msra.mxu0 %v2416
        %2849 = vmatpush.bf16.msra.mxu0 %v2415
        %2850 = vmatpush.bf16.msra.mxu0 %v2414
        %2851 = vmatmul.bf16.gmra.mxu0 %v1556
        %v2852 = vpop.f32.mrf.mxu0
        %v2853 = vadd.f32 %v2840, %v2852
        %v2854 = vpop.f32.mrf.mxu0
        %2855 = vdwg.mxu0
        %2856 = vmatpush.bf16.msra.mxu0 %v2429
        %2857 = vmatpush.bf16.msra.mxu0 %v2428
        %2858 = vmatpush.bf16.msra.mxu0 %v2427
        %2859 = vmatpush.bf16.msra.mxu0 %v2426
        %2860 = vmatpush.bf16.msra.mxu0 %v2425
        %2861 = vmatpush.bf16.msra.mxu0 %v2424
        %2862 = vmatpush.bf16.msra.mxu0 %v2423
        %2863 = vmatpush.bf16.msra.mxu0 %v2422
        %2864 = vmatmul.bf16.gmra.mxu0 %v1557
        %v2865 = vpop.f32.mrf.mxu0
        %v2866 = vadd.f32 %v2853, %v2865
        %v2867 = vpop.f32.mrf.mxu0
        %2868 = vdwg.mxu0
        %2869 = vmatpush.bf16.msra.mxu0 %v2437
        %2870 = vmatpush.bf16.msra.mxu0 %v2436
        %2871 = vmatpush.bf16.msra.mxu0 %v2435
        %2872 = vmatpush.bf16.msra.mxu0 %v2434
        %2873 = vmatpush.bf16.msra.mxu0 %v2433
        %2874 = vmatpush.bf16.msra.mxu0 %v2432
        %2875 = vmatpush.bf16.msra.mxu0 %v2431
        %2876 = vmatpush.bf16.msra.mxu0 %v2430
        %2877 = vmatmul.bf16.gmra.mxu0 %v1558
        %v2878 = vpop.f32.mrf.mxu0
        %v2879 = vadd.f32 %v2866, %v2878
        %v2880 = vpop.f32.mrf.mxu0
        %2881 = vdwg.mxu0
        %2882 = vmatpush.bf16.msra.mxu0 %v2445
        %2883 = vmatpush.bf16.msra.mxu0 %v2444
        %2884 = vmatpush.bf16.msra.mxu0 %v2443
        %2885 = vmatpush.bf16.msra.mxu0 %v2442
        %2886 = vmatpush.bf16.msra.mxu0 %v2441
        %2887 = vmatpush.bf16.msra.mxu0 %v2440
        %2888 = vmatpush.bf16.msra.mxu0 %v2439
        %2889 = vmatpush.bf16.msra.mxu0 %v2438
        %2890 = vmatmul.bf16.gmra.mxu0 %v1559
        %v2891 = vpop.f32.mrf.mxu0
        %v2892 = vadd.f32 %v2879, %v2891
        %v2893 = vpop.f32.mrf.mxu0
        %2894 = vdwg.mxu0
        %2895 = vmatpush.bf16.msra.mxu0 %v2453
        %2896 = vmatpush.bf16.msra.mxu0 %v2452
        %2897 = vmatpush.bf16.msra.mxu0 %v2451
        %2898 = vmatpush.bf16.msra.mxu0 %v2450
        %2899 = vmatpush.bf16.msra.mxu0 %v2449
        %2900 = vmatpush.bf16.msra.mxu0 %v2448
        %2901 = vmatpush.bf16.msra.mxu0 %v2447
        %2902 = vmatpush.bf16.msra.mxu0 %v2446
        %2903 = vmatmul.bf16.gmra.mxu0 %v1560
        %v2904 = vpop.f32.mrf.mxu0
        %v2905 = vadd.f32 %v2892, %v2904
        %v2906 = vpop.f32.mrf.mxu0
        %2907 = vdwg.mxu0
        %2908 = vmatpush.bf16.msra.mxu0 %v2461
        %2909 = vmatpush.bf16.msra.mxu0 %v2460
        %2910 = vmatpush.bf16.msra.mxu0 %v2459
        %2911 = vmatpush.bf16.msra.mxu0 %v2458
        %2912 = vmatpush.bf16.msra.mxu0 %v2457
        %2913 = vmatpush.bf16.msra.mxu0 %v2456
        %2914 = vmatpush.bf16.msra.mxu0 %v2455
        %2915 = vmatpush.bf16.msra.mxu0 %v2454
        %2916 = vmatmul.bf16.gmra.mxu0 %v1561
        %v2917 = vpop.f32.mrf.mxu0
        %v2918 = vadd.f32 %v2905, %v2917
        %v2919 = vpop.f32.mrf.mxu0
        %2920 = vdwg.mxu0
        %2921 = vmatpush.bf16.msra.mxu0 %v2469
        %2922 = vmatpush.bf16.msra.mxu0 %v2468
        %2923 = vmatpush.bf16.msra.mxu0 %v2467
        %2924 = vmatpush.bf16.msra.mxu0 %v2466
        %2925 = vmatpush.bf16.msra.mxu0 %v2465
        %2926 = vmatpush.bf16.msra.mxu0 %v2464
        %2927 = vmatpush.bf16.msra.mxu0 %v2463
        %2928 = vmatpush.bf16.msra.mxu0 %v2462
        %2929 = vmatmul.bf16.gmra.mxu0 %v1562
        %v2930 = vpop.f32.mrf.mxu0
        %v2931 = vadd.f32 %v2918, %v2930
        %v2932 = vpop.f32.mrf.mxu0
        %2933 = vdwg.mxu0
        %2934 = vmatpush.bf16.msra.mxu0 %v2477
        %2935 = vmatpush.bf16.msra.mxu0 %v2476
        %2936 = vmatpush.bf16.msra.mxu0 %v2475
        %2937 = vmatpush.bf16.msra.mxu0 %v2474
        %2938 = vmatpush.bf16.msra.mxu0 %v2473
        %2939 = vmatpush.bf16.msra.mxu0 %v2472
        %2940 = vmatpush.bf16.msra.mxu0 %v2471
        %2941 = vmatpush.bf16.msra.mxu0 %v2470
        %2942 = vmatmul.bf16.gmra.mxu0 %v1563
        %v2943 = vpop.f32.mrf.mxu0
        %v2944 = vadd.f32 %v2931, %v2943
        %v2945 = vpop.f32.mrf.mxu0
        %2946 = vdwg.mxu0
        %2947 = vmatpush.bf16.msra.mxu0 %v2485
        %2948 = vmatpush.bf16.msra.mxu0 %v2484
        %2949 = vmatpush.bf16.msra.mxu0 %v2483
        %2950 = vmatpush.bf16.msra.mxu0 %v2482
        %2951 = vmatpush.bf16.msra.mxu0 %v2481
        %2952 = vmatpush.bf16.msra.mxu0 %v2480
        %2953 = vmatpush.bf16.msra.mxu0 %v2479
        %2954 = vmatpush.bf16.msra.mxu0 %v2478
        %2955 = vmatmul.bf16.gmra.mxu0 %v1564
        %v2956 = vpop.f32.mrf.mxu0
        %v2957 = vadd.f32 %v2944, %v2956
        %v2958 = vpop.f32.mrf.mxu0
        %2959 = vdwg.mxu0
        %2960 = vmatpush.bf16.msra.mxu0 %v2493
        %2961 = vmatpush.bf16.msra.mxu0 %v2492
        %2962 = vmatpush.bf16.msra.mxu0 %v2491
        %2963 = vmatpush.bf16.msra.mxu0 %v2490
        %2964 = vmatpush.bf16.msra.mxu0 %v2489
        %2965 = vmatpush.bf16.msra.mxu0 %v2488
        %2966 = vmatpush.bf16.msra.mxu0 %v2487
        %2967 = vmatpush.bf16.msra.mxu0 %v2486
        %2968 = vmatmul.bf16.gmra.mxu0 %v1565
        %v2969 = vpop.f32.mrf.mxu0
        %v2970 = vadd.f32 %v2957, %v2969
        %v2971 = vpop.f32.mrf.mxu0
        %2972 = vdwg.mxu0
        %2973 = vmatpush.bf16.msra.mxu0 %v2501
        %2974 = vmatpush.bf16.msra.mxu0 %v2500
        %2975 = vmatpush.bf16.msra.mxu0 %v2499
        %2976 = vmatpush.bf16.msra.mxu0 %v2498
        %2977 = vmatpush.bf16.msra.mxu0 %v2497
        %2978 = vmatpush.bf16.msra.mxu0 %v2496
        %2979 = vmatpush.bf16.msra.mxu0 %v2495
        %2980 = vmatpush.bf16.msra.mxu0 %v2494
        %2981 = vmatmul.bf16.gmra.mxu0 %v1566
        %v2982 = vpop.f32.mrf.mxu0
        %v2983 = vadd.f32 %v2970, %v2982
        %v2984 = vpop.f32.mrf.mxu0
        %2985 = vdwg.mxu0
        %2986 = vmatpush.bf16.msra.mxu0 %v2509
        %2987 = vmatpush.bf16.msra.mxu0 %v2508
        %2988 = vmatpush.bf16.msra.mxu0 %v2507
        %2989 = vmatpush.bf16.msra.mxu0 %v2506
        %2990 = vmatpush.bf16.msra.mxu0 %v2505
        %2991 = vmatpush.bf16.msra.mxu0 %v2504
        %2992 = vmatpush.bf16.msra.mxu0 %v2503
        %2993 = vmatpush.bf16.msra.mxu0 %v2502
        %2994 = vmatmul.bf16.gmra.mxu0 %v1567
        %v2995 = vpop.f32.mrf.mxu0
        %v2996 = vadd.f32 %v2983, %v2995
        %v2997 = vpop.f32.mrf.mxu0
        %2998 = vdwg.mxu0
        %2999 = vmatpush.bf16.msra.mxu0 %v2517
        %3000 = vmatpush.bf16.msra.mxu0 %v2516
        %3001 = vmatpush.bf16.msra.mxu0 %v2515
        %3002 = vmatpush.bf16.msra.mxu0 %v2514
        %3003 = vmatpush.bf16.msra.mxu0 %v2513
        %3004 = vmatpush.bf16.msra.mxu0 %v2512
        %3005 = vmatpush.bf16.msra.mxu0 %v2511
        %3006 = vmatpush.bf16.msra.mxu0 %v2510
        %3007 = vmatmul.bf16.gmra.mxu0 %v1568
        %v3008 = vpop.f32.mrf.mxu0
        %v3009 = vadd.f32 %v2996, %v3008
        %v3010 = vpop.f32.mrf.mxu0
        %3011 = vdwg.mxu0
        %3012 = vmatpush.bf16.msra.mxu0 %v2525
        %3013 = vmatpush.bf16.msra.mxu0 %v2524
        %3014 = vmatpush.bf16.msra.mxu0 %v2523
        %3015 = vmatpush.bf16.msra.mxu0 %v2522
        %3016 = vmatpush.bf16.msra.mxu0 %v2521
        %3017 = vmatpush.bf16.msra.mxu0 %v2520
        %3018 = vmatpush.bf16.msra.mxu0 %v2519
        %3019 = vmatpush.bf16.msra.mxu0 %v2518
        %3020 = vmatmul.bf16.gmra.mxu0 %v1569
        %v3021 = vpop.f32.mrf.mxu0
        %v3022 = vadd.f32 %v3009, %v3021
        %v3023 = vpop.f32.mrf.mxu0
        %3024 = vdwg.mxu0
        %3025 = vmatpush.bf16.msra.mxu0 %v2533
        %3026 = vmatpush.bf16.msra.mxu0 %v2532
        %3027 = vmatpush.bf16.msra.mxu0 %v2531
        %3028 = vmatpush.bf16.msra.mxu0 %v2530
        %3029 = vmatpush.bf16.msra.mxu0 %v2529
        %3030 = vmatpush.bf16.msra.mxu0 %v2528
        %3031 = vmatpush.bf16.msra.mxu0 %v2527
        %3032 = vmatpush.bf16.msra.mxu0 %v2526
        %3033 = vmatmul.bf16.gmra.mxu0 %v1570
        %v3034 = vpop.f32.mrf.mxu0
        %v3035 = vadd.f32 %v3022, %v3034
        %v3036 = vpop.f32.mrf.mxu0
        %3037 = vdwg.mxu0
        %v3038 = vmax.f32 %v3035, 0.0
        %v3039 = vld [vmem:[%s891] sm:$0xf]
        %v3040 = vld [vmem:[%s891 + $0x4] sm:$0xf]
        %v3041 = vld [vmem:[%s891 + $0x8] sm:$0xf]
        %v3042 = vld [vmem:[%s891 + $0xc] sm:$0xf]
        %v3043 = vld [vmem:[%s891 + $0x10] sm:$0xf]
        %v3044 = vld [vmem:[%s891 + $0x14] sm:$0xf]
        %v3045 = vld [vmem:[%s891 + $0x18] sm:$0xf]
        %v3046 = vld [vmem:[%s891 + $0x1c] sm:$0xf]
        %v3047 = vld [vmem:[%s891 + $0x20] sm:$0xf]
        %v3048 = vld [vmem:[%s891 + $0x24] sm:$0xf]
        %v3049 = vld [vmem:[%s891 + $0x28] sm:$0xf]
        %v3050 = vld [vmem:[%s891 + $0x2c] sm:$0xf]
        %v3051 = vld [vmem:[%s891 + $0x30] sm:$0xf]
        %v3052 = vld [vmem:[%s891 + $0x34] sm:$0xf]
        %v3053 = vld [vmem:[%s891 + $0x38] sm:$0xf]
        %v3054 = vld [vmem:[%s891 + $0x3c] sm:$0xf]
        %v3055 = vld [vmem:[%s900] sm:$0x1]
        %v3056 = vpack.c.bf16 %v3038, %v3038
        %v3058 = vperm.slane %v3055, 0
        %v3076 = vunpack.c.l.b16 %v3039
        %v3077 = vunpack.c.l.b16 %v3040
        %v3078 = vunpack.c.l.b16 %v3041
        %v3079 = vunpack.c.l.b16 %v3042
        %v3080 = vunpack.c.l.b16 %v3043
        %v3081 = vunpack.c.l.b16 %v3044
        %v3082 = vunpack.c.l.b16 %v3045
        %v3083 = vunpack.c.l.b16 %v3046
        %v3084 = vunpack.c.l.b16 %v3047
        %v3085 = vunpack.c.l.b16 %v3048
        %v3086 = vunpack.c.l.b16 %v3049
        %v3087 = vunpack.c.l.b16 %v3050
        %v3088 = vunpack.c.l.b16 %v3051
        %v3089 = vunpack.c.l.b16 %v3052
        %v3090 = vunpack.c.l.b16 %v3053
        %v3091 = vunpack.c.l.b16 %v3054
        %v3092 = vpack.c.b16 %v3077, %v3076
        %v3093 = vpack.c.b16 %v3079, %v3078
        %v3094 = vpack.c.b16 %v3081, %v3080
        %v3095 = vpack.c.b16 %v3083, %v3082
        %v3096 = vpack.c.b16 %v3085, %v3084
        %v3097 = vpack.c.b16 %v3087, %v3086
        %v3098 = vpack.c.b16 %v3089, %v3088
        %v3099 = vpack.c.b16 %v3091, %v3090
        %3108 = vmatpush.bf16.msra.mxu0 %v3099
        %3109 = vmatpush.bf16.msra.mxu0 %v3098
        %3110 = vmatpush.bf16.msra.mxu0 %v3097
        %3111 = vmatpush.bf16.msra.mxu0 %v3096
        %3112 = vmatpush.bf16.msra.mxu0 %v3095
        %3113 = vmatpush.bf16.msra.mxu0 %v3094
        %3114 = vmatpush.bf16.msra.mxu0 %v3093
        %3115 = vmatpush.bf16.msra.mxu0 %v3092
        %3116 = vmatmul.bf16.gmra.mxu0 %v3056
        %v3117 = vpop.f32.mrf.mxu0
        %v3118 = vadd.f32 %v3058, %v3117
        %v3119 = vpop.f32.mrf.mxu0
        %3120 = vdwg.mxu0
        %v3121 = vmax.f32 %v3118, 0.0
        %v3122 = vld [vmem:[%s910] sm:$0xf]
        %v3123 = vld [vmem:[%s910 + $0x4] sm:$0xf]
        %v3124 = vld [vmem:[%s910 + $0x8] sm:$0xf]
        %v3125 = vld [vmem:[%s910 + $0xc] sm:$0xf]
        %v3126 = vld [vmem:[%s910 + $0x10] sm:$0xf]
        %v3127 = vld [vmem:[%s910 + $0x14] sm:$0xf]
        %v3128 = vld [vmem:[%s910 + $0x18] sm:$0xf]
        %v3129 = vld [vmem:[%s910 + $0x1c] sm:$0xf]
        %v3130 = vld [vmem:[%s910 + $0x20] sm:$0xf]
        %v3131 = vld [vmem:[%s910 + $0x24] sm:$0xf]
        %v3132 = vld [vmem:[%s910 + $0x28] sm:$0xf]
        %v3133 = vld [vmem:[%s910 + $0x2c] sm:$0xf]
        %v3134 = vld [vmem:[%s910 + $0x30] sm:$0xf]
        %v3135 = vld [vmem:[%s910 + $0x34] sm:$0xf]
        %v3136 = vld [vmem:[%s910 + $0x38] sm:$0xf]
        %v3137 = vld [vmem:[%s910 + $0x3c] sm:$0xf]
        %v3138 = vld [vmem:[%s919] sm:$0x1]
        %v3139 = vpack.c.bf16 %v3121, %v3121
        %v3141 = vperm.slane %v3138, 0
        %v3159 = vunpack.c.l.b16 %v3122
        %v3160 = vunpack.c.l.b16 %v3123
        %v3161 = vunpack.c.l.b16 %v3124
        %v3162 = vunpack.c.l.b16 %v3125
        %v3163 = vunpack.c.l.b16 %v3126
        %v3164 = vunpack.c.l.b16 %v3127
        %v3165 = vunpack.c.l.b16 %v3128
        %v3166 = vunpack.c.l.b16 %v3129
        %v3167 = vunpack.c.l.b16 %v3130
        %v3168 = vunpack.c.l.b16 %v3131
        %v3169 = vunpack.c.l.b16 %v3132
        %v3170 = vunpack.c.l.b16 %v3133
        %v3171 = vunpack.c.l.b16 %v3134
        %v3172 = vunpack.c.l.b16 %v3135
        %v3173 = vunpack.c.l.b16 %v3136
        %v3174 = vunpack.c.l.b16 %v3137
        %v3175 = vpack.c.b16 %v3160, %v3159
        %v3176 = vpack.c.b16 %v3162, %v3161
        %v3177 = vpack.c.b16 %v3164, %v3163
        %v3178 = vpack.c.b16 %v3166, %v3165
        %v3179 = vpack.c.b16 %v3168, %v3167
        %v3180 = vpack.c.b16 %v3170, %v3169
        %v3181 = vpack.c.b16 %v3172, %v3171
        %v3182 = vpack.c.b16 %v3174, %v3173
        %3191 = vmatpush.bf16.msra.mxu0 %v3182
        %3192 = vmatpush.bf16.msra.mxu0 %v3181
        %3193 = vmatpush.bf16.msra.mxu0 %v3180
        %3194 = vmatpush.bf16.msra.mxu0 %v3179
        %3195 = vmatpush.bf16.msra.mxu0 %v3178
        %3196 = vmatpush.bf16.msra.mxu0 %v3177
        %3197 = vmatpush.bf16.msra.mxu0 %v3176
        %3198 = vmatpush.bf16.msra.mxu0 %v3175
        %3199 = vmatmul.bf16.gmra.mxu0 %v3139
        %v3200 = vpop.f32.mrf.mxu0
        %v3201 = vadd.f32 %v3141, %v3200
        %v3202 = vpop.f32.mrf.mxu0
        %3203 = vdwg.mxu0
        %v3204 = vmax.f32 %v3201, 0.0
        %v3205 = vld [vmem:[%s929] sm:$0xf]
        %v3206 = vld [vmem:[%s929 + $0x4] sm:$0xf]
        %v3207 = vld [vmem:[%s929 + $0x8] sm:$0xf]
        %v3208 = vld [vmem:[%s929 + $0xc] sm:$0xf]
        %v3209 = vld [vmem:[%s929 + $0x10] sm:$0xf]
        %v3210 = vld [vmem:[%s929 + $0x14] sm:$0xf]
        %v3211 = vld [vmem:[%s929 + $0x18] sm:$0xf]
        %v3212 = vld [vmem:[%s929 + $0x1c] sm:$0xf]
        %v3213 = vld [vmem:[%s929 + $0x20] sm:$0xf]
        %v3214 = vld [vmem:[%s929 + $0x24] sm:$0xf]
        %v3215 = vld [vmem:[%s929 + $0x28] sm:$0xf]
        %v3216 = vld [vmem:[%s929 + $0x2c] sm:$0xf]
        %v3217 = vld [vmem:[%s929 + $0x30] sm:$0xf]
        %v3218 = vld [vmem:[%s929 + $0x34] sm:$0xf]
        %v3219 = vld [vmem:[%s929 + $0x38] sm:$0xf]
        %v3220 = vld [vmem:[%s929 + $0x3c] sm:$0xf]
        %v3221 = vld [vmem:[%s938] sm:$0x1]
        %v3222 = vpack.c.bf16 %v3204, %v3204
        %v3224 = vperm.slane %v3221, 0
        %v3242 = vunpack.c.l.b16 %v3205
        %v3243 = vunpack.c.l.b16 %v3206
        %v3244 = vunpack.c.l.b16 %v3207
        %v3245 = vunpack.c.l.b16 %v3208
        %v3246 = vunpack.c.l.b16 %v3209
        %v3247 = vunpack.c.l.b16 %v3210
        %v3248 = vunpack.c.l.b16 %v3211
        %v3249 = vunpack.c.l.b16 %v3212
        %v3250 = vunpack.c.l.b16 %v3213
        %v3251 = vunpack.c.l.b16 %v3214
        %v3252 = vunpack.c.l.b16 %v3215
        %v3253 = vunpack.c.l.b16 %v3216
        %v3254 = vunpack.c.l.b16 %v3217
        %v3255 = vunpack.c.l.b16 %v3218
        %v3256 = vunpack.c.l.b16 %v3219
        %v3257 = vunpack.c.l.b16 %v3220
        %v3258 = vpack.c.b16 %v3243, %v3242
        %v3259 = vpack.c.b16 %v3245, %v3244
        %v3260 = vpack.c.b16 %v3247, %v3246
        %v3261 = vpack.c.b16 %v3249, %v3248
        %v3262 = vpack.c.b16 %v3251, %v3250
        %v3263 = vpack.c.b16 %v3253, %v3252
        %v3264 = vpack.c.b16 %v3255, %v3254
        %v3265 = vpack.c.b16 %v3257, %v3256
        %3274 = vmatpush.bf16.msra.mxu0 %v3265
        %3275 = vmatpush.bf16.msra.mxu0 %v3264
        %3276 = vmatpush.bf16.msra.mxu0 %v3263
        %3277 = vmatpush.bf16.msra.mxu0 %v3262
        %3278 = vmatpush.bf16.msra.mxu0 %v3261
        %3279 = vmatpush.bf16.msra.mxu0 %v3260
        %3280 = vmatpush.bf16.msra.mxu0 %v3259
        %3281 = vmatpush.bf16.msra.mxu0 %v3258
        %3282 = vmatmul.bf16.gmra.mxu0 %v3222
        %v3283 = vpop.f32.mrf.mxu0
        %v3284 = vadd.f32 %v3224, %v3283
        %v3285 = vpop.f32.mrf.mxu0
        %3286 = vdwg.mxu0
        %v3287 = vmax.f32 %v3284, 0.0
        %v3288 = vld [vmem:[%s948] sm:$0xf]
        %v3289 = vld [vmem:[%s948 + $0x4] sm:$0xf]
        %v3290 = vld [vmem:[%s948 + $0x8] sm:$0xf]
        %v3291 = vld [vmem:[%s948 + $0xc] sm:$0xf]
        %v3292 = vld [vmem:[%s948 + $0x10] sm:$0xf]
        %v3293 = vld [vmem:[%s948 + $0x14] sm:$0xf]
        %v3294 = vld [vmem:[%s948 + $0x18] sm:$0xf]
        %v3295 = vld [vmem:[%s948 + $0x1c] sm:$0xf]
        %v3296 = vld [vmem:[%s948 + $0x20] sm:$0xf]
        %v3297 = vld [vmem:[%s948 + $0x24] sm:$0xf]
        %v3298 = vld [vmem:[%s948 + $0x28] sm:$0xf]
        %v3299 = vld [vmem:[%s948 + $0x2c] sm:$0xf]
        %v3300 = vld [vmem:[%s948 + $0x30] sm:$0xf]
        %v3301 = vld [vmem:[%s948 + $0x34] sm:$0xf]
        %v3302 = vld [vmem:[%s948 + $0x38] sm:$0xf]
        %v3303 = vld [vmem:[%s948 + $0x3c] sm:$0xf]
        %v3304 = vld [vmem:[%s957] sm:$0x1]
        %v3305 = vpack.c.bf16 %v3287, %v3287
        %v3307 = vperm.slane %v3304, 0
        %v3325 = vunpack.c.l.b16 %v3288
        %v3326 = vunpack.c.l.b16 %v3289
        %v3327 = vunpack.c.l.b16 %v3290
        %v3328 = vunpack.c.l.b16 %v3291
        %v3329 = vunpack.c.l.b16 %v3292
        %v3330 = vunpack.c.l.b16 %v3293
        %v3331 = vunpack.c.l.b16 %v3294
        %v3332 = vunpack.c.l.b16 %v3295
        %v3333 = vunpack.c.l.b16 %v3296
        %v3334 = vunpack.c.l.b16 %v3297
        %v3335 = vunpack.c.l.b16 %v3298
        %v3336 = vunpack.c.l.b16 %v3299
        %v3337 = vunpack.c.l.b16 %v3300
        %v3338 = vunpack.c.l.b16 %v3301
        %v3339 = vunpack.c.l.b16 %v3302
        %v3340 = vunpack.c.l.b16 %v3303
        %v3341 = vpack.c.b16 %v3326, %v3325
        %v3342 = vpack.c.b16 %v3328, %v3327
        %v3343 = vpack.c.b16 %v3330, %v3329
        %v3344 = vpack.c.b16 %v3332, %v3331
        %v3345 = vpack.c.b16 %v3334, %v3333
        %v3346 = vpack.c.b16 %v3336, %v3335
        %v3347 = vpack.c.b16 %v3338, %v3337
        %v3348 = vpack.c.b16 %v3340, %v3339
        %3357 = vmatpush.bf16.msra.mxu0 %v3348
        %3358 = vmatpush.bf16.msra.mxu0 %v3347
        %3359 = vmatpush.bf16.msra.mxu0 %v3346
        %3360 = vmatpush.bf16.msra.mxu0 %v3345
        %3361 = vmatpush.bf16.msra.mxu0 %v3344
        %3362 = vmatpush.bf16.msra.mxu0 %v3343
        %3363 = vmatpush.bf16.msra.mxu0 %v3342
        %3364 = vmatpush.bf16.msra.mxu0 %v3341
        %3365 = vmatmul.bf16.gmra.mxu0 %v3305
        %v3366 = vpop.f32.mrf.mxu0
        %v3367 = vadd.f32 %v3307, %v3366
        %v3368 = vpop.f32.mrf.mxu0
        %3369 = vdwg.mxu0
        %v3370 = vmax.f32 %v3367, 0.0
        %v3371 = vld [vmem:[%s967] sm:$0xf]
        %v3372 = vld [vmem:[%s967 + $0x4] sm:$0xf]
        %v3373 = vld [vmem:[%s967 + $0x8] sm:$0xf]
        %v3374 = vld [vmem:[%s967 + $0xc] sm:$0xf]
        %v3375 = vld [vmem:[%s967 + $0x10] sm:$0xf]
        %v3376 = vld [vmem:[%s967 + $0x14] sm:$0xf]
        %v3377 = vld [vmem:[%s967 + $0x18] sm:$0xf]
        %v3378 = vld [vmem:[%s967 + $0x1c] sm:$0xf]
        %v3379 = vld [vmem:[%s967 + $0x20] sm:$0xf]
        %v3380 = vld [vmem:[%s967 + $0x24] sm:$0xf]
        %v3381 = vld [vmem:[%s967 + $0x28] sm:$0xf]
        %v3382 = vld [vmem:[%s967 + $0x2c] sm:$0xf]
        %v3383 = vld [vmem:[%s967 + $0x30] sm:$0xf]
        %v3384 = vld [vmem:[%s967 + $0x34] sm:$0xf]
        %v3385 = vld [vmem:[%s967 + $0x38] sm:$0xf]
        %v3386 = vld [vmem:[%s967 + $0x3c] sm:$0xf]
        %v3387 = vld [vmem:[%s976] sm:$0x1]
        %v3388 = vpack.c.bf16 %v3370, %v3370
        %v3390 = vperm.slane %v3387, 0
        %v3408 = vunpack.c.l.b16 %v3371
        %v3409 = vunpack.c.l.b16 %v3372
        %v3410 = vunpack.c.l.b16 %v3373
        %v3411 = vunpack.c.l.b16 %v3374
        %v3412 = vunpack.c.l.b16 %v3375
        %v3413 = vunpack.c.l.b16 %v3376
        %v3414 = vunpack.c.l.b16 %v3377
        %v3415 = vunpack.c.l.b16 %v3378
        %v3416 = vunpack.c.l.b16 %v3379
        %v3417 = vunpack.c.l.b16 %v3380
        %v3418 = vunpack.c.l.b16 %v3381
        %v3419 = vunpack.c.l.b16 %v3382
        %v3420 = vunpack.c.l.b16 %v3383
        %v3421 = vunpack.c.l.b16 %v3384
        %v3422 = vunpack.c.l.b16 %v3385
        %v3423 = vunpack.c.l.b16 %v3386
        %v3424 = vpack.c.b16 %v3409, %v3408
        %v3425 = vpack.c.b16 %v3411, %v3410
        %v3426 = vpack.c.b16 %v3413, %v3412
        %v3427 = vpack.c.b16 %v3415, %v3414
        %v3428 = vpack.c.b16 %v3417, %v3416
        %v3429 = vpack.c.b16 %v3419, %v3418
        %v3430 = vpack.c.b16 %v3421, %v3420
        %v3431 = vpack.c.b16 %v3423, %v3422
        %3440 = vmatpush.bf16.msra.mxu0 %v3431
        %3441 = vmatpush.bf16.msra.mxu0 %v3430
        %3442 = vmatpush.bf16.msra.mxu0 %v3429
        %3443 = vmatpush.bf16.msra.mxu0 %v3428
        %3444 = vmatpush.bf16.msra.mxu0 %v3427
        %3445 = vmatpush.bf16.msra.mxu0 %v3426
        %3446 = vmatpush.bf16.msra.mxu0 %v3425
        %3447 = vmatpush.bf16.msra.mxu0 %v3424
        %3448 = vmatmul.bf16.gmra.mxu0 %v3388
        %v3449 = vpop.f32.mrf.mxu0
        %v3450 = vadd.f32 %v3390, %v3449
        %v3451 = vpop.f32.mrf.mxu0
        %3452 = vdwg.mxu0
        %v3453 = vmax.f32 %v3450, 0.0
        %v3454 = vld [vmem:[%s986] sm:$0xf]
        %v3455 = vld [vmem:[%s986 + $0x4] sm:$0xf]
        %v3456 = vld [vmem:[%s986 + $0x8] sm:$0xf]
        %v3457 = vld [vmem:[%s986 + $0xc] sm:$0xf]
        %v3458 = vld [vmem:[%s986 + $0x10] sm:$0xf]
        %v3459 = vld [vmem:[%s986 + $0x14] sm:$0xf]
        %v3460 = vld [vmem:[%s986 + $0x18] sm:$0xf]
        %v3461 = vld [vmem:[%s986 + $0x1c] sm:$0xf]
        %v3462 = vld [vmem:[%s986 + $0x20] sm:$0xf]
        %v3463 = vld [vmem:[%s986 + $0x24] sm:$0xf]
        %v3464 = vld [vmem:[%s986 + $0x28] sm:$0xf]
        %v3465 = vld [vmem:[%s986 + $0x2c] sm:$0xf]
        %v3466 = vld [vmem:[%s986 + $0x30] sm:$0xf]
        %v3467 = vld [vmem:[%s986 + $0x34] sm:$0xf]
        %v3468 = vld [vmem:[%s986 + $0x38] sm:$0xf]
        %v3469 = vld [vmem:[%s986 + $0x3c] sm:$0xf]
        %v3470 = vld [vmem:[%s995] sm:$0x1]
        %v3471 = vpack.c.bf16 %v3453, %v3453
        %v3473 = vperm.slane %v3470, 0
        %v3491 = vunpack.c.l.b16 %v3454
        %v3492 = vunpack.c.l.b16 %v3455
        %v3493 = vunpack.c.l.b16 %v3456
        %v3494 = vunpack.c.l.b16 %v3457
        %v3495 = vunpack.c.l.b16 %v3458
        %v3496 = vunpack.c.l.b16 %v3459
        %v3497 = vunpack.c.l.b16 %v3460
        %v3498 = vunpack.c.l.b16 %v3461
        %v3499 = vunpack.c.l.b16 %v3462
        %v3500 = vunpack.c.l.b16 %v3463
        %v3501 = vunpack.c.l.b16 %v3464
        %v3502 = vunpack.c.l.b16 %v3465
        %v3503 = vunpack.c.l.b16 %v3466
        %v3504 = vunpack.c.l.b16 %v3467
        %v3505 = vunpack.c.l.b16 %v3468
        %v3506 = vunpack.c.l.b16 %v3469
        %v3507 = vpack.c.b16 %v3492, %v3491
        %v3508 = vpack.c.b16 %v3494, %v3493
        %v3509 = vpack.c.b16 %v3496, %v3495
        %v3510 = vpack.c.b16 %v3498, %v3497
        %v3511 = vpack.c.b16 %v3500, %v3499
        %v3512 = vpack.c.b16 %v3502, %v3501
        %v3513 = vpack.c.b16 %v3504, %v3503
        %v3514 = vpack.c.b16 %v3506, %v3505
        %3523 = vmatpush.bf16.msra.mxu0 %v3514
        %3524 = vmatpush.bf16.msra.mxu0 %v3513
        %3525 = vmatpush.bf16.msra.mxu0 %v3512
        %3526 = vmatpush.bf16.msra.mxu0 %v3511
        %3527 = vmatpush.bf16.msra.mxu0 %v3510
        %3528 = vmatpush.bf16.msra.mxu0 %v3509
        %3529 = vmatpush.bf16.msra.mxu0 %v3508
        %3530 = vmatpush.bf16.msra.mxu0 %v3507
        %3531 = vmatmul.bf16.gmra.mxu0 %v3471
        %v3532 = vpop.f32.mrf.mxu0
        %v3533 = vadd.f32 %v3473, %v3532
        %v3534 = vpop.f32.mrf.mxu0
        %3535 = vdwg.mxu0
        %v3536 = vmax.f32 %v3533, 0.0
        %v3537 = vld [vmem:[%s1005] sm:$0xff]
        %v3538 = vld [vmem:[%s1005 + $0x8] sm:$0xff]
        %v3539 = vld [vmem:[%s1005 + $0x10] sm:$0xff]
        %v3540 = vld [vmem:[%s1005 + $0x18] sm:$0xff]
        %v3541 = vld [vmem:[%s1005 + $0x20] sm:$0xff]
        %v3542 = vld [vmem:[%s1005 + $0x28] sm:$0xff]
        %v3543 = vld [vmem:[%s1005 + $0x30] sm:$0xff]
        %v3544 = vld [vmem:[%s1005 + $0x38] sm:$0xff]
        %v3545 = vld [vmem:[%s1005 + $0x40] sm:$0xff]
        %v3546 = vld [vmem:[%s1005 + $0x48] sm:$0xff]
        %v3547 = vld [vmem:[%s1005 + $0x50] sm:$0xff]
        %v3548 = vld [vmem:[%s1005 + $0x58] sm:$0xff]
        %v3549 = vld [vmem:[%s1005 + $0x60] sm:$0xff]
        %v3550 = vld [vmem:[%s1005 + $0x68] sm:$0xff]
        %v3551 = vld [vmem:[%s1005 + $0x70] sm:$0xff]
        %v3552 = vld [vmem:[%s1005 + $0x78] sm:$0xff]
        %v3553 = vld [vmem:[%s1005 + $0x80] sm:$0xff]
        %v3554 = vld [vmem:[%s1005 + $0x88] sm:$0xff]
        %v3555 = vld [vmem:[%s1005 + $0x90] sm:$0xff]
        %v3556 = vld [vmem:[%s1005 + $0x98] sm:$0xff]
        %v3557 = vld [vmem:[%s1005 + $0xa0] sm:$0xff]
        %v3558 = vld [vmem:[%s1005 + $0xa8] sm:$0xff]
        %v3559 = vld [vmem:[%s1005 + $0xb0] sm:$0xff]
        %v3560 = vld [vmem:[%s1005 + $0xb8] sm:$0xff]
        %v3561 = vld [vmem:[%s1005 + $0xc0] sm:$0xff]
        %v3562 = vld [vmem:[%s1005 + $0xc8] sm:$0xff]
        %v3563 = vld [vmem:[%s1005 + $0xd0] sm:$0xff]
        %v3564 = vld [vmem:[%s1005 + $0xd8] sm:$0xff]
        %v3565 = vld [vmem:[%s1005 + $0xe0] sm:$0xff]
        %v3566 = vld [vmem:[%s1005 + $0xe8] sm:$0xff]
        %v3567 = vld [vmem:[%s1005 + $0xf0] sm:$0xff]
        %v3568 = vld [vmem:[%s1005 + $0xf8] sm:$0xff]
        %v3569 = vld [vmem:[%s1005 + $0x100] sm:$0xff]
        %v3570 = vld [vmem:[%s1005 + $0x108] sm:$0xff]
        %v3571 = vld [vmem:[%s1005 + $0x110] sm:$0xff]
        %v3572 = vld [vmem:[%s1005 + $0x118] sm:$0xff]
        %v3573 = vld [vmem:[%s1005 + $0x120] sm:$0xff]
        %v3574 = vld [vmem:[%s1005 + $0x128] sm:$0xff]
        %v3575 = vld [vmem:[%s1005 + $0x130] sm:$0xff]
        %v3576 = vld [vmem:[%s1005 + $0x138] sm:$0xff]
        %v3577 = vld [vmem:[%s1005 + $0x140] sm:$0xff]
        %v3578 = vld [vmem:[%s1005 + $0x148] sm:$0xff]
        %v3579 = vld [vmem:[%s1005 + $0x150] sm:$0xff]
        %v3580 = vld [vmem:[%s1005 + $0x158] sm:$0xff]
        %v3581 = vld [vmem:[%s1005 + $0x160] sm:$0xff]
        %v3582 = vld [vmem:[%s1005 + $0x168] sm:$0xff]
        %v3583 = vld [vmem:[%s1005 + $0x170] sm:$0xff]
        %v3584 = vld [vmem:[%s1005 + $0x178] sm:$0xff]
        %v3585 = vld [vmem:[%s1005 + $0x180] sm:$0xff]
        %v3586 = vld [vmem:[%s1005 + $0x188] sm:$0xff]
        %v3587 = vld [vmem:[%s1005 + $0x190] sm:$0xff]
        %v3588 = vld [vmem:[%s1005 + $0x198] sm:$0xff]
        %v3589 = vld [vmem:[%s1005 + $0x1a0] sm:$0xff]
        %v3590 = vld [vmem:[%s1005 + $0x1a8] sm:$0xff]
        %v3591 = vld [vmem:[%s1005 + $0x1b0] sm:$0xff]
        %v3592 = vld [vmem:[%s1005 + $0x1b8] sm:$0xff]
        %v3593 = vld [vmem:[%s1005 + $0x1c0] sm:$0xff]
        %v3594 = vld [vmem:[%s1005 + $0x1c8] sm:$0xff]
        %v3595 = vld [vmem:[%s1005 + $0x1d0] sm:$0xff]
        %v3596 = vld [vmem:[%s1005 + $0x1d8] sm:$0xff]
        %v3597 = vld [vmem:[%s1005 + $0x1e0] sm:$0xff]
        %v3598 = vld [vmem:[%s1005 + $0x1e8] sm:$0xff]
        %v3599 = vld [vmem:[%s1005 + $0x1f0] sm:$0xff]
        %v3600 = vld [vmem:[%s1005 + $0x1f8] sm:$0xff]
        %v3601 = vld [vmem:[%s1005 + $0x200] sm:$0xff]
        %v3602 = vld [vmem:[%s1005 + $0x208] sm:$0xff]
        %v3603 = vld [vmem:[%s1005 + $0x210] sm:$0xff]
        %v3604 = vld [vmem:[%s1005 + $0x218] sm:$0xff]
        %v3605 = vld [vmem:[%s1005 + $0x220] sm:$0xff]
        %v3606 = vld [vmem:[%s1005 + $0x228] sm:$0xff]
        %v3607 = vld [vmem:[%s1005 + $0x230] sm:$0xff]
        %v3608 = vld [vmem:[%s1005 + $0x238] sm:$0xff]
        %v3609 = vld [vmem:[%s1005 + $0x240] sm:$0xff]
        %v3610 = vld [vmem:[%s1005 + $0x248] sm:$0xff]
        %v3611 = vld [vmem:[%s1005 + $0x250] sm:$0xff]
        %v3612 = vld [vmem:[%s1005 + $0x258] sm:$0xff]
        %v3613 = vld [vmem:[%s1005 + $0x260] sm:$0xff]
        %v3614 = vld [vmem:[%s1005 + $0x268] sm:$0xff]
        %v3615 = vld [vmem:[%s1005 + $0x270] sm:$0xff]
        %v3616 = vld [vmem:[%s1005 + $0x278] sm:$0xff]
        %v3617 = vld [vmem:[%s1005 + $0x280] sm:$0xff]
        %v3618 = vld [vmem:[%s1005 + $0x288] sm:$0xff]
        %v3619 = vld [vmem:[%s1005 + $0x290] sm:$0xff]
        %v3620 = vld [vmem:[%s1005 + $0x298] sm:$0xff]
        %v3621 = vld [vmem:[%s1005 + $0x2a0] sm:$0xff]
        %v3622 = vld [vmem:[%s1005 + $0x2a8] sm:$0xff]
        %v3623 = vld [vmem:[%s1005 + $0x2b0] sm:$0xff]
        %v3624 = vld [vmem:[%s1005 + $0x2b8] sm:$0xff]
        %v3625 = vld [vmem:[%s1005 + $0x2c0] sm:$0xff]
        %v3626 = vld [vmem:[%s1005 + $0x2c8] sm:$0xff]
        %v3627 = vld [vmem:[%s1005 + $0x2d0] sm:$0xff]
        %v3628 = vld [vmem:[%s1005 + $0x2d8] sm:$0xff]
        %v3629 = vld [vmem:[%s1005 + $0x2e0] sm:$0xff]
        %v3630 = vld [vmem:[%s1005 + $0x2e8] sm:$0xff]
        %v3631 = vld [vmem:[%s1005 + $0x2f0] sm:$0xff]
        %v3632 = vld [vmem:[%s1005 + $0x2f8] sm:$0xff]
        %v3633 = vld [vmem:[%s1005 + $0x300] sm:$0xff]
        %v3634 = vld [vmem:[%s1005 + $0x308] sm:$0xff]
        %v3635 = vld [vmem:[%s1005 + $0x310] sm:$0xff]
        %v3636 = vld [vmem:[%s1005 + $0x318] sm:$0xff]
        %v3637 = vld [vmem:[%s1005 + $0x320] sm:$0xff]
        %v3638 = vld [vmem:[%s1005 + $0x328] sm:$0xff]
        %v3639 = vld [vmem:[%s1005 + $0x330] sm:$0xff]
        %v3640 = vld [vmem:[%s1005 + $0x338] sm:$0xff]
        %v3641 = vld [vmem:[%s1005 + $0x340] sm:$0xff]
        %v3642 = vld [vmem:[%s1005 + $0x348] sm:$0xff]
        %v3643 = vld [vmem:[%s1005 + $0x350] sm:$0xff]
        %v3644 = vld [vmem:[%s1005 + $0x358] sm:$0xff]
        %v3645 = vld [vmem:[%s1005 + $0x360] sm:$0xff]
        %v3646 = vld [vmem:[%s1005 + $0x368] sm:$0xff]
        %v3647 = vld [vmem:[%s1005 + $0x370] sm:$0xff]
        %v3648 = vld [vmem:[%s1005 + $0x378] sm:$0xff]
        %v3649 = vld [vmem:[%s1005 + $0x380] sm:$0xff]
        %v3650 = vld [vmem:[%s1005 + $0x388] sm:$0xff]
        %v3651 = vld [vmem:[%s1005 + $0x390] sm:$0xff]
        %v3652 = vld [vmem:[%s1005 + $0x398] sm:$0xff]
        %v3653 = vld [vmem:[%s1005 + $0x3a0] sm:$0xff]
        %v3654 = vld [vmem:[%s1005 + $0x3a8] sm:$0xff]
        %v3655 = vld [vmem:[%s1005 + $0x3b0] sm:$0xff]
        %v3656 = vld [vmem:[%s1005 + $0x3b8] sm:$0xff]
        %v3657 = vld [vmem:[%s1005 + $0x3c0] sm:$0xff]
        %v3658 = vld [vmem:[%s1005 + $0x3c8] sm:$0xff]
        %v3659 = vld [vmem:[%s1005 + $0x3d0] sm:$0xff]
        %v3660 = vld [vmem:[%s1005 + $0x3d8] sm:$0xff]
        %v3661 = vld [vmem:[%s1005 + $0x3e0] sm:$0xff]
        %v3662 = vld [vmem:[%s1005 + $0x3e8] sm:$0xff]
        %v3663 = vld [vmem:[%s1005 + $0x3f0] sm:$0xff]
        %v3664 = vld [vmem:[%s1005 + $0x3f8] sm:$0xff]
        %v3665 = vld [vmem:[%s1005 + $0x400] sm:$0xff]
        %v3666 = vld [vmem:[%s1005 + $0x408] sm:$0xff]
        %v3667 = vld [vmem:[%s1005 + $0x410] sm:$0xff]
        %v3668 = vld [vmem:[%s1005 + $0x418] sm:$0xff]
        %v3669 = vld [vmem:[%s1005 + $0x420] sm:$0xff]
        %v3670 = vld [vmem:[%s1005 + $0x428] sm:$0xff]
        %v3671 = vld [vmem:[%s1005 + $0x430] sm:$0xff]
        %v3672 = vld [vmem:[%s1005 + $0x438] sm:$0xff]
        %v3673 = vld [vmem:[%s1005 + $0x440] sm:$0xff]
        %v3674 = vld [vmem:[%s1005 + $0x448] sm:$0xff]
        %v3675 = vld [vmem:[%s1005 + $0x450] sm:$0xff]
        %v3676 = vld [vmem:[%s1005 + $0x458] sm:$0xff]
        %v3677 = vld [vmem:[%s1005 + $0x460] sm:$0xff]
        %v3678 = vld [vmem:[%s1005 + $0x468] sm:$0xff]
        %v3679 = vld [vmem:[%s1005 + $0x470] sm:$0xff]
        %v3680 = vld [vmem:[%s1005 + $0x478] sm:$0xff]
        %v3681 = vld [vmem:[%s1005 + $0x480] sm:$0xff]
        %v3682 = vld [vmem:[%s1005 + $0x488] sm:$0xff]
        %v3683 = vld [vmem:[%s1005 + $0x490] sm:$0xff]
        %v3684 = vld [vmem:[%s1005 + $0x498] sm:$0xff]
        %v3685 = vld [vmem:[%s1005 + $0x4a0] sm:$0xff]
        %v3686 = vld [vmem:[%s1005 + $0x4a8] sm:$0xff]
        %v3687 = vld [vmem:[%s1005 + $0x4b0] sm:$0xff]
        %v3688 = vld [vmem:[%s1005 + $0x4b8] sm:$0xff]
        %v3689 = vld [vmem:[%s1005 + $0x4c0] sm:$0xff]
        %v3690 = vld [vmem:[%s1005 + $0x4c8] sm:$0xff]
        %v3691 = vld [vmem:[%s1005 + $0x4d0] sm:$0xff]
        %v3692 = vld [vmem:[%s1005 + $0x4d8] sm:$0xff]
        %v3693 = vld [vmem:[%s1005 + $0x4e0] sm:$0xff]
        %v3694 = vld [vmem:[%s1005 + $0x4e8] sm:$0xff]
        %v3695 = vld [vmem:[%s1005 + $0x4f0] sm:$0xff]
        %v3696 = vld [vmem:[%s1005 + $0x4f8] sm:$0xff]
        %v3697 = vld [vmem:[%s1005 + $0x500] sm:$0xff]
        %v3698 = vld [vmem:[%s1005 + $0x508] sm:$0xff]
        %v3699 = vld [vmem:[%s1005 + $0x510] sm:$0xff]
        %v3700 = vld [vmem:[%s1005 + $0x518] sm:$0xff]
        %v3701 = vld [vmem:[%s1005 + $0x520] sm:$0xff]
        %v3702 = vld [vmem:[%s1005 + $0x528] sm:$0xff]
        %v3703 = vld [vmem:[%s1005 + $0x530] sm:$0xff]
        %v3704 = vld [vmem:[%s1005 + $0x538] sm:$0xff]
        %v3705 = vld [vmem:[%s1005 + $0x540] sm:$0xff]
        %v3706 = vld [vmem:[%s1005 + $0x548] sm:$0xff]
        %v3707 = vld [vmem:[%s1005 + $0x550] sm:$0xff]
        %v3708 = vld [vmem:[%s1005 + $0x558] sm:$0xff]
        %v3709 = vld [vmem:[%s1005 + $0x560] sm:$0xff]
        %v3710 = vld [vmem:[%s1005 + $0x568] sm:$0xff]
        %v3711 = vld [vmem:[%s1005 + $0x570] sm:$0xff]
        %v3712 = vld [vmem:[%s1005 + $0x578] sm:$0xff]
        %v3713 = vld [vmem:[%s1005 + $0x580] sm:$0xff]
        %v3714 = vld [vmem:[%s1005 + $0x588] sm:$0xff]
        %v3715 = vld [vmem:[%s1005 + $0x590] sm:$0xff]
        %v3716 = vld [vmem:[%s1005 + $0x598] sm:$0xff]
        %v3717 = vld [vmem:[%s1005 + $0x5a0] sm:$0xff]
        %v3718 = vld [vmem:[%s1005 + $0x5a8] sm:$0xff]
        %v3719 = vld [vmem:[%s1005 + $0x5b0] sm:$0xff]
        %v3720 = vld [vmem:[%s1005 + $0x5b8] sm:$0xff]
        %v3721 = vld [vmem:[%s1005 + $0x5c0] sm:$0xff]
        %v3722 = vld [vmem:[%s1005 + $0x5c8] sm:$0xff]
        %v3723 = vld [vmem:[%s1005 + $0x5d0] sm:$0xff]
        %v3724 = vld [vmem:[%s1005 + $0x5d8] sm:$0xff]
        %v3725 = vld [vmem:[%s1005 + $0x5e0] sm:$0xff]
        %v3726 = vld [vmem:[%s1005 + $0x5e8] sm:$0xff]
        %v3727 = vld [vmem:[%s1005 + $0x5f0] sm:$0xff]
        %v3728 = vld [vmem:[%s1005 + $0x5f8] sm:$0xff]
        %v3729 = vld [vmem:[%s1015] sm:$0xff]
        %v3730 = vld [vmem:[%s1015 + $0x8] sm:$0xff]
        %v3731 = vld [vmem:[%s1015 + $0x10] sm:$0xff]
        %v3732 = vpack.c.bf16 %v3536, %v3536
        %v3736 = vperm.slane %v3729, 0
        %v3737 = vperm.slane %v3729, 1
        %v3738 = vperm.slane %v3729, 2
        %v3739 = vperm.slane %v3729, 3
        %v3740 = vperm.slane %v3729, 4
        %v3741 = vperm.slane %v3729, 5
        %v3742 = vperm.slane %v3729, 6
        %v3743 = vperm.slane %v3729, 7
        %v3744 = vperm.slane %v3730, 0
        %v3745 = vperm.slane %v3730, 1
        %v3746 = vperm.slane %v3730, 2
        %v3747 = vperm.slane %v3730, 3
        %v3748 = vperm.slane %v3730, 4
        %v3749 = vperm.slane %v3730, 5
        %v3750 = vperm.slane %v3730, 6
        %v3751 = vperm.slane %v3730, 7
        %v3752 = vperm.slane %v3731, 0
        %v3753 = vperm.slane %v3731, 1
        %v3754 = vperm.slane %v3731, 2
        %v3755 = vperm.slane %v3731, 3
        %v3756 = vperm.slane %v3731, 4
        %v3757 = vperm.slane %v3731, 5
        %v3758 = vperm.slane %v3731, 6
        %v3759 = vperm.slane %v3731, 7
        %v3976 = vunpack.c.l.b16 %v3537
        %v3977 = vunpack.c.h.b16 %v3537
        %v3978 = vunpack.c.l.b16 %v3538
        %v3979 = vunpack.c.h.b16 %v3538
        %v3980 = vunpack.c.l.b16 %v3539
        %v3981 = vunpack.c.h.b16 %v3539
        %v3982 = vunpack.c.l.b16 %v3540
        %v3983 = vunpack.c.h.b16 %v3540
        %v3984 = vunpack.c.l.b16 %v3541
        %v3985 = vunpack.c.h.b16 %v3541
        %v3986 = vunpack.c.l.b16 %v3542
        %v3987 = vunpack.c.h.b16 %v3542
        %v3988 = vunpack.c.l.b16 %v3543
        %v3989 = vunpack.c.h.b16 %v3543
        %v3990 = vunpack.c.l.b16 %v3544
        %v3991 = vunpack.c.h.b16 %v3544
        %v3992 = vunpack.c.l.b16 %v3545
        %v3993 = vunpack.c.h.b16 %v3545
        %v3994 = vunpack.c.l.b16 %v3546
        %v3995 = vunpack.c.h.b16 %v3546
        %v3996 = vunpack.c.l.b16 %v3547
        %v3997 = vunpack.c.h.b16 %v3547
        %v3998 = vunpack.c.l.b16 %v3548
        %v3999 = vunpack.c.h.b16 %v3548
        %v4000 = vunpack.c.l.b16 %v3549
        %v4001 = vunpack.c.h.b16 %v3549
        %v4002 = vunpack.c.l.b16 %v3550
        %v4003 = vunpack.c.h.b16 %v3550
        %v4004 = vunpack.c.l.b16 %v3551
        %v4005 = vunpack.c.h.b16 %v3551
        %v4006 = vunpack.c.l.b16 %v3552
        %v4007 = vunpack.c.h.b16 %v3552
        %v4008 = vunpack.c.l.b16 %v3553
        %v4009 = vunpack.c.h.b16 %v3553
        %v4010 = vunpack.c.l.b16 %v3554
        %v4011 = vunpack.c.h.b16 %v3554
        %v4012 = vunpack.c.l.b16 %v3555
        %v4013 = vunpack.c.h.b16 %v3555
        %v4014 = vunpack.c.l.b16 %v3556
        %v4015 = vunpack.c.h.b16 %v3556
        %v4016 = vunpack.c.l.b16 %v3557
        %v4017 = vunpack.c.h.b16 %v3557
        %v4018 = vunpack.c.l.b16 %v3558
        %v4019 = vunpack.c.h.b16 %v3558
        %v4020 = vunpack.c.l.b16 %v3559
        %v4021 = vunpack.c.h.b16 %v3559
        %v4022 = vunpack.c.l.b16 %v3560
        %v4023 = vunpack.c.h.b16 %v3560
        %v4024 = vunpack.c.l.b16 %v3561
        %v4025 = vunpack.c.h.b16 %v3561
        %v4026 = vunpack.c.l.b16 %v3562
        %v4027 = vunpack.c.h.b16 %v3562
        %v4028 = vunpack.c.l.b16 %v3563
        %v4029 = vunpack.c.h.b16 %v3563
        %v4030 = vunpack.c.l.b16 %v3564
        %v4031 = vunpack.c.h.b16 %v3564
        %v4032 = vunpack.c.l.b16 %v3565
        %v4033 = vunpack.c.h.b16 %v3565
        %v4034 = vunpack.c.l.b16 %v3566
        %v4035 = vunpack.c.h.b16 %v3566
        %v4036 = vunpack.c.l.b16 %v3567
        %v4037 = vunpack.c.h.b16 %v3567
        %v4038 = vunpack.c.l.b16 %v3568
        %v4039 = vunpack.c.h.b16 %v3568
        %v4040 = vunpack.c.l.b16 %v3569
        %v4041 = vunpack.c.h.b16 %v3569
        %v4042 = vunpack.c.l.b16 %v3570
        %v4043 = vunpack.c.h.b16 %v3570
        %v4044 = vunpack.c.l.b16 %v3571
        %v4045 = vunpack.c.h.b16 %v3571
        %v4046 = vunpack.c.l.b16 %v3572
        %v4047 = vunpack.c.h.b16 %v3572
        %v4048 = vunpack.c.l.b16 %v3573
        %v4049 = vunpack.c.h.b16 %v3573
        %v4050 = vunpack.c.l.b16 %v3574
        %v4051 = vunpack.c.h.b16 %v3574
        %v4052 = vunpack.c.l.b16 %v3575
        %v4053 = vunpack.c.h.b16 %v3575
        %v4054 = vunpack.c.l.b16 %v3576
        %v4055 = vunpack.c.h.b16 %v3576
        %v4056 = vunpack.c.l.b16 %v3577
        %v4057 = vunpack.c.h.b16 %v3577
        %v4058 = vunpack.c.l.b16 %v3578
        %v4059 = vunpack.c.h.b16 %v3578
        %v4060 = vunpack.c.l.b16 %v3579
        %v4061 = vunpack.c.h.b16 %v3579
        %v4062 = vunpack.c.l.b16 %v3580
        %v4063 = vunpack.c.h.b16 %v3580
        %v4064 = vunpack.c.l.b16 %v3581
        %v4065 = vunpack.c.h.b16 %v3581
        %v4066 = vunpack.c.l.b16 %v3582
        %v4067 = vunpack.c.h.b16 %v3582
        %v4068 = vunpack.c.l.b16 %v3583
        %v4069 = vunpack.c.h.b16 %v3583
        %v4070 = vunpack.c.l.b16 %v3584
        %v4071 = vunpack.c.h.b16 %v3584
        %v4072 = vunpack.c.l.b16 %v3585
        %v4073 = vunpack.c.h.b16 %v3585
        %v4074 = vunpack.c.l.b16 %v3586
        %v4075 = vunpack.c.h.b16 %v3586
        %v4076 = vunpack.c.l.b16 %v3587
        %v4077 = vunpack.c.h.b16 %v3587
        %v4078 = vunpack.c.l.b16 %v3588
        %v4079 = vunpack.c.h.b16 %v3588
        %v4080 = vunpack.c.l.b16 %v3589
        %v4081 = vunpack.c.h.b16 %v3589
        %v4082 = vunpack.c.l.b16 %v3590
        %v4083 = vunpack.c.h.b16 %v3590
        %v4084 = vunpack.c.l.b16 %v3591
        %v4085 = vunpack.c.h.b16 %v3591
        %v4086 = vunpack.c.l.b16 %v3592
        %v4087 = vunpack.c.h.b16 %v3592
        %v4088 = vunpack.c.l.b16 %v3593
        %v4089 = vunpack.c.h.b16 %v3593
        %v4090 = vunpack.c.l.b16 %v3594
        %v4091 = vunpack.c.h.b16 %v3594
        %v4092 = vunpack.c.l.b16 %v3595
        %v4093 = vunpack.c.h.b16 %v3595
        %v4094 = vunpack.c.l.b16 %v3596
        %v4095 = vunpack.c.h.b16 %v3596
        %v4096 = vunpack.c.l.b16 %v3597
        %v4097 = vunpack.c.h.b16 %v3597
        %v4098 = vunpack.c.l.b16 %v3598
        %v4099 = vunpack.c.h.b16 %v3598
        %v4100 = vunpack.c.l.b16 %v3599
        %v4101 = vunpack.c.h.b16 %v3599
        %v4102 = vunpack.c.l.b16 %v3600
        %v4103 = vunpack.c.h.b16 %v3600
        %v4104 = vunpack.c.l.b16 %v3601
        %v4105 = vunpack.c.h.b16 %v3601
        %v4106 = vunpack.c.l.b16 %v3602
        %v4107 = vunpack.c.h.b16 %v3602
        %v4108 = vunpack.c.l.b16 %v3603
        %v4109 = vunpack.c.h.b16 %v3603
        %v4110 = vunpack.c.l.b16 %v3604
        %v4111 = vunpack.c.h.b16 %v3604
        %v4112 = vunpack.c.l.b16 %v3605
        %v4113 = vunpack.c.h.b16 %v3605
        %v4114 = vunpack.c.l.b16 %v3606
        %v4115 = vunpack.c.h.b16 %v3606
        %v4116 = vunpack.c.l.b16 %v3607
        %v4117 = vunpack.c.h.b16 %v3607
        %v4118 = vunpack.c.l.b16 %v3608
        %v4119 = vunpack.c.h.b16 %v3608
        %v4120 = vunpack.c.l.b16 %v3609
        %v4121 = vunpack.c.h.b16 %v3609
        %v4122 = vunpack.c.l.b16 %v3610
        %v4123 = vunpack.c.h.b16 %v3610
        %v4124 = vunpack.c.l.b16 %v3611
        %v4125 = vunpack.c.h.b16 %v3611
        %v4126 = vunpack.c.l.b16 %v3612
        %v4127 = vunpack.c.h.b16 %v3612
        %v4128 = vunpack.c.l.b16 %v3613
        %v4129 = vunpack.c.h.b16 %v3613
        %v4130 = vunpack.c.l.b16 %v3614
        %v4131 = vunpack.c.h.b16 %v3614
        %v4132 = vunpack.c.l.b16 %v3615
        %v4133 = vunpack.c.h.b16 %v3615
        %v4134 = vunpack.c.l.b16 %v3616
        %v4135 = vunpack.c.h.b16 %v3616
        %v4136 = vunpack.c.l.b16 %v3617
        %v4137 = vunpack.c.h.b16 %v3617
        %v4138 = vunpack.c.l.b16 %v3618
        %v4139 = vunpack.c.h.b16 %v3618
        %v4140 = vunpack.c.l.b16 %v3619
        %v4141 = vunpack.c.h.b16 %v3619
        %v4142 = vunpack.c.l.b16 %v3620
        %v4143 = vunpack.c.h.b16 %v3620
        %v4144 = vunpack.c.l.b16 %v3621
        %v4145 = vunpack.c.h.b16 %v3621
        %v4146 = vunpack.c.l.b16 %v3622
        %v4147 = vunpack.c.h.b16 %v3622
        %v4148 = vunpack.c.l.b16 %v3623
        %v4149 = vunpack.c.h.b16 %v3623
        %v4150 = vunpack.c.l.b16 %v3624
        %v4151 = vunpack.c.h.b16 %v3624
        %v4152 = vunpack.c.l.b16 %v3625
        %v4153 = vunpack.c.h.b16 %v3625
        %v4154 = vunpack.c.l.b16 %v3626
        %v4155 = vunpack.c.h.b16 %v3626
        %v4156 = vunpack.c.l.b16 %v3627
        %v4157 = vunpack.c.h.b16 %v3627
        %v4158 = vunpack.c.l.b16 %v3628
        %v4159 = vunpack.c.h.b16 %v3628
        %v4160 = vunpack.c.l.b16 %v3629
        %v4161 = vunpack.c.h.b16 %v3629
        %v4162 = vunpack.c.l.b16 %v3630
        %v4163 = vunpack.c.h.b16 %v3630
        %v4164 = vunpack.c.l.b16 %v3631
        %v4165 = vunpack.c.h.b16 %v3631
        %v4166 = vunpack.c.l.b16 %v3632
        %v4167 = vunpack.c.h.b16 %v3632
        %v4168 = vunpack.c.l.b16 %v3633
        %v4169 = vunpack.c.h.b16 %v3633
        %v4170 = vunpack.c.l.b16 %v3634
        %v4171 = vunpack.c.h.b16 %v3634
        %v4172 = vunpack.c.l.b16 %v3635
        %v4173 = vunpack.c.h.b16 %v3635
        %v4174 = vunpack.c.l.b16 %v3636
        %v4175 = vunpack.c.h.b16 %v3636
        %v4176 = vunpack.c.l.b16 %v3637
        %v4177 = vunpack.c.h.b16 %v3637
        %v4178 = vunpack.c.l.b16 %v3638
        %v4179 = vunpack.c.h.b16 %v3638
        %v4180 = vunpack.c.l.b16 %v3639
        %v4181 = vunpack.c.h.b16 %v3639
        %v4182 = vunpack.c.l.b16 %v3640
        %v4183 = vunpack.c.h.b16 %v3640
        %v4184 = vunpack.c.l.b16 %v3641
        %v4185 = vunpack.c.h.b16 %v3641
        %v4186 = vunpack.c.l.b16 %v3642
        %v4187 = vunpack.c.h.b16 %v3642
        %v4188 = vunpack.c.l.b16 %v3643
        %v4189 = vunpack.c.h.b16 %v3643
        %v4190 = vunpack.c.l.b16 %v3644
        %v4191 = vunpack.c.h.b16 %v3644
        %v4192 = vunpack.c.l.b16 %v3645
        %v4193 = vunpack.c.h.b16 %v3645
        %v4194 = vunpack.c.l.b16 %v3646
        %v4195 = vunpack.c.h.b16 %v3646
        %v4196 = vunpack.c.l.b16 %v3647
        %v4197 = vunpack.c.h.b16 %v3647
        %v4198 = vunpack.c.l.b16 %v3648
        %v4199 = vunpack.c.h.b16 %v3648
        %v4200 = vunpack.c.l.b16 %v3649
        %v4201 = vunpack.c.h.b16 %v3649
        %v4202 = vunpack.c.l.b16 %v3650
        %v4203 = vunpack.c.h.b16 %v3650
        %v4204 = vunpack.c.l.b16 %v3651
        %v4205 = vunpack.c.h.b16 %v3651
        %v4206 = vunpack.c.l.b16 %v3652
        %v4207 = vunpack.c.h.b16 %v3652
        %v4208 = vunpack.c.l.b16 %v3653
        %v4209 = vunpack.c.h.b16 %v3653
        %v4210 = vunpack.c.l.b16 %v3654
        %v4211 = vunpack.c.h.b16 %v3654
        %v4212 = vunpack.c.l.b16 %v3655
        %v4213 = vunpack.c.h.b16 %v3655
        %v4214 = vunpack.c.l.b16 %v3656
        %v4215 = vunpack.c.h.b16 %v3656
        %v4216 = vunpack.c.l.b16 %v3657
        %v4217 = vunpack.c.h.b16 %v3657
        %v4218 = vunpack.c.l.b16 %v3658
        %v4219 = vunpack.c.h.b16 %v3658
        %v4220 = vunpack.c.l.b16 %v3659
        %v4221 = vunpack.c.h.b16 %v3659
        %v4222 = vunpack.c.l.b16 %v3660
        %v4223 = vunpack.c.h.b16 %v3660
        %v4224 = vunpack.c.l.b16 %v3661
        %v4225 = vunpack.c.h.b16 %v3661
        %v4226 = vunpack.c.l.b16 %v3662
        %v4227 = vunpack.c.h.b16 %v3662
        %v4228 = vunpack.c.l.b16 %v3663
        %v4229 = vunpack.c.h.b16 %v3663
        %v4230 = vunpack.c.l.b16 %v3664
        %v4231 = vunpack.c.h.b16 %v3664
        %v4232 = vunpack.c.l.b16 %v3665
        %v4233 = vunpack.c.h.b16 %v3665
        %v4234 = vunpack.c.l.b16 %v3666
        %v4235 = vunpack.c.h.b16 %v3666
        %v4236 = vunpack.c.l.b16 %v3667
        %v4237 = vunpack.c.h.b16 %v3667
        %v4238 = vunpack.c.l.b16 %v3668
        %v4239 = vunpack.c.h.b16 %v3668
        %v4240 = vunpack.c.l.b16 %v3669
        %v4241 = vunpack.c.h.b16 %v3669
        %v4242 = vunpack.c.l.b16 %v3670
        %v4243 = vunpack.c.h.b16 %v3670
        %v4244 = vunpack.c.l.b16 %v3671
        %v4245 = vunpack.c.h.b16 %v3671
        %v4246 = vunpack.c.l.b16 %v3672
        %v4247 = vunpack.c.h.b16 %v3672
        %v4248 = vunpack.c.l.b16 %v3673
        %v4249 = vunpack.c.h.b16 %v3673
        %v4250 = vunpack.c.l.b16 %v3674
        %v4251 = vunpack.c.h.b16 %v3674
        %v4252 = vunpack.c.l.b16 %v3675
        %v4253 = vunpack.c.h.b16 %v3675
        %v4254 = vunpack.c.l.b16 %v3676
        %v4255 = vunpack.c.h.b16 %v3676
        %v4256 = vunpack.c.l.b16 %v3677
        %v4257 = vunpack.c.h.b16 %v3677
        %v4258 = vunpack.c.l.b16 %v3678
        %v4259 = vunpack.c.h.b16 %v3678
        %v4260 = vunpack.c.l.b16 %v3679
        %v4261 = vunpack.c.h.b16 %v3679
        %v4262 = vunpack.c.l.b16 %v3680
        %v4263 = vunpack.c.h.b16 %v3680
        %v4264 = vunpack.c.l.b16 %v3681
        %v4265 = vunpack.c.h.b16 %v3681
        %v4266 = vunpack.c.l.b16 %v3682
        %v4267 = vunpack.c.h.b16 %v3682
        %v4268 = vunpack.c.l.b16 %v3683
        %v4269 = vunpack.c.h.b16 %v3683
        %v4270 = vunpack.c.l.b16 %v3684
        %v4271 = vunpack.c.h.b16 %v3684
        %v4272 = vunpack.c.l.b16 %v3685
        %v4273 = vunpack.c.h.b16 %v3685
        %v4274 = vunpack.c.l.b16 %v3686
        %v4275 = vunpack.c.h.b16 %v3686
        %v4276 = vunpack.c.l.b16 %v3687
        %v4277 = vunpack.c.h.b16 %v3687
        %v4278 = vunpack.c.l.b16 %v3688
        %v4279 = vunpack.c.h.b16 %v3688
        %v4280 = vunpack.c.l.b16 %v3689
        %v4281 = vunpack.c.h.b16 %v3689
        %v4282 = vunpack.c.l.b16 %v3690
        %v4283 = vunpack.c.h.b16 %v3690
        %v4284 = vunpack.c.l.b16 %v3691
        %v4285 = vunpack.c.h.b16 %v3691
        %v4286 = vunpack.c.l.b16 %v3692
        %v4287 = vunpack.c.h.b16 %v3692
        %v4288 = vunpack.c.l.b16 %v3693
        %v4289 = vunpack.c.h.b16 %v3693
        %v4290 = vunpack.c.l.b16 %v3694
        %v4291 = vunpack.c.h.b16 %v3694
        %v4292 = vunpack.c.l.b16 %v3695
        %v4293 = vunpack.c.h.b16 %v3695
        %v4294 = vunpack.c.l.b16 %v3696
        %v4295 = vunpack.c.h.b16 %v3696
        %v4296 = vunpack.c.l.b16 %v3697
        %v4297 = vunpack.c.h.b16 %v3697
        %v4298 = vunpack.c.l.b16 %v3698
        %v4299 = vunpack.c.h.b16 %v3698
        %v4300 = vunpack.c.l.b16 %v3699
        %v4301 = vunpack.c.h.b16 %v3699
        %v4302 = vunpack.c.l.b16 %v3700
        %v4303 = vunpack.c.h.b16 %v3700
        %v4304 = vunpack.c.l.b16 %v3701
        %v4305 = vunpack.c.h.b16 %v3701
        %v4306 = vunpack.c.l.b16 %v3702
        %v4307 = vunpack.c.h.b16 %v3702
        %v4308 = vunpack.c.l.b16 %v3703
        %v4309 = vunpack.c.h.b16 %v3703
        %v4310 = vunpack.c.l.b16 %v3704
        %v4311 = vunpack.c.h.b16 %v3704
        %v4312 = vunpack.c.l.b16 %v3705
        %v4313 = vunpack.c.h.b16 %v3705
        %v4314 = vunpack.c.l.b16 %v3706
        %v4315 = vunpack.c.h.b16 %v3706
        %v4316 = vunpack.c.l.b16 %v3707
        %v4317 = vunpack.c.h.b16 %v3707
        %v4318 = vunpack.c.l.b16 %v3708
        %v4319 = vunpack.c.h.b16 %v3708
        %v4320 = vunpack.c.l.b16 %v3709
        %v4321 = vunpack.c.h.b16 %v3709
        %v4322 = vunpack.c.l.b16 %v3710
        %v4323 = vunpack.c.h.b16 %v3710
        %v4324 = vunpack.c.l.b16 %v3711
        %v4325 = vunpack.c.h.b16 %v3711
        %v4326 = vunpack.c.l.b16 %v3712
        %v4327 = vunpack.c.h.b16 %v3712
        %v4328 = vunpack.c.l.b16 %v3713
        %v4329 = vunpack.c.h.b16 %v3713
        %v4330 = vunpack.c.l.b16 %v3714
        %v4331 = vunpack.c.h.b16 %v3714
        %v4332 = vunpack.c.l.b16 %v3715
        %v4333 = vunpack.c.h.b16 %v3715
        %v4334 = vunpack.c.l.b16 %v3716
        %v4335 = vunpack.c.h.b16 %v3716
        %v4336 = vunpack.c.l.b16 %v3717
        %v4337 = vunpack.c.h.b16 %v3717
        %v4338 = vunpack.c.l.b16 %v3718
        %v4339 = vunpack.c.h.b16 %v3718
        %v4340 = vunpack.c.l.b16 %v3719
        %v4341 = vunpack.c.h.b16 %v3719
        %v4342 = vunpack.c.l.b16 %v3720
        %v4343 = vunpack.c.h.b16 %v3720
        %v4344 = vunpack.c.l.b16 %v3721
        %v4345 = vunpack.c.h.b16 %v3721
        %v4346 = vunpack.c.l.b16 %v3722
        %v4347 = vunpack.c.h.b16 %v3722
        %v4348 = vunpack.c.l.b16 %v3723
        %v4349 = vunpack.c.h.b16 %v3723
        %v4350 = vunpack.c.l.b16 %v3724
        %v4351 = vunpack.c.h.b16 %v3724
        %v4352 = vunpack.c.l.b16 %v3725
        %v4353 = vunpack.c.h.b16 %v3725
        %v4354 = vunpack.c.l.b16 %v3726
        %v4355 = vunpack.c.h.b16 %v3726
        %v4356 = vunpack.c.l.b16 %v3727
        %v4357 = vunpack.c.h.b16 %v3727
        %v4358 = vunpack.c.l.b16 %v3728
        %v4359 = vunpack.c.h.b16 %v3728
        %v4360 = vpack.c.b16 %v4000, %v3976
        %v4361 = vpack.c.b16 %v4001, %v3977
        %v4362 = vpack.c.b16 %v4002, %v3978
        %v4363 = vpack.c.b16 %v4003, %v3979
        %v4364 = vpack.c.b16 %v4004, %v3980
        %v4365 = vpack.c.b16 %v4005, %v3981
        %v4366 = vpack.c.b16 %v4006, %v3982
        %v4367 = vpack.c.b16 %v4007, %v3983
        %v4368 = vpack.c.b16 %v4008, %v3984
        %v4369 = vpack.c.b16 %v4009, %v3985
        %v4370 = vpack.c.b16 %v4010, %v3986
        %v4371 = vpack.c.b16 %v4011, %v3987
        %v4372 = vpack.c.b16 %v4012, %v3988
        %v4373 = vpack.c.b16 %v4013, %v3989
        %v4374 = vpack.c.b16 %v4014, %v3990
        %v4375 = vpack.c.b16 %v4015, %v3991
        %v4376 = vpack.c.b16 %v4016, %v3992
        %v4377 = vpack.c.b16 %v4017, %v3993
        %v4378 = vpack.c.b16 %v4018, %v3994
        %v4379 = vpack.c.b16 %v4019, %v3995
        %v4380 = vpack.c.b16 %v4020, %v3996
        %v4381 = vpack.c.b16 %v4021, %v3997
        %v4382 = vpack.c.b16 %v4022, %v3998
        %v4383 = vpack.c.b16 %v4023, %v3999
        %v4384 = vpack.c.b16 %v4048, %v4024
        %v4385 = vpack.c.b16 %v4049, %v4025
        %v4386 = vpack.c.b16 %v4050, %v4026
        %v4387 = vpack.c.b16 %v4051, %v4027
        %v4388 = vpack.c.b16 %v4052, %v4028
        %v4389 = vpack.c.b16 %v4053, %v4029
        %v4390 = vpack.c.b16 %v4054, %v4030
        %v4391 = vpack.c.b16 %v4055, %v4031
        %v4392 = vpack.c.b16 %v4056, %v4032
        %v4393 = vpack.c.b16 %v4057, %v4033
        %v4394 = vpack.c.b16 %v4058, %v4034
        %v4395 = vpack.c.b16 %v4059, %v4035
        %v4396 = vpack.c.b16 %v4060, %v4036
        %v4397 = vpack.c.b16 %v4061, %v4037
        %v4398 = vpack.c.b16 %v4062, %v4038
        %v4399 = vpack.c.b16 %v4063, %v4039
        %v4400 = vpack.c.b16 %v4064, %v4040
        %v4401 = vpack.c.b16 %v4065, %v4041
        %v4402 = vpack.c.b16 %v4066, %v4042
        %v4403 = vpack.c.b16 %v4067, %v4043
        %v4404 = vpack.c.b16 %v4068, %v4044
        %v4405 = vpack.c.b16 %v4069, %v4045
        %v4406 = vpack.c.b16 %v4070, %v4046
        %v4407 = vpack.c.b16 %v4071, %v4047
        %v4408 = vpack.c.b16 %v4096, %v4072
        %v4409 = vpack.c.b16 %v4097, %v4073
        %v4410 = vpack.c.b16 %v4098, %v4074
        %v4411 = vpack.c.b16 %v4099, %v4075
        %v4412 = vpack.c.b16 %v4100, %v4076
        %v4413 = vpack.c.b16 %v4101, %v4077
        %v4414 = vpack.c.b16 %v4102, %v4078
        %v4415 = vpack.c.b16 %v4103, %v4079
        %v4416 = vpack.c.b16 %v4104, %v4080
        %v4417 = vpack.c.b16 %v4105, %v4081
        %v4418 = vpack.c.b16 %v4106, %v4082
        %v4419 = vpack.c.b16 %v4107, %v4083
        %v4420 = vpack.c.b16 %v4108, %v4084
        %v4421 = vpack.c.b16 %v4109, %v4085
        %v4422 = vpack.c.b16 %v4110, %v4086
        %v4423 = vpack.c.b16 %v4111, %v4087
        %v4424 = vpack.c.b16 %v4112, %v4088
        %v4425 = vpack.c.b16 %v4113, %v4089
        %v4426 = vpack.c.b16 %v4114, %v4090
        %v4427 = vpack.c.b16 %v4115, %v4091
        %v4428 = vpack.c.b16 %v4116, %v4092
        %v4429 = vpack.c.b16 %v4117, %v4093
        %v4430 = vpack.c.b16 %v4118, %v4094
        %v4431 = vpack.c.b16 %v4119, %v4095
        %v4432 = vpack.c.b16 %v4144, %v4120
        %v4433 = vpack.c.b16 %v4145, %v4121
        %v4434 = vpack.c.b16 %v4146, %v4122
        %v4435 = vpack.c.b16 %v4147, %v4123
        %v4436 = vpack.c.b16 %v4148, %v4124
        %v4437 = vpack.c.b16 %v4149, %v4125
        %v4438 = vpack.c.b16 %v4150, %v4126
        %v4439 = vpack.c.b16 %v4151, %v4127
        %v4440 = vpack.c.b16 %v4152, %v4128
        %v4441 = vpack.c.b16 %v4153, %v4129
        %v4442 = vpack.c.b16 %v4154, %v4130
        %v4443 = vpack.c.b16 %v4155, %v4131
        %v4444 = vpack.c.b16 %v4156, %v4132
        %v4445 = vpack.c.b16 %v4157, %v4133
        %v4446 = vpack.c.b16 %v4158, %v4134
        %v4447 = vpack.c.b16 %v4159, %v4135
        %v4448 = vpack.c.b16 %v4160, %v4136
        %v4449 = vpack.c.b16 %v4161, %v4137
        %v4450 = vpack.c.b16 %v4162, %v4138
        %v4451 = vpack.c.b16 %v4163, %v4139
        %v4452 = vpack.c.b16 %v4164, %v4140
        %v4453 = vpack.c.b16 %v4165, %v4141
        %v4454 = vpack.c.b16 %v4166, %v4142
        %v4455 = vpack.c.b16 %v4167, %v4143
        %v4456 = vpack.c.b16 %v4192, %v4168
        %v4457 = vpack.c.b16 %v4193, %v4169
        %v4458 = vpack.c.b16 %v4194, %v4170
        %v4459 = vpack.c.b16 %v4195, %v4171
        %v4460 = vpack.c.b16 %v4196, %v4172
        %v4461 = vpack.c.b16 %v4197, %v4173
        %v4462 = vpack.c.b16 %v4198, %v4174
        %v4463 = vpack.c.b16 %v4199, %v4175
        %v4464 = vpack.c.b16 %v4200, %v4176
        %v4465 = vpack.c.b16 %v4201, %v4177
        %v4466 = vpack.c.b16 %v4202, %v4178
        %v4467 = vpack.c.b16 %v4203, %v4179
        %v4468 = vpack.c.b16 %v4204, %v4180
        %v4469 = vpack.c.b16 %v4205, %v4181
        %v4470 = vpack.c.b16 %v4206, %v4182
        %v4471 = vpack.c.b16 %v4207, %v4183
        %v4472 = vpack.c.b16 %v4208, %v4184
        %v4473 = vpack.c.b16 %v4209, %v4185
        %v4474 = vpack.c.b16 %v4210, %v4186
        %v4475 = vpack.c.b16 %v4211, %v4187
        %v4476 = vpack.c.b16 %v4212, %v4188
        %v4477 = vpack.c.b16 %v4213, %v4189
        %v4478 = vpack.c.b16 %v4214, %v4190
        %v4479 = vpack.c.b16 %v4215, %v4191
        %v4480 = vpack.c.b16 %v4240, %v4216
        %v4481 = vpack.c.b16 %v4241, %v4217
        %v4482 = vpack.c.b16 %v4242, %v4218
        %v4483 = vpack.c.b16 %v4243, %v4219
        %v4484 = vpack.c.b16 %v4244, %v4220
        %v4485 = vpack.c.b16 %v4245, %v4221
        %v4486 = vpack.c.b16 %v4246, %v4222
        %v4487 = vpack.c.b16 %v4247, %v4223
        %v4488 = vpack.c.b16 %v4248, %v4224
        %v4489 = vpack.c.b16 %v4249, %v4225
        %v4490 = vpack.c.b16 %v4250, %v4226
        %v4491 = vpack.c.b16 %v4251, %v4227
        %v4492 = vpack.c.b16 %v4252, %v4228
        %v4493 = vpack.c.b16 %v4253, %v4229
        %v4494 = vpack.c.b16 %v4254, %v4230
        %v4495 = vpack.c.b16 %v4255, %v4231
        %v4496 = vpack.c.b16 %v4256, %v4232
        %v4497 = vpack.c.b16 %v4257, %v4233
        %v4498 = vpack.c.b16 %v4258, %v4234
        %v4499 = vpack.c.b16 %v4259, %v4235
        %v4500 = vpack.c.b16 %v4260, %v4236
        %v4501 = vpack.c.b16 %v4261, %v4237
        %v4502 = vpack.c.b16 %v4262, %v4238
        %v4503 = vpack.c.b16 %v4263, %v4239
        %v4504 = vpack.c.b16 %v4288, %v4264
        %v4505 = vpack.c.b16 %v4289, %v4265
        %v4506 = vpack.c.b16 %v4290, %v4266
        %v4507 = vpack.c.b16 %v4291, %v4267
        %v4508 = vpack.c.b16 %v4292, %v4268
        %v4509 = vpack.c.b16 %v4293, %v4269
        %v4510 = vpack.c.b16 %v4294, %v4270
        %v4511 = vpack.c.b16 %v4295, %v4271
        %v4512 = vpack.c.b16 %v4296, %v4272
        %v4513 = vpack.c.b16 %v4297, %v4273
        %v4514 = vpack.c.b16 %v4298, %v4274
        %v4515 = vpack.c.b16 %v4299, %v4275
        %v4516 = vpack.c.b16 %v4300, %v4276
        %v4517 = vpack.c.b16 %v4301, %v4277
        %v4518 = vpack.c.b16 %v4302, %v4278
        %v4519 = vpack.c.b16 %v4303, %v4279
        %v4520 = vpack.c.b16 %v4304, %v4280
        %v4521 = vpack.c.b16 %v4305, %v4281
        %v4522 = vpack.c.b16 %v4306, %v4282
        %v4523 = vpack.c.b16 %v4307, %v4283
        %v4524 = vpack.c.b16 %v4308, %v4284
        %v4525 = vpack.c.b16 %v4309, %v4285
        %v4526 = vpack.c.b16 %v4310, %v4286
        %v4527 = vpack.c.b16 %v4311, %v4287
        %v4528 = vpack.c.b16 %v4336, %v4312
        %v4529 = vpack.c.b16 %v4337, %v4313
        %v4530 = vpack.c.b16 %v4338, %v4314
        %v4531 = vpack.c.b16 %v4339, %v4315
        %v4532 = vpack.c.b16 %v4340, %v4316
        %v4533 = vpack.c.b16 %v4341, %v4317
        %v4534 = vpack.c.b16 %v4342, %v4318
        %v4535 = vpack.c.b16 %v4343, %v4319
        %v4536 = vpack.c.b16 %v4344, %v4320
        %v4537 = vpack.c.b16 %v4345, %v4321
        %v4538 = vpack.c.b16 %v4346, %v4322
        %v4539 = vpack.c.b16 %v4347, %v4323
        %v4540 = vpack.c.b16 %v4348, %v4324
        %v4541 = vpack.c.b16 %v4349, %v4325
        %v4542 = vpack.c.b16 %v4350, %v4326
        %v4543 = vpack.c.b16 %v4351, %v4327
        %v4544 = vpack.c.b16 %v4352, %v4328
        %v4545 = vpack.c.b16 %v4353, %v4329
        %v4546 = vpack.c.b16 %v4354, %v4330
        %v4547 = vpack.c.b16 %v4355, %v4331
        %v4548 = vpack.c.b16 %v4356, %v4332
        %v4549 = vpack.c.b16 %v4357, %v4333
        %v4550 = vpack.c.b16 %v4358, %v4334
        %v4551 = vpack.c.b16 %v4359, %v4335
        %4744 = vmatpush.bf16.msra.mxu0 %v4528
        %4745 = vmatpush.bf16.msra.mxu0 %v4504
        %4746 = vmatpush.bf16.msra.mxu0 %v4480
        %4747 = vmatpush.bf16.msra.mxu0 %v4456
        %4748 = vmatpush.bf16.msra.mxu0 %v4432
        %4749 = vmatpush.bf16.msra.mxu0 %v4408
        %4750 = vmatpush.bf16.msra.mxu0 %v4384
        %4751 = vmatpush.bf16.msra.mxu0 %v4360
        %4752 = vmatmul.bf16.gmra.mxu0 %v3732
        %v4753 = vpop.f32.mrf.mxu0
        %v4754 = vadd.f32 %v3736, %v4753
        %v4755 = vpop.f32.mrf.mxu0
        %4756 = vdwg.mxu0
        %4757 = vmatpush.bf16.msra.mxu0 %v4529
        %4758 = vmatpush.bf16.msra.mxu0 %v4505
        %4759 = vmatpush.bf16.msra.mxu0 %v4481
        %4760 = vmatpush.bf16.msra.mxu0 %v4457
        %4761 = vmatpush.bf16.msra.mxu0 %v4433
        %4762 = vmatpush.bf16.msra.mxu0 %v4409
        %4763 = vmatpush.bf16.msra.mxu0 %v4385
        %4764 = vmatpush.bf16.msra.mxu0 %v4361
        %4765 = vmatmul.bf16.gmra.mxu0 %v3732
        %v4766 = vpop.f32.mrf.mxu0
        %v4767 = vadd.f32 %v3737, %v4766
        %v4768 = vpop.f32.mrf.mxu0
        %4769 = vdwg.mxu0
        %4770 = vmatpush.bf16.msra.mxu0 %v4530
        %4771 = vmatpush.bf16.msra.mxu0 %v4506
        %4772 = vmatpush.bf16.msra.mxu0 %v4482
        %4773 = vmatpush.bf16.msra.mxu0 %v4458
        %4774 = vmatpush.bf16.msra.mxu0 %v4434
        %4775 = vmatpush.bf16.msra.mxu0 %v4410
        %4776 = vmatpush.bf16.msra.mxu0 %v4386
        %4777 = vmatpush.bf16.msra.mxu0 %v4362
        %4778 = vmatmul.bf16.gmra.mxu0 %v3732
        %v4779 = vpop.f32.mrf.mxu0
        %v4780 = vadd.f32 %v3738, %v4779
        %v4781 = vpop.f32.mrf.mxu0
        %4782 = vdwg.mxu0
        %4783 = vmatpush.bf16.msra.mxu0 %v4531
        %4784 = vmatpush.bf16.msra.mxu0 %v4507
        %4785 = vmatpush.bf16.msra.mxu0 %v4483
        %4786 = vmatpush.bf16.msra.mxu0 %v4459
        %4787 = vmatpush.bf16.msra.mxu0 %v4435
        %4788 = vmatpush.bf16.msra.mxu0 %v4411
        %4789 = vmatpush.bf16.msra.mxu0 %v4387
        %4790 = vmatpush.bf16.msra.mxu0 %v4363
        %4791 = vmatmul.bf16.gmra.mxu0 %v3732
        %v4792 = vpop.f32.mrf.mxu0
        %v4793 = vadd.f32 %v3739, %v4792
        %v4794 = vpop.f32.mrf.mxu0
        %4795 = vdwg.mxu0
        %4796 = vmatpush.bf16.msra.mxu0 %v4532
        %4797 = vmatpush.bf16.msra.mxu0 %v4508
        %4798 = vmatpush.bf16.msra.mxu0 %v4484
        %4799 = vmatpush.bf16.msra.mxu0 %v4460
        %4800 = vmatpush.bf16.msra.mxu0 %v4436
        %4801 = vmatpush.bf16.msra.mxu0 %v4412
        %4802 = vmatpush.bf16.msra.mxu0 %v4388
        %4803 = vmatpush.bf16.msra.mxu0 %v4364
        %4804 = vmatmul.bf16.gmra.mxu0 %v3732
        %v4805 = vpop.f32.mrf.mxu0
        %v4806 = vadd.f32 %v3740, %v4805
        %v4807 = vpop.f32.mrf.mxu0
        %4808 = vdwg.mxu0
        %4809 = vmatpush.bf16.msra.mxu0 %v4533
        %4810 = vmatpush.bf16.msra.mxu0 %v4509
        %4811 = vmatpush.bf16.msra.mxu0 %v4485
        %4812 = vmatpush.bf16.msra.mxu0 %v4461
        %4813 = vmatpush.bf16.msra.mxu0 %v4437
        %4814 = vmatpush.bf16.msra.mxu0 %v4413
        %4815 = vmatpush.bf16.msra.mxu0 %v4389
        %4816 = vmatpush.bf16.msra.mxu0 %v4365
        %4817 = vmatmul.bf16.gmra.mxu0 %v3732
        %v4818 = vpop.f32.mrf.mxu0
        %v4819 = vadd.f32 %v3741, %v4818
        %v4820 = vpop.f32.mrf.mxu0
        %4821 = vdwg.mxu0
        %4822 = vmatpush.bf16.msra.mxu0 %v4534
        %4823 = vmatpush.bf16.msra.mxu0 %v4510
        %4824 = vmatpush.bf16.msra.mxu0 %v4486
        %4825 = vmatpush.bf16.msra.mxu0 %v4462
        %4826 = vmatpush.bf16.msra.mxu0 %v4438
        %4827 = vmatpush.bf16.msra.mxu0 %v4414
        %4828 = vmatpush.bf16.msra.mxu0 %v4390
        %4829 = vmatpush.bf16.msra.mxu0 %v4366
        %4830 = vmatmul.bf16.gmra.mxu0 %v3732
        %v4831 = vpop.f32.mrf.mxu0
        %v4832 = vadd.f32 %v3742, %v4831
        %v4833 = vpop.f32.mrf.mxu0
        %4834 = vdwg.mxu0
        %4835 = vmatpush.bf16.msra.mxu0 %v4535
        %4836 = vmatpush.bf16.msra.mxu0 %v4511
        %4837 = vmatpush.bf16.msra.mxu0 %v4487
        %4838 = vmatpush.bf16.msra.mxu0 %v4463
        %4839 = vmatpush.bf16.msra.mxu0 %v4439
        %4840 = vmatpush.bf16.msra.mxu0 %v4415
        %4841 = vmatpush.bf16.msra.mxu0 %v4391
        %4842 = vmatpush.bf16.msra.mxu0 %v4367
        %4843 = vmatmul.bf16.gmra.mxu0 %v3732
        %v4844 = vpop.f32.mrf.mxu0
        %v4845 = vadd.f32 %v3743, %v4844
        %v4846 = vpop.f32.mrf.mxu0
        %4847 = vdwg.mxu0
        %4848 = vmatpush.bf16.msra.mxu0 %v4536
        %4849 = vmatpush.bf16.msra.mxu0 %v4512
        %4850 = vmatpush.bf16.msra.mxu0 %v4488
        %4851 = vmatpush.bf16.msra.mxu0 %v4464
        %4852 = vmatpush.bf16.msra.mxu0 %v4440
        %4853 = vmatpush.bf16.msra.mxu0 %v4416
        %4854 = vmatpush.bf16.msra.mxu0 %v4392
        %4855 = vmatpush.bf16.msra.mxu0 %v4368
        %4856 = vmatmul.bf16.gmra.mxu0 %v3732
        %v4857 = vpop.f32.mrf.mxu0
        %v4858 = vadd.f32 %v3744, %v4857
        %v4859 = vpop.f32.mrf.mxu0
        %4860 = vdwg.mxu0
        %4861 = vmatpush.bf16.msra.mxu0 %v4537
        %4862 = vmatpush.bf16.msra.mxu0 %v4513
        %4863 = vmatpush.bf16.msra.mxu0 %v4489
        %4864 = vmatpush.bf16.msra.mxu0 %v4465
        %4865 = vmatpush.bf16.msra.mxu0 %v4441
        %4866 = vmatpush.bf16.msra.mxu0 %v4417
        %4867 = vmatpush.bf16.msra.mxu0 %v4393
        %4868 = vmatpush.bf16.msra.mxu0 %v4369
        %4869 = vmatmul.bf16.gmra.mxu0 %v3732
        %v4870 = vpop.f32.mrf.mxu0
        %v4871 = vadd.f32 %v3745, %v4870
        %v4872 = vpop.f32.mrf.mxu0
        %4873 = vdwg.mxu0
        %4874 = vmatpush.bf16.msra.mxu0 %v4538
        %4875 = vmatpush.bf16.msra.mxu0 %v4514
        %4876 = vmatpush.bf16.msra.mxu0 %v4490
        %4877 = vmatpush.bf16.msra.mxu0 %v4466
        %4878 = vmatpush.bf16.msra.mxu0 %v4442
        %4879 = vmatpush.bf16.msra.mxu0 %v4418
        %4880 = vmatpush.bf16.msra.mxu0 %v4394
        %4881 = vmatpush.bf16.msra.mxu0 %v4370
        %4882 = vmatmul.bf16.gmra.mxu0 %v3732
        %v4883 = vpop.f32.mrf.mxu0
        %v4884 = vadd.f32 %v3746, %v4883
        %v4885 = vpop.f32.mrf.mxu0
        %4886 = vdwg.mxu0
        %4887 = vmatpush.bf16.msra.mxu0 %v4539
        %4888 = vmatpush.bf16.msra.mxu0 %v4515
        %4889 = vmatpush.bf16.msra.mxu0 %v4491
        %4890 = vmatpush.bf16.msra.mxu0 %v4467
        %4891 = vmatpush.bf16.msra.mxu0 %v4443
        %4892 = vmatpush.bf16.msra.mxu0 %v4419
        %4893 = vmatpush.bf16.msra.mxu0 %v4395
        %4894 = vmatpush.bf16.msra.mxu0 %v4371
        %4895 = vmatmul.bf16.gmra.mxu0 %v3732
        %v4896 = vpop.f32.mrf.mxu0
        %v4897 = vadd.f32 %v3747, %v4896
        %v4898 = vpop.f32.mrf.mxu0
        %4899 = vdwg.mxu0
        %4900 = vmatpush.bf16.msra.mxu0 %v4540
        %4901 = vmatpush.bf16.msra.mxu0 %v4516
        %4902 = vmatpush.bf16.msra.mxu0 %v4492
        %4903 = vmatpush.bf16.msra.mxu0 %v4468
        %4904 = vmatpush.bf16.msra.mxu0 %v4444
        %4905 = vmatpush.bf16.msra.mxu0 %v4420
        %4906 = vmatpush.bf16.msra.mxu0 %v4396
        %4907 = vmatpush.bf16.msra.mxu0 %v4372
        %4908 = vmatmul.bf16.gmra.mxu0 %v3732
        %v4909 = vpop.f32.mrf.mxu0
        %v4910 = vadd.f32 %v3748, %v4909
        %v4911 = vpop.f32.mrf.mxu0
        %4912 = vdwg.mxu0
        %4913 = vmatpush.bf16.msra.mxu0 %v4541
        %4914 = vmatpush.bf16.msra.mxu0 %v4517
        %4915 = vmatpush.bf16.msra.mxu0 %v4493
        %4916 = vmatpush.bf16.msra.mxu0 %v4469
        %4917 = vmatpush.bf16.msra.mxu0 %v4445
        %4918 = vmatpush.bf16.msra.mxu0 %v4421
        %4919 = vmatpush.bf16.msra.mxu0 %v4397
        %4920 = vmatpush.bf16.msra.mxu0 %v4373
        %4921 = vmatmul.bf16.gmra.mxu0 %v3732
        %v4922 = vpop.f32.mrf.mxu0
        %v4923 = vadd.f32 %v3749, %v4922
        %v4924 = vpop.f32.mrf.mxu0
        %4925 = vdwg.mxu0
        %4926 = vmatpush.bf16.msra.mxu0 %v4542
        %4927 = vmatpush.bf16.msra.mxu0 %v4518
        %4928 = vmatpush.bf16.msra.mxu0 %v4494
        %4929 = vmatpush.bf16.msra.mxu0 %v4470
        %4930 = vmatpush.bf16.msra.mxu0 %v4446
        %4931 = vmatpush.bf16.msra.mxu0 %v4422
        %4932 = vmatpush.bf16.msra.mxu0 %v4398
        %4933 = vmatpush.bf16.msra.mxu0 %v4374
        %4934 = vmatmul.bf16.gmra.mxu0 %v3732
        %v4935 = vpop.f32.mrf.mxu0
        %v4936 = vadd.f32 %v3750, %v4935
        %v4937 = vpop.f32.mrf.mxu0
        %4938 = vdwg.mxu0
        %4939 = vmatpush.bf16.msra.mxu0 %v4543
        %4940 = vmatpush.bf16.msra.mxu0 %v4519
        %4941 = vmatpush.bf16.msra.mxu0 %v4495
        %4942 = vmatpush.bf16.msra.mxu0 %v4471
        %4943 = vmatpush.bf16.msra.mxu0 %v4447
        %4944 = vmatpush.bf16.msra.mxu0 %v4423
        %4945 = vmatpush.bf16.msra.mxu0 %v4399
        %4946 = vmatpush.bf16.msra.mxu0 %v4375
        %4947 = vmatmul.bf16.gmra.mxu0 %v3732
        %v4948 = vpop.f32.mrf.mxu0
        %v4949 = vadd.f32 %v3751, %v4948
        %v4950 = vpop.f32.mrf.mxu0
        %4951 = vdwg.mxu0
        %4952 = vmatpush.bf16.msra.mxu0 %v4544
        %4953 = vmatpush.bf16.msra.mxu0 %v4520
        %4954 = vmatpush.bf16.msra.mxu0 %v4496
        %4955 = vmatpush.bf16.msra.mxu0 %v4472
        %4956 = vmatpush.bf16.msra.mxu0 %v4448
        %4957 = vmatpush.bf16.msra.mxu0 %v4424
        %4958 = vmatpush.bf16.msra.mxu0 %v4400
        %4959 = vmatpush.bf16.msra.mxu0 %v4376
        %4960 = vmatmul.bf16.gmra.mxu0 %v3732
        %v4961 = vpop.f32.mrf.mxu0
        %v4962 = vadd.f32 %v3752, %v4961
        %v4963 = vpop.f32.mrf.mxu0
        %4964 = vdwg.mxu0
        %4965 = vmatpush.bf16.msra.mxu0 %v4545
        %4966 = vmatpush.bf16.msra.mxu0 %v4521
        %4967 = vmatpush.bf16.msra.mxu0 %v4497
        %4968 = vmatpush.bf16.msra.mxu0 %v4473
        %4969 = vmatpush.bf16.msra.mxu0 %v4449
        %4970 = vmatpush.bf16.msra.mxu0 %v4425
        %4971 = vmatpush.bf16.msra.mxu0 %v4401
        %4972 = vmatpush.bf16.msra.mxu0 %v4377
        %4973 = vmatmul.bf16.gmra.mxu0 %v3732
        %v4974 = vpop.f32.mrf.mxu0
        %v4975 = vadd.f32 %v3753, %v4974
        %v4976 = vpop.f32.mrf.mxu0
        %4977 = vdwg.mxu0
        %4978 = vmatpush.bf16.msra.mxu0 %v4546
        %4979 = vmatpush.bf16.msra.mxu0 %v4522
        %4980 = vmatpush.bf16.msra.mxu0 %v4498
        %4981 = vmatpush.bf16.msra.mxu0 %v4474
        %4982 = vmatpush.bf16.msra.mxu0 %v4450
        %4983 = vmatpush.bf16.msra.mxu0 %v4426
        %4984 = vmatpush.bf16.msra.mxu0 %v4402
        %4985 = vmatpush.bf16.msra.mxu0 %v4378
        %4986 = vmatmul.bf16.gmra.mxu0 %v3732
        %v4987 = vpop.f32.mrf.mxu0
        %v4988 = vadd.f32 %v3754, %v4987
        %v4989 = vpop.f32.mrf.mxu0
        %4990 = vdwg.mxu0
        %4991 = vmatpush.bf16.msra.mxu0 %v4547
        %4992 = vmatpush.bf16.msra.mxu0 %v4523
        %4993 = vmatpush.bf16.msra.mxu0 %v4499
        %4994 = vmatpush.bf16.msra.mxu0 %v4475
        %4995 = vmatpush.bf16.msra.mxu0 %v4451
        %4996 = vmatpush.bf16.msra.mxu0 %v4427
        %4997 = vmatpush.bf16.msra.mxu0 %v4403
        %4998 = vmatpush.bf16.msra.mxu0 %v4379
        %4999 = vmatmul.bf16.gmra.mxu0 %v3732
        %v5000 = vpop.f32.mrf.mxu0
        %v5001 = vadd.f32 %v3755, %v5000
        %v5002 = vpop.f32.mrf.mxu0
        %5003 = vdwg.mxu0
        %5004 = vmatpush.bf16.msra.mxu0 %v4548
        %5005 = vmatpush.bf16.msra.mxu0 %v4524
        %5006 = vmatpush.bf16.msra.mxu0 %v4500
        %5007 = vmatpush.bf16.msra.mxu0 %v4476
        %5008 = vmatpush.bf16.msra.mxu0 %v4452
        %5009 = vmatpush.bf16.msra.mxu0 %v4428
        %5010 = vmatpush.bf16.msra.mxu0 %v4404
        %5011 = vmatpush.bf16.msra.mxu0 %v4380
        %5012 = vmatmul.bf16.gmra.mxu0 %v3732
        %v5013 = vpop.f32.mrf.mxu0
        %v5014 = vadd.f32 %v3756, %v5013
        %v5015 = vpop.f32.mrf.mxu0
        %5016 = vdwg.mxu0
        %5017 = vmatpush.bf16.msra.mxu0 %v4549
        %5018 = vmatpush.bf16.msra.mxu0 %v4525
        %5019 = vmatpush.bf16.msra.mxu0 %v4501
        %5020 = vmatpush.bf16.msra.mxu0 %v4477
        %5021 = vmatpush.bf16.msra.mxu0 %v4453
        %5022 = vmatpush.bf16.msra.mxu0 %v4429
        %5023 = vmatpush.bf16.msra.mxu0 %v4405
        %5024 = vmatpush.bf16.msra.mxu0 %v4381
        %5025 = vmatmul.bf16.gmra.mxu0 %v3732
        %v5026 = vpop.f32.mrf.mxu0
        %v5027 = vadd.f32 %v3757, %v5026
        %v5028 = vpop.f32.mrf.mxu0
        %5029 = vdwg.mxu0
        %5030 = vmatpush.bf16.msra.mxu0 %v4550
        %5031 = vmatpush.bf16.msra.mxu0 %v4526
        %5032 = vmatpush.bf16.msra.mxu0 %v4502
        %5033 = vmatpush.bf16.msra.mxu0 %v4478
        %5034 = vmatpush.bf16.msra.mxu0 %v4454
        %5035 = vmatpush.bf16.msra.mxu0 %v4430
        %5036 = vmatpush.bf16.msra.mxu0 %v4406
        %5037 = vmatpush.bf16.msra.mxu0 %v4382
        %5038 = vmatmul.bf16.gmra.mxu0 %v3732
        %v5039 = vpop.f32.mrf.mxu0
        %v5040 = vadd.f32 %v3758, %v5039
        %v5041 = vpop.f32.mrf.mxu0
        %5042 = vdwg.mxu0
        %5043 = vmatpush.bf16.msra.mxu0 %v4551
        %5044 = vmatpush.bf16.msra.mxu0 %v4527
        %5045 = vmatpush.bf16.msra.mxu0 %v4503
        %5046 = vmatpush.bf16.msra.mxu0 %v4479
        %5047 = vmatpush.bf16.msra.mxu0 %v4455
        %5048 = vmatpush.bf16.msra.mxu0 %v4431
        %5049 = vmatpush.bf16.msra.mxu0 %v4407
        %5050 = vmatpush.bf16.msra.mxu0 %v4383
        %5051 = vmatmul.bf16.gmra.mxu0 %v3732
        %v5052 = vpop.f32.mrf.mxu0
        %v5053 = vadd.f32 %v3759, %v5052
        %v5054 = vpop.f32.mrf.mxu0
        %5055 = vdwg.mxu0
        %v5056 = vxor.u32 %v4754, 2147483648
        %v5057 = vxor.u32 %v4767, 2147483648
        %v5058 = vxor.u32 %v4780, 2147483648
        %v5059 = vxor.u32 %v4793, 2147483648
        %v5060 = vxor.u32 %v4806, 2147483648
        %v5061 = vxor.u32 %v4819, 2147483648
        %v5062 = vxor.u32 %v4832, 2147483648
        %v5063 = vxor.u32 %v4845, 2147483648
        %v5064 = vxor.u32 %v4858, 2147483648
        %v5065 = vxor.u32 %v4871, 2147483648
        %v5066 = vxor.u32 %v4884, 2147483648
        %v5067 = vxor.u32 %v4897, 2147483648
        %v5068 = vxor.u32 %v4910, 2147483648
        %v5069 = vxor.u32 %v4923, 2147483648
        %v5070 = vxor.u32 %v4936, 2147483648
        %v5071 = vxor.u32 %v4949, 2147483648
        %v5072 = vxor.u32 %v4962, 2147483648
        %v5073 = vxor.u32 %v4975, 2147483648
        %v5074 = vxor.u32 %v4988, 2147483648
        %v5075 = vxor.u32 %v5001, 2147483648
        %v5076 = vxor.u32 %v5014, 2147483648
        %v5077 = vxor.u32 %v5027, 2147483648
        %v5078 = vxor.u32 %v5040, 2147483648
        %v5079 = vxor.u32 %v5053, 2147483648
        %v5080 = vmul.f32 %v5056, 1.442695
        %v5081 = vpow.pop %v5080
        %v5082 = vmul.f32 %v5057, 1.442695
        %v5083 = vpow.pop %v5082
        %v5084 = vmul.f32 %v5058, 1.442695
        %v5085 = vpow.pop %v5084
        %v5086 = vmul.f32 %v5059, 1.442695
        %v5087 = vpow.pop %v5086
        %v5088 = vmul.f32 %v5060, 1.442695
        %v5089 = vpow.pop %v5088
        %v5090 = vmul.f32 %v5061, 1.442695
        %v5091 = vpow.pop %v5090
        %v5092 = vmul.f32 %v5062, 1.442695
        %v5093 = vpow.pop %v5092
        %v5094 = vmul.f32 %v5063, 1.442695
        %v5095 = vpow.pop %v5094
        %v5096 = vmul.f32 %v5064, 1.442695
        %v5097 = vpow.pop %v5096
        %v5098 = vmul.f32 %v5065, 1.442695
        %v5099 = vpow.pop %v5098
        %v5100 = vmul.f32 %v5066, 1.442695
        %v5101 = vpow.pop %v5100
        %v5102 = vmul.f32 %v5067, 1.442695
        %v5103 = vpow.pop %v5102
        %v5104 = vmul.f32 %v5068, 1.442695
        %v5105 = vpow.pop %v5104
        %v5106 = vmul.f32 %v5069, 1.442695
        %v5107 = vpow.pop %v5106
        %v5108 = vmul.f32 %v5070, 1.442695
        %v5109 = vpow.pop %v5108
        %v5110 = vmul.f32 %v5071, 1.442695
        %v5111 = vpow.pop %v5110
        %v5112 = vmul.f32 %v5072, 1.442695
        %v5113 = vpow.pop %v5112
        %v5114 = vmul.f32 %v5073, 1.442695
        %v5115 = vpow.pop %v5114
        %v5116 = vmul.f32 %v5074, 1.442695
        %v5117 = vpow.pop %v5116
        %v5118 = vmul.f32 %v5075, 1.442695
        %v5119 = vpow.pop %v5118
        %v5120 = vmul.f32 %v5076, 1.442695
        %v5121 = vpow.pop %v5120
        %v5122 = vmul.f32 %v5077, 1.442695
        %v5123 = vpow.pop %v5122
        %v5124 = vmul.f32 %v5078, 1.442695
        %v5125 = vpow.pop %v5124
        %v5126 = vmul.f32 %v5079, 1.442695
        %v5127 = vpow.pop %v5126
        %v5128 = vadd.f32 %v5081, 1.0
        %v5129 = vadd.f32 %v5083, 1.0
        %v5130 = vadd.f32 %v5085, 1.0
        %v5131 = vadd.f32 %v5087, 1.0
        %v5132 = vadd.f32 %v5089, 1.0
        %v5133 = vadd.f32 %v5091, 1.0
        %v5134 = vadd.f32 %v5093, 1.0
        %v5135 = vadd.f32 %v5095, 1.0
        %v5136 = vadd.f32 %v5097, 1.0
        %v5137 = vadd.f32 %v5099, 1.0
        %v5138 = vadd.f32 %v5101, 1.0
        %v5139 = vadd.f32 %v5103, 1.0
        %v5140 = vadd.f32 %v5105, 1.0
        %v5141 = vadd.f32 %v5107, 1.0
        %v5142 = vadd.f32 %v5109, 1.0
        %v5143 = vadd.f32 %v5111, 1.0
        %v5144 = vadd.f32 %v5113, 1.0
        %v5145 = vadd.f32 %v5115, 1.0
        %v5146 = vadd.f32 %v5117, 1.0
        %v5147 = vadd.f32 %v5119, 1.0
        %v5148 = vadd.f32 %v5121, 1.0
        %v5149 = vadd.f32 %v5123, 1.0
        %v5150 = vadd.f32 %v5125, 1.0
        %v5151 = vadd.f32 %v5127, 1.0
        %v5152 = vrcp.pop %v5128
        %v5153 = vmul.f32 %v5128, %v5152
        %v5154 = vsub.f32 1.0, %v5153
        %v5155 = vmul.f32 %v5152, %v5154
        %v5156 = vadd.f32 %v5152, %v5155
        %vm5157 = vweird.f32 %v5128
        %vm5158 = vweird.f32 %v5152
        %vm5159 = vmor %vm5157, %vm5158
        %v5160 = vsel %vm5159, %v5152, %v5156
        %v5161 = vand.u32 2147483647, %v5128
        %vm5162 = vcmp.eq.f32.partialorder %v5161, 8.507059e+37
        %v5163 = vand.u32 %v5128, 2147483648
        %v5164 = vor.u32 1.1754944e-38, %v5163
        %v5165 = vsel %vm5162, %v5164, %v5160
        %v5166 = vmul.f32 1.0, %v5165
        %v5167 = vrcp.pop %v5129
        %v5168 = vmul.f32 %v5129, %v5167
        %v5169 = vsub.f32 1.0, %v5168
        %v5170 = vmul.f32 %v5167, %v5169
        %v5171 = vadd.f32 %v5167, %v5170
        %vm5172 = vweird.f32 %v5129
        %vm5173 = vweird.f32 %v5167
        %vm5174 = vmor %vm5172, %vm5173
        %v5175 = vsel %vm5174, %v5167, %v5171
        %v5176 = vand.u32 2147483647, %v5129
        %vm5177 = vcmp.eq.f32.partialorder %v5176, 8.507059e+37
        %v5178 = vand.u32 %v5129, 2147483648
        %v5179 = vor.u32 1.1754944e-38, %v5178
        %v5180 = vsel %vm5177, %v5179, %v5175
        %v5181 = vmul.f32 1.0, %v5180
        %v5182 = vrcp.pop %v5130
        %v5183 = vmul.f32 %v5130, %v5182
        %v5184 = vsub.f32 1.0, %v5183
        %v5185 = vmul.f32 %v5182, %v5184
        %v5186 = vadd.f32 %v5182, %v5185
        %vm5187 = vweird.f32 %v5130
        %vm5188 = vweird.f32 %v5182
        %vm5189 = vmor %vm5187, %vm5188
        %v5190 = vsel %vm5189, %v5182, %v5186
        %v5191 = vand.u32 2147483647, %v5130
        %vm5192 = vcmp.eq.f32.partialorder %v5191, 8.507059e+37
        %v5193 = vand.u32 %v5130, 2147483648
        %v5194 = vor.u32 1.1754944e-38, %v5193
        %v5195 = vsel %vm5192, %v5194, %v5190
        %v5196 = vmul.f32 1.0, %v5195
        %v5197 = vrcp.pop %v5131
        %v5198 = vmul.f32 %v5131, %v5197
        %v5199 = vsub.f32 1.0, %v5198
        %v5200 = vmul.f32 %v5197, %v5199
        %v5201 = vadd.f32 %v5197, %v5200
        %vm5202 = vweird.f32 %v5131
        %vm5203 = vweird.f32 %v5197
        %vm5204 = vmor %vm5202, %vm5203
        %v5205 = vsel %vm5204, %v5197, %v5201
        %v5206 = vand.u32 2147483647, %v5131
        %vm5207 = vcmp.eq.f32.partialorder %v5206, 8.507059e+37
        %v5208 = vand.u32 %v5131, 2147483648
        %v5209 = vor.u32 1.1754944e-38, %v5208
        %v5210 = vsel %vm5207, %v5209, %v5205
        %v5211 = vmul.f32 1.0, %v5210
        %v5212 = vrcp.pop %v5132
        %v5213 = vmul.f32 %v5132, %v5212
        %v5214 = vsub.f32 1.0, %v5213
        %v5215 = vmul.f32 %v5212, %v5214
        %v5216 = vadd.f32 %v5212, %v5215
        %vm5217 = vweird.f32 %v5132
        %vm5218 = vweird.f32 %v5212
        %vm5219 = vmor %vm5217, %vm5218
        %v5220 = vsel %vm5219, %v5212, %v5216
        %v5221 = vand.u32 2147483647, %v5132
        %vm5222 = vcmp.eq.f32.partialorder %v5221, 8.507059e+37
        %v5223 = vand.u32 %v5132, 2147483648
        %v5224 = vor.u32 1.1754944e-38, %v5223
        %v5225 = vsel %vm5222, %v5224, %v5220
        %v5226 = vmul.f32 1.0, %v5225
        %v5227 = vrcp.pop %v5133
        %v5228 = vmul.f32 %v5133, %v5227
        %v5229 = vsub.f32 1.0, %v5228
        %v5230 = vmul.f32 %v5227, %v5229
        %v5231 = vadd.f32 %v5227, %v5230
        %vm5232 = vweird.f32 %v5133
        %vm5233 = vweird.f32 %v5227
        %vm5234 = vmor %vm5232, %vm5233
        %v5235 = vsel %vm5234, %v5227, %v5231
        %v5236 = vand.u32 2147483647, %v5133
        %vm5237 = vcmp.eq.f32.partialorder %v5236, 8.507059e+37
        %v5238 = vand.u32 %v5133, 2147483648
        %v5239 = vor.u32 1.1754944e-38, %v5238
        %v5240 = vsel %vm5237, %v5239, %v5235
        %v5241 = vmul.f32 1.0, %v5240
        %v5242 = vrcp.pop %v5134
        %v5243 = vmul.f32 %v5134, %v5242
        %v5244 = vsub.f32 1.0, %v5243
        %v5245 = vmul.f32 %v5242, %v5244
        %v5246 = vadd.f32 %v5242, %v5245
        %vm5247 = vweird.f32 %v5134
        %vm5248 = vweird.f32 %v5242
        %vm5249 = vmor %vm5247, %vm5248
        %v5250 = vsel %vm5249, %v5242, %v5246
        %v5251 = vand.u32 2147483647, %v5134
        %vm5252 = vcmp.eq.f32.partialorder %v5251, 8.507059e+37
        %v5253 = vand.u32 %v5134, 2147483648
        %v5254 = vor.u32 1.1754944e-38, %v5253
        %v5255 = vsel %vm5252, %v5254, %v5250
        %v5256 = vmul.f32 1.0, %v5255
        %v5257 = vrcp.pop %v5135
        %v5258 = vmul.f32 %v5135, %v5257
        %v5259 = vsub.f32 1.0, %v5258
        %v5260 = vmul.f32 %v5257, %v5259
        %v5261 = vadd.f32 %v5257, %v5260
        %vm5262 = vweird.f32 %v5135
        %vm5263 = vweird.f32 %v5257
        %vm5264 = vmor %vm5262, %vm5263
        %v5265 = vsel %vm5264, %v5257, %v5261
        %v5266 = vand.u32 2147483647, %v5135
        %vm5267 = vcmp.eq.f32.partialorder %v5266, 8.507059e+37
        %v5268 = vand.u32 %v5135, 2147483648
        %v5269 = vor.u32 1.1754944e-38, %v5268
        %v5270 = vsel %vm5267, %v5269, %v5265
        %v5271 = vmul.f32 1.0, %v5270
        %v5272 = vrcp.pop %v5136
        %v5273 = vmul.f32 %v5136, %v5272
        %v5274 = vsub.f32 1.0, %v5273
        %v5275 = vmul.f32 %v5272, %v5274
        %v5276 = vadd.f32 %v5272, %v5275
        %vm5277 = vweird.f32 %v5136
        %vm5278 = vweird.f32 %v5272
        %vm5279 = vmor %vm5277, %vm5278
        %v5280 = vsel %vm5279, %v5272, %v5276
        %v5281 = vand.u32 2147483647, %v5136
        %vm5282 = vcmp.eq.f32.partialorder %v5281, 8.507059e+37
        %v5283 = vand.u32 %v5136, 2147483648
        %v5284 = vor.u32 1.1754944e-38, %v5283
        %v5285 = vsel %vm5282, %v5284, %v5280
        %v5286 = vmul.f32 1.0, %v5285
        %v5287 = vrcp.pop %v5137
        %v5288 = vmul.f32 %v5137, %v5287
        %v5289 = vsub.f32 1.0, %v5288
        %v5290 = vmul.f32 %v5287, %v5289
        %v5291 = vadd.f32 %v5287, %v5290
        %vm5292 = vweird.f32 %v5137
        %vm5293 = vweird.f32 %v5287
        %vm5294 = vmor %vm5292, %vm5293
        %v5295 = vsel %vm5294, %v5287, %v5291
        %v5296 = vand.u32 2147483647, %v5137
        %vm5297 = vcmp.eq.f32.partialorder %v5296, 8.507059e+37
        %v5298 = vand.u32 %v5137, 2147483648
        %v5299 = vor.u32 1.1754944e-38, %v5298
        %v5300 = vsel %vm5297, %v5299, %v5295
        %v5301 = vmul.f32 1.0, %v5300
        %v5302 = vrcp.pop %v5138
        %v5303 = vmul.f32 %v5138, %v5302
        %v5304 = vsub.f32 1.0, %v5303
        %v5305 = vmul.f32 %v5302, %v5304
        %v5306 = vadd.f32 %v5302, %v5305
        %vm5307 = vweird.f32 %v5138
        %vm5308 = vweird.f32 %v5302
        %vm5309 = vmor %vm5307, %vm5308
        %v5310 = vsel %vm5309, %v5302, %v5306
        %v5311 = vand.u32 2147483647, %v5138
        %vm5312 = vcmp.eq.f32.partialorder %v5311, 8.507059e+37
        %v5313 = vand.u32 %v5138, 2147483648
        %v5314 = vor.u32 1.1754944e-38, %v5313
        %v5315 = vsel %vm5312, %v5314, %v5310
        %v5316 = vmul.f32 1.0, %v5315
        %v5317 = vrcp.pop %v5139
        %v5318 = vmul.f32 %v5139, %v5317
        %v5319 = vsub.f32 1.0, %v5318
        %v5320 = vmul.f32 %v5317, %v5319
        %v5321 = vadd.f32 %v5317, %v5320
        %vm5322 = vweird.f32 %v5139
        %vm5323 = vweird.f32 %v5317
        %vm5324 = vmor %vm5322, %vm5323
        %v5325 = vsel %vm5324, %v5317, %v5321
        %v5326 = vand.u32 2147483647, %v5139
        %vm5327 = vcmp.eq.f32.partialorder %v5326, 8.507059e+37
        %v5328 = vand.u32 %v5139, 2147483648
        %v5329 = vor.u32 1.1754944e-38, %v5328
        %v5330 = vsel %vm5327, %v5329, %v5325
        %v5331 = vmul.f32 1.0, %v5330
        %v5332 = vrcp.pop %v5140
        %v5333 = vmul.f32 %v5140, %v5332
        %v5334 = vsub.f32 1.0, %v5333
        %v5335 = vmul.f32 %v5332, %v5334
        %v5336 = vadd.f32 %v5332, %v5335
        %vm5337 = vweird.f32 %v5140
        %vm5338 = vweird.f32 %v5332
        %vm5339 = vmor %vm5337, %vm5338
        %v5340 = vsel %vm5339, %v5332, %v5336
        %v5341 = vand.u32 2147483647, %v5140
        %vm5342 = vcmp.eq.f32.partialorder %v5341, 8.507059e+37
        %v5343 = vand.u32 %v5140, 2147483648
        %v5344 = vor.u32 1.1754944e-38, %v5343
        %v5345 = vsel %vm5342, %v5344, %v5340
        %v5346 = vmul.f32 1.0, %v5345
        %v5347 = vrcp.pop %v5141
        %v5348 = vmul.f32 %v5141, %v5347
        %v5349 = vsub.f32 1.0, %v5348
        %v5350 = vmul.f32 %v5347, %v5349
        %v5351 = vadd.f32 %v5347, %v5350
        %vm5352 = vweird.f32 %v5141
        %vm5353 = vweird.f32 %v5347
        %vm5354 = vmor %vm5352, %vm5353
        %v5355 = vsel %vm5354, %v5347, %v5351
        %v5356 = vand.u32 2147483647, %v5141
        %vm5357 = vcmp.eq.f32.partialorder %v5356, 8.507059e+37
        %v5358 = vand.u32 %v5141, 2147483648
        %v5359 = vor.u32 1.1754944e-38, %v5358
        %v5360 = vsel %vm5357, %v5359, %v5355
        %v5361 = vmul.f32 1.0, %v5360
        %v5362 = vrcp.pop %v5142
        %v5363 = vmul.f32 %v5142, %v5362
        %v5364 = vsub.f32 1.0, %v5363
        %v5365 = vmul.f32 %v5362, %v5364
        %v5366 = vadd.f32 %v5362, %v5365
        %vm5367 = vweird.f32 %v5142
        %vm5368 = vweird.f32 %v5362
        %vm5369 = vmor %vm5367, %vm5368
        %v5370 = vsel %vm5369, %v5362, %v5366
        %v5371 = vand.u32 2147483647, %v5142
        %vm5372 = vcmp.eq.f32.partialorder %v5371, 8.507059e+37
        %v5373 = vand.u32 %v5142, 2147483648
        %v5374 = vor.u32 1.1754944e-38, %v5373
        %v5375 = vsel %vm5372, %v5374, %v5370
        %v5376 = vmul.f32 1.0, %v5375
        %v5377 = vrcp.pop %v5143
        %v5378 = vmul.f32 %v5143, %v5377
        %v5379 = vsub.f32 1.0, %v5378
        %v5380 = vmul.f32 %v5377, %v5379
        %v5381 = vadd.f32 %v5377, %v5380
        %vm5382 = vweird.f32 %v5143
        %vm5383 = vweird.f32 %v5377
        %vm5384 = vmor %vm5382, %vm5383
        %v5385 = vsel %vm5384, %v5377, %v5381
        %v5386 = vand.u32 2147483647, %v5143
        %vm5387 = vcmp.eq.f32.partialorder %v5386, 8.507059e+37
        %v5388 = vand.u32 %v5143, 2147483648
        %v5389 = vor.u32 1.1754944e-38, %v5388
        %v5390 = vsel %vm5387, %v5389, %v5385
        %v5391 = vmul.f32 1.0, %v5390
        %v5392 = vrcp.pop %v5144
        %v5393 = vmul.f32 %v5144, %v5392
        %v5394 = vsub.f32 1.0, %v5393
        %v5395 = vmul.f32 %v5392, %v5394
        %v5396 = vadd.f32 %v5392, %v5395
        %vm5397 = vweird.f32 %v5144
        %vm5398 = vweird.f32 %v5392
        %vm5399 = vmor %vm5397, %vm5398
        %v5400 = vsel %vm5399, %v5392, %v5396
        %v5401 = vand.u32 2147483647, %v5144
        %vm5402 = vcmp.eq.f32.partialorder %v5401, 8.507059e+37
        %v5403 = vand.u32 %v5144, 2147483648
        %v5404 = vor.u32 1.1754944e-38, %v5403
        %v5405 = vsel %vm5402, %v5404, %v5400
        %v5406 = vmul.f32 1.0, %v5405
        %v5407 = vrcp.pop %v5145
        %v5408 = vmul.f32 %v5145, %v5407
        %v5409 = vsub.f32 1.0, %v5408
        %v5410 = vmul.f32 %v5407, %v5409
        %v5411 = vadd.f32 %v5407, %v5410
        %vm5412 = vweird.f32 %v5145
        %vm5413 = vweird.f32 %v5407
        %vm5414 = vmor %vm5412, %vm5413
        %v5415 = vsel %vm5414, %v5407, %v5411
        %v5416 = vand.u32 2147483647, %v5145
        %vm5417 = vcmp.eq.f32.partialorder %v5416, 8.507059e+37
        %v5418 = vand.u32 %v5145, 2147483648
        %v5419 = vor.u32 1.1754944e-38, %v5418
        %v5420 = vsel %vm5417, %v5419, %v5415
        %v5421 = vmul.f32 1.0, %v5420
        %v5422 = vrcp.pop %v5146
        %v5423 = vmul.f32 %v5146, %v5422
        %v5424 = vsub.f32 1.0, %v5423
        %v5425 = vmul.f32 %v5422, %v5424
        %v5426 = vadd.f32 %v5422, %v5425
        %vm5427 = vweird.f32 %v5146
        %vm5428 = vweird.f32 %v5422
        %vm5429 = vmor %vm5427, %vm5428
        %v5430 = vsel %vm5429, %v5422, %v5426
        %v5431 = vand.u32 2147483647, %v5146
        %vm5432 = vcmp.eq.f32.partialorder %v5431, 8.507059e+37
        %v5433 = vand.u32 %v5146, 2147483648
        %v5434 = vor.u32 1.1754944e-38, %v5433
        %v5435 = vsel %vm5432, %v5434, %v5430
        %v5436 = vmul.f32 1.0, %v5435
        %v5437 = vrcp.pop %v5147
        %v5438 = vmul.f32 %v5147, %v5437
        %v5439 = vsub.f32 1.0, %v5438
        %v5440 = vmul.f32 %v5437, %v5439
        %v5441 = vadd.f32 %v5437, %v5440
        %vm5442 = vweird.f32 %v5147
        %vm5443 = vweird.f32 %v5437
        %vm5444 = vmor %vm5442, %vm5443
        %v5445 = vsel %vm5444, %v5437, %v5441
        %v5446 = vand.u32 2147483647, %v5147
        %vm5447 = vcmp.eq.f32.partialorder %v5446, 8.507059e+37
        %v5448 = vand.u32 %v5147, 2147483648
        %v5449 = vor.u32 1.1754944e-38, %v5448
        %v5450 = vsel %vm5447, %v5449, %v5445
        %v5451 = vmul.f32 1.0, %v5450
        %v5452 = vrcp.pop %v5148
        %v5453 = vmul.f32 %v5148, %v5452
        %v5454 = vsub.f32 1.0, %v5453
        %v5455 = vmul.f32 %v5452, %v5454
        %v5456 = vadd.f32 %v5452, %v5455
        %vm5457 = vweird.f32 %v5148
        %vm5458 = vweird.f32 %v5452
        %vm5459 = vmor %vm5457, %vm5458
        %v5460 = vsel %vm5459, %v5452, %v5456
        %v5461 = vand.u32 2147483647, %v5148
        %vm5462 = vcmp.eq.f32.partialorder %v5461, 8.507059e+37
        %v5463 = vand.u32 %v5148, 2147483648
        %v5464 = vor.u32 1.1754944e-38, %v5463
        %v5465 = vsel %vm5462, %v5464, %v5460
        %v5466 = vmul.f32 1.0, %v5465
        %v5467 = vrcp.pop %v5149
        %v5468 = vmul.f32 %v5149, %v5467
        %v5469 = vsub.f32 1.0, %v5468
        %v5470 = vmul.f32 %v5467, %v5469
        %v5471 = vadd.f32 %v5467, %v5470
        %vm5472 = vweird.f32 %v5149
        %vm5473 = vweird.f32 %v5467
        %vm5474 = vmor %vm5472, %vm5473
        %v5475 = vsel %vm5474, %v5467, %v5471
        %v5476 = vand.u32 2147483647, %v5149
        %vm5477 = vcmp.eq.f32.partialorder %v5476, 8.507059e+37
        %v5478 = vand.u32 %v5149, 2147483648
        %v5479 = vor.u32 1.1754944e-38, %v5478
        %v5480 = vsel %vm5477, %v5479, %v5475
        %v5481 = vmul.f32 1.0, %v5480
        %v5482 = vrcp.pop %v5150
        %v5483 = vmul.f32 %v5150, %v5482
        %v5484 = vsub.f32 1.0, %v5483
        %v5485 = vmul.f32 %v5482, %v5484
        %v5486 = vadd.f32 %v5482, %v5485
        %vm5487 = vweird.f32 %v5150
        %vm5488 = vweird.f32 %v5482
        %vm5489 = vmor %vm5487, %vm5488
        %v5490 = vsel %vm5489, %v5482, %v5486
        %v5491 = vand.u32 2147483647, %v5150
        %vm5492 = vcmp.eq.f32.partialorder %v5491, 8.507059e+37
        %v5493 = vand.u32 %v5150, 2147483648
        %v5494 = vor.u32 1.1754944e-38, %v5493
        %v5495 = vsel %vm5492, %v5494, %v5490
        %v5496 = vmul.f32 1.0, %v5495
        %v5497 = vrcp.pop %v5151
        %v5498 = vmul.f32 %v5151, %v5497
        %v5499 = vsub.f32 1.0, %v5498
        %v5500 = vmul.f32 %v5497, %v5499
        %v5501 = vadd.f32 %v5497, %v5500
        %vm5502 = vweird.f32 %v5151
        %vm5503 = vweird.f32 %v5497
        %vm5504 = vmor %vm5502, %vm5503
        %v5505 = vsel %vm5504, %v5497, %v5501
        %v5506 = vand.u32 2147483647, %v5151
        %vm5507 = vcmp.eq.f32.partialorder %v5506, 8.507059e+37
        %v5508 = vand.u32 %v5151, 2147483648
        %v5509 = vor.u32 1.1754944e-38, %v5508
        %v5510 = vsel %vm5507, %v5509, %v5505
        %v5511 = vmul.f32 1.0, %v5510
        %v5512 = vmul.f32 %v1138, %v5166
        %v5513 = vmul.f32 %v1139, %v5181
        %v5514 = vmul.f32 %v1140, %v5196
        %v5515 = vmul.f32 %v1141, %v5211
        %v5516 = vmul.f32 %v1142, %v5226
        %v5517 = vmul.f32 %v1143, %v5241
        %v5518 = vmul.f32 %v1144, %v5256
        %v5519 = vmul.f32 %v1145, %v5271
        %v5520 = vmul.f32 %v1146, %v5286
        %v5521 = vmul.f32 %v1147, %v5301
        %v5522 = vmul.f32 %v1148, %v5316
        %v5523 = vmul.f32 %v1149, %v5331
        %v5524 = vmul.f32 %v1150, %v5346
        %v5525 = vmul.f32 %v1151, %v5361
        %v5526 = vmul.f32 %v1152, %v5376
        %v5527 = vmul.f32 %v1153, %v5391
        %v5528 = vmul.f32 %v1154, %v5406
        %v5529 = vmul.f32 %v1155, %v5421
        %v5530 = vmul.f32 %v1156, %v5436
        %v5531 = vmul.f32 %v1157, %v5451
        %v5532 = vmul.f32 %v1158, %v5466
        %v5533 = vmul.f32 %v1159, %v5481
        %v5534 = vmul.f32 %v1160, %v5496
        %v5535 = vmul.f32 %v1161, %v5511
        %v5536 = vrot.slane %v5512, 4
        %v5537 = vadd.f32 %v5512, %v5536
        %v5538 = vrot.slane %v5537, 2
        %v5539 = vadd.f32 %v5537, %v5538
        %v5540 = vrot.slane %v5539, 1
        %v5541 = vadd.f32 %v5539, %v5540
        %v5542 = vrot.slane %v5513, 4
        %v5543 = vadd.f32 %v5513, %v5542
        %v5544 = vrot.slane %v5543, 2
        %v5545 = vadd.f32 %v5543, %v5544
        %v5546 = vrot.slane %v5545, 1
        %v5547 = vadd.f32 %v5545, %v5546
        %v5548 = vrot.slane %v5514, 4
        %v5549 = vadd.f32 %v5514, %v5548
        %v5550 = vrot.slane %v5549, 2
        %v5551 = vadd.f32 %v5549, %v5550
        %v5552 = vrot.slane %v5551, 1
        %v5553 = vadd.f32 %v5551, %v5552
        %v5554 = vrot.slane %v5515, 4
        %v5555 = vadd.f32 %v5515, %v5554
        %v5556 = vrot.slane %v5555, 2
        %v5557 = vadd.f32 %v5555, %v5556
        %v5558 = vrot.slane %v5557, 1
        %v5559 = vadd.f32 %v5557, %v5558
        %v5560 = vrot.slane %v5516, 4
        %v5561 = vadd.f32 %v5516, %v5560
        %v5562 = vrot.slane %v5561, 2
        %v5563 = vadd.f32 %v5561, %v5562
        %v5564 = vrot.slane %v5563, 1
        %v5565 = vadd.f32 %v5563, %v5564
        %v5566 = vrot.slane %v5517, 4
        %v5567 = vadd.f32 %v5517, %v5566
        %v5568 = vrot.slane %v5567, 2
        %v5569 = vadd.f32 %v5567, %v5568
        %v5570 = vrot.slane %v5569, 1
        %v5571 = vadd.f32 %v5569, %v5570
        %v5572 = vrot.slane %v5518, 4
        %v5573 = vadd.f32 %v5518, %v5572
        %v5574 = vrot.slane %v5573, 2
        %v5575 = vadd.f32 %v5573, %v5574
        %v5576 = vrot.slane %v5575, 1
        %v5577 = vadd.f32 %v5575, %v5576
        %v5578 = vrot.slane %v5519, 4
        %v5579 = vadd.f32 %v5519, %v5578
        %v5580 = vrot.slane %v5579, 2
        %v5581 = vadd.f32 %v5579, %v5580
        %v5582 = vrot.slane %v5581, 1
        %v5583 = vadd.f32 %v5581, %v5582
        %v5584 = vrot.slane %v5520, 4
        %v5585 = vadd.f32 %v5520, %v5584
        %v5586 = vrot.slane %v5585, 2
        %v5587 = vadd.f32 %v5585, %v5586
        %v5588 = vrot.slane %v5587, 1
        %v5589 = vadd.f32 %v5587, %v5588
        %v5590 = vrot.slane %v5521, 4
        %v5591 = vadd.f32 %v5521, %v5590
        %v5592 = vrot.slane %v5591, 2
        %v5593 = vadd.f32 %v5591, %v5592
        %v5594 = vrot.slane %v5593, 1
        %v5595 = vadd.f32 %v5593, %v5594
        %v5596 = vrot.slane %v5522, 4
        %v5597 = vadd.f32 %v5522, %v5596
        %v5598 = vrot.slane %v5597, 2
        %v5599 = vadd.f32 %v5597, %v5598
        %v5600 = vrot.slane %v5599, 1
        %v5601 = vadd.f32 %v5599, %v5600
        %v5602 = vrot.slane %v5523, 4
        %v5603 = vadd.f32 %v5523, %v5602
        %v5604 = vrot.slane %v5603, 2
        %v5605 = vadd.f32 %v5603, %v5604
        %v5606 = vrot.slane %v5605, 1
        %v5607 = vadd.f32 %v5605, %v5606
        %v5608 = vrot.slane %v5524, 4
        %v5609 = vadd.f32 %v5524, %v5608
        %v5610 = vrot.slane %v5609, 2
        %v5611 = vadd.f32 %v5609, %v5610
        %v5612 = vrot.slane %v5611, 1
        %v5613 = vadd.f32 %v5611, %v5612
        %v5614 = vrot.slane %v5525, 4
        %v5615 = vadd.f32 %v5525, %v5614
        %v5616 = vrot.slane %v5615, 2
        %v5617 = vadd.f32 %v5615, %v5616
        %v5618 = vrot.slane %v5617, 1
        %v5619 = vadd.f32 %v5617, %v5618
        %v5620 = vrot.slane %v5526, 4
        %v5621 = vadd.f32 %v5526, %v5620
        %v5622 = vrot.slane %v5621, 2
        %v5623 = vadd.f32 %v5621, %v5622
        %v5624 = vrot.slane %v5623, 1
        %v5625 = vadd.f32 %v5623, %v5624
        %v5626 = vrot.slane %v5527, 4
        %v5627 = vadd.f32 %v5527, %v5626
        %v5628 = vrot.slane %v5627, 2
        %v5629 = vadd.f32 %v5627, %v5628
        %v5630 = vrot.slane %v5629, 1
        %v5631 = vadd.f32 %v5629, %v5630
        %v5632 = vrot.slane %v5528, 4
        %v5633 = vadd.f32 %v5528, %v5632
        %v5634 = vrot.slane %v5633, 2
        %v5635 = vadd.f32 %v5633, %v5634
        %v5636 = vrot.slane %v5635, 1
        %v5637 = vadd.f32 %v5635, %v5636
        %v5638 = vrot.slane %v5529, 4
        %v5639 = vadd.f32 %v5529, %v5638
        %v5640 = vrot.slane %v5639, 2
        %v5641 = vadd.f32 %v5639, %v5640
        %v5642 = vrot.slane %v5641, 1
        %v5643 = vadd.f32 %v5641, %v5642
        %v5644 = vrot.slane %v5530, 4
        %v5645 = vadd.f32 %v5530, %v5644
        %v5646 = vrot.slane %v5645, 2
        %v5647 = vadd.f32 %v5645, %v5646
        %v5648 = vrot.slane %v5647, 1
        %v5649 = vadd.f32 %v5647, %v5648
        %v5650 = vrot.slane %v5531, 4
        %v5651 = vadd.f32 %v5531, %v5650
        %v5652 = vrot.slane %v5651, 2
        %v5653 = vadd.f32 %v5651, %v5652
        %v5654 = vrot.slane %v5653, 1
        %v5655 = vadd.f32 %v5653, %v5654
        %v5656 = vrot.slane %v5532, 4
        %v5657 = vadd.f32 %v5532, %v5656
        %v5658 = vrot.slane %v5657, 2
        %v5659 = vadd.f32 %v5657, %v5658
        %v5660 = vrot.slane %v5659, 1
        %v5661 = vadd.f32 %v5659, %v5660
        %v5662 = vrot.slane %v5533, 4
        %v5663 = vadd.f32 %v5533, %v5662
        %v5664 = vrot.slane %v5663, 2
        %v5665 = vadd.f32 %v5663, %v5664
        %v5666 = vrot.slane %v5665, 1
        %v5667 = vadd.f32 %v5665, %v5666
        %v5668 = vrot.slane %v5534, 4
        %v5669 = vadd.f32 %v5534, %v5668
        %v5670 = vrot.slane %v5669, 2
        %v5671 = vadd.f32 %v5669, %v5670
        %v5672 = vrot.slane %v5671, 1
        %v5673 = vadd.f32 %v5671, %v5672
        %v5674 = vrot.slane %v5535, 4
        %v5675 = vadd.f32 %v5535, %v5674
        %v5676 = vrot.slane %v5675, 2
        %v5677 = vadd.f32 %v5675, %v5676
        %v5678 = vrot.slane %v5677, 1
        %v5679 = vadd.f32 %v5677, %v5678
        %v5680 = vmul.f32 %v1138, %v1138
        %v5681 = vmul.f32 %v1139, %v1139
        %v5682 = vmul.f32 %v1140, %v1140
        %v5683 = vmul.f32 %v1141, %v1141
        %v5684 = vmul.f32 %v1142, %v1142
        %v5685 = vmul.f32 %v1143, %v1143
        %v5686 = vmul.f32 %v1144, %v1144
        %v5687 = vmul.f32 %v1145, %v1145
        %v5688 = vmul.f32 %v1146, %v1146
        %v5689 = vmul.f32 %v1147, %v1147
        %v5690 = vmul.f32 %v1148, %v1148
        %v5691 = vmul.f32 %v1149, %v1149
        %v5692 = vmul.f32 %v1150, %v1150
        %v5693 = vmul.f32 %v1151, %v1151
        %v5694 = vmul.f32 %v1152, %v1152
        %v5695 = vmul.f32 %v1153, %v1153
        %v5696 = vmul.f32 %v1154, %v1154
        %v5697 = vmul.f32 %v1155, %v1155
        %v5698 = vmul.f32 %v1156, %v1156
        %v5699 = vmul.f32 %v1157, %v1157
        %v5700 = vmul.f32 %v1158, %v1158
        %v5701 = vmul.f32 %v1159, %v1159
        %v5702 = vmul.f32 %v1160, %v1160
        %v5703 = vmul.f32 %v1161, %v1161
        %v5704 = vrot.slane %v5680, 4
        %v5705 = vadd.f32 %v5680, %v5704
        %v5706 = vrot.slane %v5705, 2
        %v5707 = vadd.f32 %v5705, %v5706
        %v5708 = vrot.slane %v5707, 1
        %v5709 = vadd.f32 %v5707, %v5708
        %v5710 = vrot.slane %v5681, 4
        %v5711 = vadd.f32 %v5681, %v5710
        %v5712 = vrot.slane %v5711, 2
        %v5713 = vadd.f32 %v5711, %v5712
        %v5714 = vrot.slane %v5713, 1
        %v5715 = vadd.f32 %v5713, %v5714
        %v5716 = vrot.slane %v5682, 4
        %v5717 = vadd.f32 %v5682, %v5716
        %v5718 = vrot.slane %v5717, 2
        %v5719 = vadd.f32 %v5717, %v5718
        %v5720 = vrot.slane %v5719, 1
        %v5721 = vadd.f32 %v5719, %v5720
        %v5722 = vrot.slane %v5683, 4
        %v5723 = vadd.f32 %v5683, %v5722
        %v5724 = vrot.slane %v5723, 2
        %v5725 = vadd.f32 %v5723, %v5724
        %v5726 = vrot.slane %v5725, 1
        %v5727 = vadd.f32 %v5725, %v5726
        %v5728 = vrot.slane %v5684, 4
        %v5729 = vadd.f32 %v5684, %v5728
        %v5730 = vrot.slane %v5729, 2
        %v5731 = vadd.f32 %v5729, %v5730
        %v5732 = vrot.slane %v5731, 1
        %v5733 = vadd.f32 %v5731, %v5732
        %v5734 = vrot.slane %v5685, 4
        %v5735 = vadd.f32 %v5685, %v5734
        %v5736 = vrot.slane %v5735, 2
        %v5737 = vadd.f32 %v5735, %v5736
        %v5738 = vrot.slane %v5737, 1
        %v5739 = vadd.f32 %v5737, %v5738
        %v5740 = vrot.slane %v5686, 4
        %v5741 = vadd.f32 %v5686, %v5740
        %v5742 = vrot.slane %v5741, 2
        %v5743 = vadd.f32 %v5741, %v5742
        %v5744 = vrot.slane %v5743, 1
        %v5745 = vadd.f32 %v5743, %v5744
        %v5746 = vrot.slane %v5687, 4
        %v5747 = vadd.f32 %v5687, %v5746
        %v5748 = vrot.slane %v5747, 2
        %v5749 = vadd.f32 %v5747, %v5748
        %v5750 = vrot.slane %v5749, 1
        %v5751 = vadd.f32 %v5749, %v5750
        %v5752 = vrot.slane %v5688, 4
        %v5753 = vadd.f32 %v5688, %v5752
        %v5754 = vrot.slane %v5753, 2
        %v5755 = vadd.f32 %v5753, %v5754
        %v5756 = vrot.slane %v5755, 1
        %v5757 = vadd.f32 %v5755, %v5756
        %v5758 = vrot.slane %v5689, 4
        %v5759 = vadd.f32 %v5689, %v5758
        %v5760 = vrot.slane %v5759, 2
        %v5761 = vadd.f32 %v5759, %v5760
        %v5762 = vrot.slane %v5761, 1
        %v5763 = vadd.f32 %v5761, %v5762
        %v5764 = vrot.slane %v5690, 4
        %v5765 = vadd.f32 %v5690, %v5764
        %v5766 = vrot.slane %v5765, 2
        %v5767 = vadd.f32 %v5765, %v5766
        %v5768 = vrot.slane %v5767, 1
        %v5769 = vadd.f32 %v5767, %v5768
        %v5770 = vrot.slane %v5691, 4
        %v5771 = vadd.f32 %v5691, %v5770
        %v5772 = vrot.slane %v5771, 2
        %v5773 = vadd.f32 %v5771, %v5772
        %v5774 = vrot.slane %v5773, 1
        %v5775 = vadd.f32 %v5773, %v5774
        %v5776 = vrot.slane %v5692, 4
        %v5777 = vadd.f32 %v5692, %v5776
        %v5778 = vrot.slane %v5777, 2
        %v5779 = vadd.f32 %v5777, %v5778
        %v5780 = vrot.slane %v5779, 1
        %v5781 = vadd.f32 %v5779, %v5780
        %v5782 = vrot.slane %v5693, 4
        %v5783 = vadd.f32 %v5693, %v5782
        %v5784 = vrot.slane %v5783, 2
        %v5785 = vadd.f32 %v5783, %v5784
        %v5786 = vrot.slane %v5785, 1
        %v5787 = vadd.f32 %v5785, %v5786
        %v5788 = vrot.slane %v5694, 4
        %v5789 = vadd.f32 %v5694, %v5788
        %v5790 = vrot.slane %v5789, 2
        %v5791 = vadd.f32 %v5789, %v5790
        %v5792 = vrot.slane %v5791, 1
        %v5793 = vadd.f32 %v5791, %v5792
        %v5794 = vrot.slane %v5695, 4
        %v5795 = vadd.f32 %v5695, %v5794
        %v5796 = vrot.slane %v5795, 2
        %v5797 = vadd.f32 %v5795, %v5796
        %v5798 = vrot.slane %v5797, 1
        %v5799 = vadd.f32 %v5797, %v5798
        %v5800 = vrot.slane %v5696, 4
        %v5801 = vadd.f32 %v5696, %v5800
        %v5802 = vrot.slane %v5801, 2
        %v5803 = vadd.f32 %v5801, %v5802
        %v5804 = vrot.slane %v5803, 1
        %v5805 = vadd.f32 %v5803, %v5804
        %v5806 = vrot.slane %v5697, 4
        %v5807 = vadd.f32 %v5697, %v5806
        %v5808 = vrot.slane %v5807, 2
        %v5809 = vadd.f32 %v5807, %v5808
        %v5810 = vrot.slane %v5809, 1
        %v5811 = vadd.f32 %v5809, %v5810
        %v5812 = vrot.slane %v5698, 4
        %v5813 = vadd.f32 %v5698, %v5812
        %v5814 = vrot.slane %v5813, 2
        %v5815 = vadd.f32 %v5813, %v5814
        %v5816 = vrot.slane %v5815, 1
        %v5817 = vadd.f32 %v5815, %v5816
        %v5818 = vrot.slane %v5699, 4
        %v5819 = vadd.f32 %v5699, %v5818
        %v5820 = vrot.slane %v5819, 2
        %v5821 = vadd.f32 %v5819, %v5820
        %v5822 = vrot.slane %v5821, 1
        %v5823 = vadd.f32 %v5821, %v5822
        %v5824 = vrot.slane %v5700, 4
        %v5825 = vadd.f32 %v5700, %v5824
        %v5826 = vrot.slane %v5825, 2
        %v5827 = vadd.f32 %v5825, %v5826
        %v5828 = vrot.slane %v5827, 1
        %v5829 = vadd.f32 %v5827, %v5828
        %v5830 = vrot.slane %v5701, 4
        %v5831 = vadd.f32 %v5701, %v5830
        %v5832 = vrot.slane %v5831, 2
        %v5833 = vadd.f32 %v5831, %v5832
        %v5834 = vrot.slane %v5833, 1
        %v5835 = vadd.f32 %v5833, %v5834
        %v5836 = vrot.slane %v5702, 4
        %v5837 = vadd.f32 %v5702, %v5836
        %v5838 = vrot.slane %v5837, 2
        %v5839 = vadd.f32 %v5837, %v5838
        %v5840 = vrot.slane %v5839, 1
        %v5841 = vadd.f32 %v5839, %v5840
        %v5842 = vrot.slane %v5703, 4
        %v5843 = vadd.f32 %v5703, %v5842
        %v5844 = vrot.slane %v5843, 2
        %v5845 = vadd.f32 %v5843, %v5844
        %v5846 = vrot.slane %v5845, 1
        %v5847 = vadd.f32 %v5845, %v5846
        %v5848 = vmul.f32 %v5166, %v5166
        %v5849 = vmul.f32 %v5181, %v5181
        %v5850 = vmul.f32 %v5196, %v5196
        %v5851 = vmul.f32 %v5211, %v5211
        %v5852 = vmul.f32 %v5226, %v5226
        %v5853 = vmul.f32 %v5241, %v5241
        %v5854 = vmul.f32 %v5256, %v5256
        %v5855 = vmul.f32 %v5271, %v5271
        %v5856 = vmul.f32 %v5286, %v5286
        %v5857 = vmul.f32 %v5301, %v5301
        %v5858 = vmul.f32 %v5316, %v5316
        %v5859 = vmul.f32 %v5331, %v5331
        %v5860 = vmul.f32 %v5346, %v5346
        %v5861 = vmul.f32 %v5361, %v5361
        %v5862 = vmul.f32 %v5376, %v5376
        %v5863 = vmul.f32 %v5391, %v5391
        %v5864 = vmul.f32 %v5406, %v5406
        %v5865 = vmul.f32 %v5421, %v5421
        %v5866 = vmul.f32 %v5436, %v5436
        %v5867 = vmul.f32 %v5451, %v5451
        %v5868 = vmul.f32 %v5466, %v5466
        %v5869 = vmul.f32 %v5481, %v5481
        %v5870 = vmul.f32 %v5496, %v5496
        %v5871 = vmul.f32 %v5511, %v5511
        %v5872 = vrot.slane %v5848, 4
        %v5873 = vadd.f32 %v5848, %v5872
        %v5874 = vrot.slane %v5873, 2
        %v5875 = vadd.f32 %v5873, %v5874
        %v5876 = vrot.slane %v5875, 1
        %v5877 = vadd.f32 %v5875, %v5876
        %v5878 = vrot.slane %v5849, 4
        %v5879 = vadd.f32 %v5849, %v5878
        %v5880 = vrot.slane %v5879, 2
        %v5881 = vadd.f32 %v5879, %v5880
        %v5882 = vrot.slane %v5881, 1
        %v5883 = vadd.f32 %v5881, %v5882
        %v5884 = vrot.slane %v5850, 4
        %v5885 = vadd.f32 %v5850, %v5884
        %v5886 = vrot.slane %v5885, 2
        %v5887 = vadd.f32 %v5885, %v5886
        %v5888 = vrot.slane %v5887, 1
        %v5889 = vadd.f32 %v5887, %v5888
        %v5890 = vrot.slane %v5851, 4
        %v5891 = vadd.f32 %v5851, %v5890
        %v5892 = vrot.slane %v5891, 2
        %v5893 = vadd.f32 %v5891, %v5892
        %v5894 = vrot.slane %v5893, 1
        %v5895 = vadd.f32 %v5893, %v5894
        %v5896 = vrot.slane %v5852, 4
        %v5897 = vadd.f32 %v5852, %v5896
        %v5898 = vrot.slane %v5897, 2
        %v5899 = vadd.f32 %v5897, %v5898
        %v5900 = vrot.slane %v5899, 1
        %v5901 = vadd.f32 %v5899, %v5900
        %v5902 = vrot.slane %v5853, 4
        %v5903 = vadd.f32 %v5853, %v5902
        %v5904 = vrot.slane %v5903, 2
        %v5905 = vadd.f32 %v5903, %v5904
        %v5906 = vrot.slane %v5905, 1
        %v5907 = vadd.f32 %v5905, %v5906
        %v5908 = vrot.slane %v5854, 4
        %v5909 = vadd.f32 %v5854, %v5908
        %v5910 = vrot.slane %v5909, 2
        %v5911 = vadd.f32 %v5909, %v5910
        %v5912 = vrot.slane %v5911, 1
        %v5913 = vadd.f32 %v5911, %v5912
        %v5914 = vrot.slane %v5855, 4
        %v5915 = vadd.f32 %v5855, %v5914
        %v5916 = vrot.slane %v5915, 2
        %v5917 = vadd.f32 %v5915, %v5916
        %v5918 = vrot.slane %v5917, 1
        %v5919 = vadd.f32 %v5917, %v5918
        %v5920 = vrot.slane %v5856, 4
        %v5921 = vadd.f32 %v5856, %v5920
        %v5922 = vrot.slane %v5921, 2
        %v5923 = vadd.f32 %v5921, %v5922
        %v5924 = vrot.slane %v5923, 1
        %v5925 = vadd.f32 %v5923, %v5924
        %v5926 = vrot.slane %v5857, 4
        %v5927 = vadd.f32 %v5857, %v5926
        %v5928 = vrot.slane %v5927, 2
        %v5929 = vadd.f32 %v5927, %v5928
        %v5930 = vrot.slane %v5929, 1
        %v5931 = vadd.f32 %v5929, %v5930
        %v5932 = vrot.slane %v5858, 4
        %v5933 = vadd.f32 %v5858, %v5932
        %v5934 = vrot.slane %v5933, 2
        %v5935 = vadd.f32 %v5933, %v5934
        %v5936 = vrot.slane %v5935, 1
        %v5937 = vadd.f32 %v5935, %v5936
        %v5938 = vrot.slane %v5859, 4
        %v5939 = vadd.f32 %v5859, %v5938
        %v5940 = vrot.slane %v5939, 2
        %v5941 = vadd.f32 %v5939, %v5940
        %v5942 = vrot.slane %v5941, 1
        %v5943 = vadd.f32 %v5941, %v5942
        %v5944 = vrot.slane %v5860, 4
        %v5945 = vadd.f32 %v5860, %v5944
        %v5946 = vrot.slane %v5945, 2
        %v5947 = vadd.f32 %v5945, %v5946
        %v5948 = vrot.slane %v5947, 1
        %v5949 = vadd.f32 %v5947, %v5948
        %v5950 = vrot.slane %v5861, 4
        %v5951 = vadd.f32 %v5861, %v5950
        %v5952 = vrot.slane %v5951, 2
        %v5953 = vadd.f32 %v5951, %v5952
        %v5954 = vrot.slane %v5953, 1
        %v5955 = vadd.f32 %v5953, %v5954
        %v5956 = vrot.slane %v5862, 4
        %v5957 = vadd.f32 %v5862, %v5956
        %v5958 = vrot.slane %v5957, 2
        %v5959 = vadd.f32 %v5957, %v5958
        %v5960 = vrot.slane %v5959, 1
        %v5961 = vadd.f32 %v5959, %v5960
        %v5962 = vrot.slane %v5863, 4
        %v5963 = vadd.f32 %v5863, %v5962
        %v5964 = vrot.slane %v5963, 2
        %v5965 = vadd.f32 %v5963, %v5964
        %v5966 = vrot.slane %v5965, 1
        %v5967 = vadd.f32 %v5965, %v5966
        %v5968 = vrot.slane %v5864, 4
        %v5969 = vadd.f32 %v5864, %v5968
        %v5970 = vrot.slane %v5969, 2
        %v5971 = vadd.f32 %v5969, %v5970
        %v5972 = vrot.slane %v5971, 1
        %v5973 = vadd.f32 %v5971, %v5972
        %v5974 = vrot.slane %v5865, 4
        %v5975 = vadd.f32 %v5865, %v5974
        %v5976 = vrot.slane %v5975, 2
        %v5977 = vadd.f32 %v5975, %v5976
        %v5978 = vrot.slane %v5977, 1
        %v5979 = vadd.f32 %v5977, %v5978
        %v5980 = vrot.slane %v5866, 4
        %v5981 = vadd.f32 %v5866, %v5980
        %v5982 = vrot.slane %v5981, 2
        %v5983 = vadd.f32 %v5981, %v5982
        %v5984 = vrot.slane %v5983, 1
        %v5985 = vadd.f32 %v5983, %v5984
        %v5986 = vrot.slane %v5867, 4
        %v5987 = vadd.f32 %v5867, %v5986
        %v5988 = vrot.slane %v5987, 2
        %v5989 = vadd.f32 %v5987, %v5988
        %v5990 = vrot.slane %v5989, 1
        %v5991 = vadd.f32 %v5989, %v5990
        %v5992 = vrot.slane %v5868, 4
        %v5993 = vadd.f32 %v5868, %v5992
        %v5994 = vrot.slane %v5993, 2
        %v5995 = vadd.f32 %v5993, %v5994
        %v5996 = vrot.slane %v5995, 1
        %v5997 = vadd.f32 %v5995, %v5996
        %v5998 = vrot.slane %v5869, 4
        %v5999 = vadd.f32 %v5869, %v5998
        %v6000 = vrot.slane %v5999, 2
        %v6001 = vadd.f32 %v5999, %v6000
        %v6002 = vrot.slane %v6001, 1
        %v6003 = vadd.f32 %v6001, %v6002
        %v6004 = vrot.slane %v5870, 4
        %v6005 = vadd.f32 %v5870, %v6004
        %v6006 = vrot.slane %v6005, 2
        %v6007 = vadd.f32 %v6005, %v6006
        %v6008 = vrot.slane %v6007, 1
        %v6009 = vadd.f32 %v6007, %v6008
        %v6010 = vrot.slane %v5871, 4
        %v6011 = vadd.f32 %v5871, %v6010
        %v6012 = vrot.slane %v6011, 2
        %v6013 = vadd.f32 %v6011, %v6012
        %v6014 = vrot.slane %v6013, 1
        %v6015 = vadd.f32 %v6013, %v6014
        %v6016 = vmul.f32 %v5709, %v5877
        %v6017 = vmul.f32 %v5715, %v5883
        %v6018 = vmul.f32 %v5721, %v5889
        %v6019 = vmul.f32 %v5727, %v5895
        %v6020 = vmul.f32 %v5733, %v5901
        %v6021 = vmul.f32 %v5739, %v5907
        %v6022 = vmul.f32 %v5745, %v5913
        %v6023 = vmul.f32 %v5751, %v5919
        %v6024 = vmul.f32 %v5757, %v5925
        %v6025 = vmul.f32 %v5763, %v5931
        %v6026 = vmul.f32 %v5769, %v5937
        %v6027 = vmul.f32 %v5775, %v5943
        %v6028 = vmul.f32 %v5781, %v5949
        %v6029 = vmul.f32 %v5787, %v5955
        %v6030 = vmul.f32 %v5793, %v5961
        %v6031 = vmul.f32 %v5799, %v5967
        %v6032 = vmul.f32 %v5805, %v5973
        %v6033 = vmul.f32 %v5811, %v5979
        %v6034 = vmul.f32 %v5817, %v5985
        %v6035 = vmul.f32 %v5823, %v5991
        %v6036 = vmul.f32 %v5829, %v5997
        %v6037 = vmul.f32 %v5835, %v6003
        %v6038 = vmul.f32 %v5841, %v6009
        %v6039 = vmul.f32 %v5847, %v6015
        %v6040 = vmax.f32 %v6016, 1e-16
        %v6041 = vmax.f32 %v6017, 1e-16
        %v6042 = vmax.f32 %v6018, 1e-16
        %v6043 = vmax.f32 %v6019, 1e-16
        %v6044 = vmax.f32 %v6020, 1e-16
        %v6045 = vmax.f32 %v6021, 1e-16
        %v6046 = vmax.f32 %v6022, 1e-16
        %v6047 = vmax.f32 %v6023, 1e-16
        %v6048 = vmax.f32 %v6024, 1e-16
        %v6049 = vmax.f32 %v6025, 1e-16
        %v6050 = vmax.f32 %v6026, 1e-16
        %v6051 = vmax.f32 %v6027, 1e-16
        %v6052 = vmax.f32 %v6028, 1e-16
        %v6053 = vmax.f32 %v6029, 1e-16
        %v6054 = vmax.f32 %v6030, 1e-16
        %v6055 = vmax.f32 %v6031, 1e-16
        %v6056 = vmax.f32 %v6032, 1e-16
        %v6057 = vmax.f32 %v6033, 1e-16
        %v6058 = vmax.f32 %v6034, 1e-16
        %v6059 = vmax.f32 %v6035, 1e-16
        %v6060 = vmax.f32 %v6036, 1e-16
        %v6061 = vmax.f32 %v6037, 1e-16
        %v6062 = vmax.f32 %v6038, 1e-16
        %v6063 = vmax.f32 %v6039, 1e-16
        %v6064 = vrsqrt.pop %v6040
        %v6065 = vmul.f32 %v6064, %v6040
        %v6066 = vmul.f32 %v6065, %v6064
        %v6067 = vmul.f32 0.5, %v6066
        %v6068 = vsub.f32 1.5, %v6067
        %v6069 = vmul.f32 %v6064, %v6068
        %vm6070 = vweird.f32 %v6040
        %vm6071 = vweird.f32 %v6064
        %vm6072 = vmor %vm6070, %vm6071
        %v6073 = vsel %vm6072, %v6064, %v6069
        %v6074 = vrsqrt.pop %v6041
        %v6075 = vmul.f32 %v6074, %v6041
        %v6076 = vmul.f32 %v6075, %v6074
        %v6077 = vmul.f32 0.5, %v6076
        %v6078 = vsub.f32 1.5, %v6077
        %v6079 = vmul.f32 %v6074, %v6078
        %vm6080 = vweird.f32 %v6041
        %vm6081 = vweird.f32 %v6074
        %vm6082 = vmor %vm6080, %vm6081
        %v6083 = vsel %vm6082, %v6074, %v6079
        %v6084 = vrsqrt.pop %v6042
        %v6085 = vmul.f32 %v6084, %v6042
        %v6086 = vmul.f32 %v6085, %v6084
        %v6087 = vmul.f32 0.5, %v6086
        %v6088 = vsub.f32 1.5, %v6087
        %v6089 = vmul.f32 %v6084, %v6088
        %vm6090 = vweird.f32 %v6042
        %vm6091 = vweird.f32 %v6084
        %vm6092 = vmor %vm6090, %vm6091
        %v6093 = vsel %vm6092, %v6084, %v6089
        %v6094 = vrsqrt.pop %v6043
        %v6095 = vmul.f32 %v6094, %v6043
        %v6096 = vmul.f32 %v6095, %v6094
        %v6097 = vmul.f32 0.5, %v6096
        %v6098 = vsub.f32 1.5, %v6097
        %v6099 = vmul.f32 %v6094, %v6098
        %vm6100 = vweird.f32 %v6043
        %vm6101 = vweird.f32 %v6094
        %vm6102 = vmor %vm6100, %vm6101
        %v6103 = vsel %vm6102, %v6094, %v6099
        %v6104 = vrsqrt.pop %v6044
        %v6105 = vmul.f32 %v6104, %v6044
        %v6106 = vmul.f32 %v6105, %v6104
        %v6107 = vmul.f32 0.5, %v6106
        %v6108 = vsub.f32 1.5, %v6107
        %v6109 = vmul.f32 %v6104, %v6108
        %vm6110 = vweird.f32 %v6044
        %vm6111 = vweird.f32 %v6104
        %vm6112 = vmor %vm6110, %vm6111
        %v6113 = vsel %vm6112, %v6104, %v6109
        %v6114 = vrsqrt.pop %v6045
        %v6115 = vmul.f32 %v6114, %v6045
        %v6116 = vmul.f32 %v6115, %v6114
        %v6117 = vmul.f32 0.5, %v6116
        %v6118 = vsub.f32 1.5, %v6117
        %v6119 = vmul.f32 %v6114, %v6118
        %vm6120 = vweird.f32 %v6045
        %vm6121 = vweird.f32 %v6114
        %vm6122 = vmor %vm6120, %vm6121
        %v6123 = vsel %vm6122, %v6114, %v6119
        %v6124 = vrsqrt.pop %v6046
        %v6125 = vmul.f32 %v6124, %v6046
        %v6126 = vmul.f32 %v6125, %v6124
        %v6127 = vmul.f32 0.5, %v6126
        %v6128 = vsub.f32 1.5, %v6127
        %v6129 = vmul.f32 %v6124, %v6128
        %vm6130 = vweird.f32 %v6046
        %vm6131 = vweird.f32 %v6124
        %vm6132 = vmor %vm6130, %vm6131
        %v6133 = vsel %vm6132, %v6124, %v6129
        %v6134 = vrsqrt.pop %v6047
        %v6135 = vmul.f32 %v6134, %v6047
        %v6136 = vmul.f32 %v6135, %v6134
        %v6137 = vmul.f32 0.5, %v6136
        %v6138 = vsub.f32 1.5, %v6137
        %v6139 = vmul.f32 %v6134, %v6138
        %vm6140 = vweird.f32 %v6047
        %vm6141 = vweird.f32 %v6134
        %vm6142 = vmor %vm6140, %vm6141
        %v6143 = vsel %vm6142, %v6134, %v6139
        %v6144 = vrsqrt.pop %v6048
        %v6145 = vmul.f32 %v6144, %v6048
        %v6146 = vmul.f32 %v6145, %v6144
        %v6147 = vmul.f32 0.5, %v6146
        %v6148 = vsub.f32 1.5, %v6147
        %v6149 = vmul.f32 %v6144, %v6148
        %vm6150 = vweird.f32 %v6048
        %vm6151 = vweird.f32 %v6144
        %vm6152 = vmor %vm6150, %vm6151
        %v6153 = vsel %vm6152, %v6144, %v6149
        %v6154 = vrsqrt.pop %v6049
        %v6155 = vmul.f32 %v6154, %v6049
        %v6156 = vmul.f32 %v6155, %v6154
        %v6157 = vmul.f32 0.5, %v6156
        %v6158 = vsub.f32 1.5, %v6157
        %v6159 = vmul.f32 %v6154, %v6158
        %vm6160 = vweird.f32 %v6049
        %vm6161 = vweird.f32 %v6154
        %vm6162 = vmor %vm6160, %vm6161
        %v6163 = vsel %vm6162, %v6154, %v6159
        %v6164 = vrsqrt.pop %v6050
        %v6165 = vmul.f32 %v6164, %v6050
        %v6166 = vmul.f32 %v6165, %v6164
        %v6167 = vmul.f32 0.5, %v6166
        %v6168 = vsub.f32 1.5, %v6167
        %v6169 = vmul.f32 %v6164, %v6168
        %vm6170 = vweird.f32 %v6050
        %vm6171 = vweird.f32 %v6164
        %vm6172 = vmor %vm6170, %vm6171
        %v6173 = vsel %vm6172, %v6164, %v6169
        %v6174 = vrsqrt.pop %v6051
        %v6175 = vmul.f32 %v6174, %v6051
        %v6176 = vmul.f32 %v6175, %v6174
        %v6177 = vmul.f32 0.5, %v6176
        %v6178 = vsub.f32 1.5, %v6177
        %v6179 = vmul.f32 %v6174, %v6178
        %vm6180 = vweird.f32 %v6051
        %vm6181 = vweird.f32 %v6174
        %vm6182 = vmor %vm6180, %vm6181
        %v6183 = vsel %vm6182, %v6174, %v6179
        %v6184 = vrsqrt.pop %v6052
        %v6185 = vmul.f32 %v6184, %v6052
        %v6186 = vmul.f32 %v6185, %v6184
        %v6187 = vmul.f32 0.5, %v6186
        %v6188 = vsub.f32 1.5, %v6187
        %v6189 = vmul.f32 %v6184, %v6188
        %vm6190 = vweird.f32 %v6052
        %vm6191 = vweird.f32 %v6184
        %vm6192 = vmor %vm6190, %vm6191
        %v6193 = vsel %vm6192, %v6184, %v6189
        %v6194 = vrsqrt.pop %v6053
        %v6195 = vmul.f32 %v6194, %v6053
        %v6196 = vmul.f32 %v6195, %v6194
        %v6197 = vmul.f32 0.5, %v6196
        %v6198 = vsub.f32 1.5, %v6197
        %v6199 = vmul.f32 %v6194, %v6198
        %vm6200 = vweird.f32 %v6053
        %vm6201 = vweird.f32 %v6194
        %vm6202 = vmor %vm6200, %vm6201
        %v6203 = vsel %vm6202, %v6194, %v6199
        %v6204 = vrsqrt.pop %v6054
        %v6205 = vmul.f32 %v6204, %v6054
        %v6206 = vmul.f32 %v6205, %v6204
        %v6207 = vmul.f32 0.5, %v6206
        %v6208 = vsub.f32 1.5, %v6207
        %v6209 = vmul.f32 %v6204, %v6208
        %vm6210 = vweird.f32 %v6054
        %vm6211 = vweird.f32 %v6204
        %vm6212 = vmor %vm6210, %vm6211
        %v6213 = vsel %vm6212, %v6204, %v6209
        %v6214 = vrsqrt.pop %v6055
        %v6215 = vmul.f32 %v6214, %v6055
        %v6216 = vmul.f32 %v6215, %v6214
        %v6217 = vmul.f32 0.5, %v6216
        %v6218 = vsub.f32 1.5, %v6217
        %v6219 = vmul.f32 %v6214, %v6218
        %vm6220 = vweird.f32 %v6055
        %vm6221 = vweird.f32 %v6214
        %vm6222 = vmor %vm6220, %vm6221
        %v6223 = vsel %vm6222, %v6214, %v6219
        %v6224 = vrsqrt.pop %v6056
        %v6225 = vmul.f32 %v6224, %v6056
        %v6226 = vmul.f32 %v6225, %v6224
        %v6227 = vmul.f32 0.5, %v6226
        %v6228 = vsub.f32 1.5, %v6227
        %v6229 = vmul.f32 %v6224, %v6228
        %vm6230 = vweird.f32 %v6056
        %vm6231 = vweird.f32 %v6224
        %vm6232 = vmor %vm6230, %vm6231
        %v6233 = vsel %vm6232, %v6224, %v6229
        %v6234 = vrsqrt.pop %v6057
        %v6235 = vmul.f32 %v6234, %v6057
        %v6236 = vmul.f32 %v6235, %v6234
        %v6237 = vmul.f32 0.5, %v6236
        %v6238 = vsub.f32 1.5, %v6237
        %v6239 = vmul.f32 %v6234, %v6238
        %vm6240 = vweird.f32 %v6057
        %vm6241 = vweird.f32 %v6234
        %vm6242 = vmor %vm6240, %vm6241
        %v6243 = vsel %vm6242, %v6234, %v6239
        %v6244 = vrsqrt.pop %v6058
        %v6245 = vmul.f32 %v6244, %v6058
        %v6246 = vmul.f32 %v6245, %v6244
        %v6247 = vmul.f32 0.5, %v6246
        %v6248 = vsub.f32 1.5, %v6247
        %v6249 = vmul.f32 %v6244, %v6248
        %vm6250 = vweird.f32 %v6058
        %vm6251 = vweird.f32 %v6244
        %vm6252 = vmor %vm6250, %vm6251
        %v6253 = vsel %vm6252, %v6244, %v6249
        %v6254 = vrsqrt.pop %v6059
        %v6255 = vmul.f32 %v6254, %v6059
        %v6256 = vmul.f32 %v6255, %v6254
        %v6257 = vmul.f32 0.5, %v6256
        %v6258 = vsub.f32 1.5, %v6257
        %v6259 = vmul.f32 %v6254, %v6258
        %vm6260 = vweird.f32 %v6059
        %vm6261 = vweird.f32 %v6254
        %vm6262 = vmor %vm6260, %vm6261
        %v6263 = vsel %vm6262, %v6254, %v6259
        %v6264 = vrsqrt.pop %v6060
        %v6265 = vmul.f32 %v6264, %v6060
        %v6266 = vmul.f32 %v6265, %v6264
        %v6267 = vmul.f32 0.5, %v6266
        %v6268 = vsub.f32 1.5, %v6267
        %v6269 = vmul.f32 %v6264, %v6268
        %vm6270 = vweird.f32 %v6060
        %vm6271 = vweird.f32 %v6264
        %vm6272 = vmor %vm6270, %vm6271
        %v6273 = vsel %vm6272, %v6264, %v6269
        %v6274 = vrsqrt.pop %v6061
        %v6275 = vmul.f32 %v6274, %v6061
        %v6276 = vmul.f32 %v6275, %v6274
        %v6277 = vmul.f32 0.5, %v6276
        %v6278 = vsub.f32 1.5, %v6277
        %v6279 = vmul.f32 %v6274, %v6278
        %vm6280 = vweird.f32 %v6061
        %vm6281 = vweird.f32 %v6274
        %vm6282 = vmor %vm6280, %vm6281
        %v6283 = vsel %vm6282, %v6274, %v6279
        %v6284 = vrsqrt.pop %v6062
        %v6285 = vmul.f32 %v6284, %v6062
        %v6286 = vmul.f32 %v6285, %v6284
        %v6287 = vmul.f32 0.5, %v6286
        %v6288 = vsub.f32 1.5, %v6287
        %v6289 = vmul.f32 %v6284, %v6288
        %vm6290 = vweird.f32 %v6062
        %vm6291 = vweird.f32 %v6284
        %vm6292 = vmor %vm6290, %vm6291
        %v6293 = vsel %vm6292, %v6284, %v6289
        %v6294 = vrsqrt.pop %v6063
        %v6295 = vmul.f32 %v6294, %v6063
        %v6296 = vmul.f32 %v6295, %v6294
        %v6297 = vmul.f32 0.5, %v6296
        %v6298 = vsub.f32 1.5, %v6297
        %v6299 = vmul.f32 %v6294, %v6298
        %vm6300 = vweird.f32 %v6063
        %vm6301 = vweird.f32 %v6294
        %vm6302 = vmor %vm6300, %vm6301
        %v6303 = vsel %vm6302, %v6294, %v6299
        %v6304 = vmul.f32 %v5541, %v6073
        %v6305 = vmul.f32 %v5547, %v6083
        %v6306 = vmul.f32 %v5553, %v6093
        %v6307 = vmul.f32 %v5559, %v6103
        %v6308 = vmul.f32 %v5565, %v6113
        %v6309 = vmul.f32 %v5571, %v6123
        %v6310 = vmul.f32 %v5577, %v6133
        %v6311 = vmul.f32 %v5583, %v6143
        %v6312 = vmul.f32 %v5589, %v6153
        %v6313 = vmul.f32 %v5595, %v6163
        %v6314 = vmul.f32 %v5601, %v6173
        %v6315 = vmul.f32 %v5607, %v6183
        %v6316 = vmul.f32 %v5613, %v6193
        %v6317 = vmul.f32 %v5619, %v6203
        %v6318 = vmul.f32 %v5625, %v6213
        %v6319 = vmul.f32 %v5631, %v6223
        %v6320 = vmul.f32 %v5637, %v6233
        %v6321 = vmul.f32 %v5643, %v6243
        %v6322 = vmul.f32 %v5649, %v6253
        %v6323 = vmul.f32 %v5655, %v6263
        %v6324 = vmul.f32 %v5661, %v6273
        %v6325 = vmul.f32 %v5667, %v6283
        %v6326 = vmul.f32 %v5673, %v6293
        %v6327 = vmul.f32 %v5679, %v6303
        %v6328 = vsub.f32 1.0, %v6304
        %v6329 = vsub.f32 1.0, %v6305
        %v6330 = vsub.f32 1.0, %v6306
        %v6331 = vsub.f32 1.0, %v6307
        %v6332 = vsub.f32 1.0, %v6308
        %v6333 = vsub.f32 1.0, %v6309
        %v6334 = vsub.f32 1.0, %v6310
        %v6335 = vsub.f32 1.0, %v6311
        %v6336 = vsub.f32 1.0, %v6312
        %v6337 = vsub.f32 1.0, %v6313
        %v6338 = vsub.f32 1.0, %v6314
        %v6339 = vsub.f32 1.0, %v6315
        %v6340 = vsub.f32 1.0, %v6316
        %v6341 = vsub.f32 1.0, %v6317
        %v6342 = vsub.f32 1.0, %v6318
        %v6343 = vsub.f32 1.0, %v6319
        %v6344 = vsub.f32 1.0, %v6320
        %v6345 = vsub.f32 1.0, %v6321
        %v6346 = vsub.f32 1.0, %v6322
        %v6347 = vsub.f32 1.0, %v6323
        %v6348 = vsub.f32 1.0, %v6324
        %v6349 = vsub.f32 1.0, %v6325
        %v6350 = vsub.f32 1.0, %v6326
        %v6351 = vsub.f32 1.0, %v6327
        %v6376 = vrot.slane %v6329, 7
        %v6377 = vrot.slane %v6330, 6
        %v6378 = vrot.slane %v6331, 5
        %v6379 = vrot.slane %v6332, 4
        %v6380 = vrot.slane %v6333, 3
        %v6381 = vrot.slane %v6334, 2
        %v6382 = vrot.slane %v6335, 1
        %v6383 = vrot.slane %v6337, 7
        %v6384 = vrot.slane %v6338, 6
        %v6385 = vrot.slane %v6339, 5
        %v6386 = vrot.slane %v6340, 4
        %v6387 = vrot.slane %v6341, 3
        %v6388 = vrot.slane %v6342, 2
        %v6389 = vrot.slane %v6343, 1
        %v6390 = vrot.slane %v6345, 7
        %v6391 = vrot.slane %v6346, 6
        %v6392 = vrot.slane %v6347, 5
        %v6393 = vrot.slane %v6348, 4
        %v6394 = vrot.slane %v6349, 3
        %v6395 = vrot.slane %v6350, 2
        %v6396 = vrot.slane %v6351, 1
        %vm6397 = vcmask 1040384
        %v6398 = vsel %vm6397, %v6328, %v6376
        %vm6399 = vcmask 1042434
        %v6400 = vsel %vm6399, %v6377, %v6378
        %vm6401 = vcmask 1041408
        %v6402 = vsel %vm6401, %v6398, %v6400
        %vm6403 = vcmask 1044484
        %v6404 = vsel %vm6403, %v6379, %v6380
        %vm6405 = vcmask 1046534
        %v6406 = vsel %vm6405, %v6381, %v6382
        %vm6407 = vcmask 1045508
        %v6408 = vsel %vm6407, %v6404, %v6406
        %vm6409 = vcmask 1043456
        %v6410 = vsel %vm6409, %v6402, %v6408
        %v6411 = vsel %vm6397, %v6336, %v6383
        %v6412 = vsel %vm6399, %v6384, %v6385
        %v6413 = vsel %vm6401, %v6411, %v6412
        %v6414 = vsel %vm6403, %v6386, %v6387
        %v6415 = vsel %vm6405, %v6388, %v6389
        %v6416 = vsel %vm6407, %v6414, %v6415
        %v6417 = vsel %vm6409, %v6413, %v6416
        %v6418 = vsel %vm6397, %v6344, %v6390
        %v6419 = vsel %vm6399, %v6391, %v6392
        %v6420 = vsel %vm6401, %v6418, %v6419
        %v6421 = vsel %vm6403, %v6393, %v6394
        %v6422 = vsel %vm6405, %v6395, %v6396
        %v6423 = vsel %vm6407, %v6421, %v6422
        %v6424 = vsel %vm6409, %v6420, %v6423
        %6428 = vst [vmem:[%s1137] sm:$0xff] %v6410
        %6429 = vst [vmem:[%s1137 + $0x8] sm:$0xff] %v6417
        %6430 = vst [vmem:[%s1137 + $0x10] sm:$0xff] %v6424
        %p6431 = scmp.lt.s32.totalorder %s53, 1
        %s6432 = scalar_select %p6431, %s53, 1
        %s6433 = smul.addr %s6432, 24
        %s6434 = scalar_lea.vmem %s17, %s6433
        // Predicated region
        $region157: #{_train_step.1} parent=87 // pred_check
          %p6435 = pneg %p508
        $region158: #{_train_step.1} parent=87 // pred_check_branch
          %6437 = sbr.rel (%p6435) target = $region160
        $region159: #{_train_step.1} parent=87 // pred_region
          _
        $region160: #{_train_step.1} parent=87 // pred_fallthru
          _
      $region88: #{_train_step.1} parent=5 // pred_fallthru
        _
      %p6438 = scmp.le.s32.totalorder 2, %s48
      // Predicated region
      $region161: #{_train_step.1} parent=5 // pred_check
        %p6439 = pneg %p6438
      $region162: #{_train_step.1} parent=5 // pred_check_branch
        %6441 = sbr.rel (%p6439) target = $region164
      $region163: #{_train_step.1} parent=5 // pred_region
        %s6442 = ssub.s32 %s48, 2
        // Predicated region
        $region165: #{_train_step.1} parent=163 // pred_check
          %p6443 = pneg %p514
        $region166: #{_train_step.1} parent=163 // pred_check_branch
          %6445 = sbr.rel (%p6443) target = $region168
        $region167: #{_train_step.1} parent=163 // pred_region
          %p6446 = scmp.lt.s32.totalorder %s54, 1
          %s6447 = scalar_select %p6446, %s54, 1
          %s6448 = smul.addr %s6447, 24
          %s6449 = scalar_lea.vmem %s17, %s6448
        $region168: #{_train_step.1} parent=163 // pred_fallthru
          _
      $region164: #{_train_step.1} parent=5 // pred_fallthru
        _
    $region6: #{_train_step.1} parent=1 // loop_footer
      %s52 = sadd.s32 1, %s48
    $region7: #{_train_step.1} parent=1 // loop_footer_branch
      %47 = sbr.rel target = $region3
    $region8: #{_train_step.1} parent=1 // loop_exit
      _
    %6450 = vsyncpa [#allocation3], 1
    %s6451 = scalar_lea.sflag [#allocation3], 1
    %6452 = vsyncpa %s6451, 1
    %6453 = vsyncpa [#allocation5], 1
    %s6454 = scalar_lea.sflag [#allocation5], 1
    %6455 = vsyncpa %s6454, 1
    %6456 = vsyncpa [#allocation8], 1
    %s6457 = scalar_lea.sflag [#allocation8], 1
    %6458 = vsyncpa %s6457, 1
    %6459 = vsyncpa [#allocation11], 1
    %s6460 = scalar_lea.sflag [#allocation11], 1
    %6461 = vsyncpa %s6460, 1
    %6462 = vsyncpa [#allocation14], 1
    %s6463 = scalar_lea.sflag [#allocation14], 1
    %6464 = vsyncpa %s6463, 1
    %6465 = vsyncpa [#allocation17], 1
    %s6466 = scalar_lea.sflag [#allocation17], 1
    %6467 = vsyncpa %s6466, 1
    %6468 = vsyncpa [#allocation20], 1
    %s6469 = scalar_lea.sflag [#allocation20], 1
    %6470 = vsyncpa %s6469, 1
    %6471 = vsyncpa [#allocation23], 1
    %s6472 = scalar_lea.sflag [#allocation23], 1
    %6473 = vsyncpa %s6472, 1
    %6474 = vsyncpa [#allocation26], 1
    %s6475 = scalar_lea.sflag [#allocation26], 1
    %6476 = vsyncpa %s6475, 1

</llo_original>
